<compile_context>
chip_gen: v5e
topology: v5e:2x2
jax: 0.10.0
libtpu: 0.0.40
codegen_flags: <defaults>
</compile_context>

<pallas_src>
import math
import functools

import numpy as np
import jax
import jax.numpy as jnp
from jax import lax
from jax.experimental import pallas as pl
from jax.experimental.pallas import tpu as pltpu


def residual_block_kernel(
    # inputs
    x_ref,        # (1, TL, dim)        current sequence chunk of batch b
    nw_ref,       # (1, dim)            RMSNorm weight
    winx_ref,     # (dim, d_inner)      in_proj weight, x half (pre-split)
    winz_ref,     # (dim, d_inner)      in_proj weight, z half
    wconv_ref,    # (d_conv, d_inner)   depthwise conv weight
    bconv_ref,    # (1, d_inner)        conv bias
    wxp_ref,      # (d_inner, 3*seg)    packed x_proj: [dt | pad | B | pad | C | pad]
    wdt_ref,      # (dt_rank, d_inner)  dt_proj weight (used via VPU FMAs)
    bdt_ref,      # (1, d_inner)        dt_proj bias
    aneg_ref,     # (d_state, d_inner)  A = -exp(A_log), transposed (lane-dense)
    dpar_ref,     # (1, d_inner)        D
    wout_ref,     # (d_inner, dim)      out_proj weight
    # output
    o_ref,        # (1, TL, dim)
    # scratch (persists across grid steps -> carries state across L-chunks)
    h_ref,        # (d_state, d_inner)            SSM hidden-state carry
    conv_ref,     # (cpad + TL, d_inner)          conv window; tail carry at rows [cpad-(d_conv-1), cpad)
    delta_ref,    # (TL, d_inner)
    dxc_ref,      # (TL, d_inner)                 delta * conv_out
    b_ref,        # (TL, d_state)
    c_ref,        # (TL, d_state)
    y_ref,        # (TL, d_inner)                 scan outputs
    hs_ref,       # (t_sub, d_state, d_inner)     per-sub-block h history
    *, TL, dim, d_inner, d_state, dt_rank, d_conv, seg, cpad, t_sub, eps, scan_dtype,
):
    c = pl.program_id(1)

    # Reset the carried state at the first chunk of every sequence.
    @pl.when(c == 0)
    def _():
        h_ref[...] = jnp.zeros_like(h_ref)
        conv_ref[0:cpad, :] = jnp.zeros((cpad, d_inner), jnp.float32)

    x = x_ref[0].astype(jnp.float32)                                   # (TL, dim)

    # ---- RMSNorm ----
    ms = jnp.mean(x * x, axis=-1, keepdims=True)
    xn = x * lax.rsqrt(ms + eps) * nw_ref[...]

    # ---- in_proj (pre-split halves -> two lane-aligned MXU matmuls) ----
    xn_mm = xn.astype(winx_ref.dtype)
    xp = jnp.dot(xn_mm, winx_ref[...], preferred_element_type=jnp.float32)   # (TL, d_inner)
    z = jnp.dot(xn_mm, winz_ref[...], preferred_element_type=jnp.float32)    # (TL, d_inner)

    # ---- causal depthwise conv1d (sublane-aligned VMEM window; tail carried) ----
    conv_ref[cpad:cpad + TL, :] = xp                                   # aligned TL-row write
    base = cpad - (d_conv - 1)
    xc = jnp.broadcast_to(bconv_ref[...], (TL, d_inner))
    for k in range(d_conv):                                            # static unroll
        xc = xc + wconv_ref[k:k + 1, :] * conv_ref[base + k:base + k + TL, :]
    if d_conv > 1:
        conv_ref[base:cpad, :] = conv_ref[base + TL:cpad + TL, :]      # tail for next chunk
    xc = xc * jax.nn.sigmoid(xc)                                       # SiLU

    # ---- x_proj: ONE matmul against packed, 128-aligned RHS segments ----
    dbc = jnp.dot(xc.astype(wxp_ref.dtype), wxp_ref[...],
                  preferred_element_type=jnp.float32)                  # (TL, 3*seg)
    delta_r = dbc[:, 0:dt_rank]                                        # (TL, dt_rank)
    Bmat = dbc[:, seg:seg + d_state]                                   # (TL, d_state)
    Cmat = dbc[:, 2 * seg:2 * seg + d_state]                           # (TL, d_state)

    # ---- dt_proj (K = dt_rank is tiny): rank-1 VPU FMAs instead of padded MXU ----
    dpre = jnp.broadcast_to(bdt_ref[...], (TL, d_inner))
    for r in range(dt_rank):                                           # static unroll
        dpre = dpre + delta_r[:, r:r + 1] * wdt_ref[r:r + 1, :]
    delta = jax.nn.softplus(dpre)                                      # (TL, d_inner)

    # ---- stage scan inputs in small 2-D, d_inner-lane-dense scratch ----
    delta_ref[...] = delta
    dxc_ref[...] = delta * xc
    b_ref[...] = Bmat
    c_ref[...] = Cmat

    # ---- selective scan in t_sub-step sub-blocks ----
    aneg = aneg_ref[...]                                               # (d_state, d_inner)
    n_sub = TL // t_sub

    def sub_block(blk, h):
        off = pl.multiple_of(blk * t_sub, t_sub)
        d_blk = delta_ref[pl.ds(off, t_sub), :]                        # (t_sub, d_inner)
        dx_blk = dxc_ref[pl.ds(off, t_sub), :]
        b_blk = b_ref[pl.ds(off, t_sub), :]                            # (t_sub, d_state)
        c_blk = c_ref[pl.ds(off, t_sub), :]
        # per-sub-block precompute (EUP exp); optionally bf16 to halve traffic
        dA = jnp.exp(d_blk[:, None, :] * aneg[None, :, :]).astype(scan_dtype)
        bx = (dx_blk[:, None, :] * b_blk[:, :, None]).astype(scan_dtype)
        # FMA-only serial recurrence; h stays f32
        for t in range(t_sub):                                         # static unroll
            h = dA[t].astype(jnp.float32) * h + bx[t].astype(jnp.float32)
            hs_ref[t] = h
        # batched C contraction on the VPU/XLU (no per-step M=1 MXU matvec)
        y_ref[pl.ds(off, t_sub), :] = jnp.sum(hs_ref[...] * c_blk[:, :, None], axis=1)
        return h

    h_ref[...] = lax.fori_loop(0, n_sub, sub_block, h_ref[...])

    y = y_ref[...] + dpar_ref[...] * xc                                # (TL, d_inner)

    # ---- gate, out_proj, residual ----
    zg = z * jax.nn.sigmoid(z)
    out = jnp.dot((y * zg).astype(wout_ref.dtype), wout_ref[...],
                  preferred_element_type=jnp.float32)                  # (TL, dim)
    o_ref[0] = (out + x).astype(o_ref.dtype)


def _pick_chunk(L, target=128):
    """Largest divisor of L that is a multiple of 8 and <= target (fallback: L)."""
    best = None
    for cand in range(8, min(L, target) + 1, 8):
        if L % cand == 0:
            best = cand
    return best if best is not None else L


def _vmem_capacity_bytes():
    cap = 64 << 20  # conservative default (v7x)
    try:
        info = pltpu.get_tpu_info()
        cap = int(getattr(info, "vmem_capacity_bytes", cap))
    except Exception:
        pass
    return cap


# Cache whether single-buffered (pl.Buffered(1)) constant-weight blocks lower on
# this runtime; fall back to default double-buffering otherwise.
_SINGLE_BUF_STATE = {"ok": None}


def residual_block_forward(x, p, *, d_inner, d_state, dt_rank, d_conv, eps=1e-5,
                           chunk=None, matmul_dtype=jnp.float32,
                           scan_dtype=jnp.float32, single_buffer_weights=True):
    B, L, dim = x.shape

    vmem_cap = _vmem_capacity_bytes()
    target = 256 if vmem_cap >= (100 << 20) else 128        # bigger TL on v5e/v6e
    TL = _pick_chunk(L, target=target) if chunk is None else chunk
    assert L % TL == 0 and (TL % 8 == 0 or TL == L), (L, TL)
    n_chunks = L // TL
    t_sub = math.gcd(TL, 8)                                  # sub-block length (divides TL)
    cpad = 8 * max(1, -(-(d_conv - 1) // 8))                 # aligned conv-tail region
    seg = 128 * max(1, -(-max(dt_rank, d_state) // 128))     # packed x_proj segment width

    # --- parameter preprocessing outside the kernel ---
    mm = matmul_dtype
    w_in_x = p['w_in'][:, :d_inner].astype(mm)
    w_in_z = p['w_in'][:, d_inner:].astype(mm)
    w_xp_packed = jnp.zeros((d_inner, 3 * seg), jnp.float32)
    w_xp_packed = w_xp_packed.at[:, 0:dt_rank].set(p['w_xp'][:, :dt_rank])
    w_xp_packed = w_xp_packed.at[:, seg:seg + d_state].set(p['w_xp'][:, dt_rank:dt_rank + d_state])
    w_xp_packed = w_xp_packed.at[:, 2 * seg:2 * seg + d_state].set(p['w_xp'][:, dt_rank + d_state:])
    w_xp_packed = w_xp_packed.astype(mm)
    a_neg_t = (-jnp.exp(p['A_log'])).astype(jnp.float32).T            # (d_state, d_inner)
    w_out = p['w_out'].astype(mm)

    weights = (p['norm_w'], w_in_x, w_in_z, p['w_conv'], p['b_conv'],
               w_xp_packed, p['w_dt'], p['b_dt'], a_neg_t, p['D'], w_out)

    kernel = functools.partial(
        residual_block_kernel,
        TL=TL, dim=dim, d_inner=d_inner, d_state=d_state, dt_rank=dt_rank,
        d_conv=d_conv, seg=seg, cpad=cpad, t_sub=t_sub, eps=eps, scan_dtype=scan_dtype)

    scratch_shapes = [
        pltpu.VMEM((d_state, d_inner), jnp.float32),              # h carry
        pltpu.VMEM((cpad + TL, d_inner), jnp.float32),            # conv window + tail carry
        pltpu.VMEM((TL, d_inner), jnp.float32),                   # delta
        pltpu.VMEM((TL, d_inner), jnp.float32),                   # delta * xc
        pltpu.VMEM((TL, d_state), jnp.float32),                   # B
        pltpu.VMEM((TL, d_state), jnp.float32),                   # C
        pltpu.VMEM((TL, d_inner), jnp.float32),                   # scan outputs
        pltpu.VMEM((t_sub, d_state, d_inner), jnp.float32),       # per-sub-block h history
    ]

    # --- VMEM budget: estimate, check against capacity (no silent clipping) ---
    f4 = 4
    scratch_bytes = f4 * (d_state * d_inner + (cpad + TL) * d_inner
                          + 3 * TL * d_inner + 2 * TL * max(d_state, 128)
                          + t_sub * d_state * d_inner)
    weight_bytes = sum(int(w.size) * w.dtype.itemsize for w in weights)
    io_bytes = 2 * 2 * TL * max(dim, 128) * x.dtype.itemsize
    trans_bytes = f4 * (8 * TL * max(d_inner, 128) + TL * 3 * seg
                        + 4 * t_sub * d_state * d_inner)
    est = scratch_bytes + 2 * weight_bytes + io_bytes + trans_bytes
    if est > vmem_cap:
        raise ValueError(f"VMEM estimate {est >> 20} MiB exceeds capacity "
                         f"{vmem_cap >> 20} MiB; use a smaller chunk or bf16 scan_dtype")
    vmem_limit = int(min(vmem_cap, max(2 * est + (8 << 20), 32 << 20)))

    def build(single_buf):
        def const_spec(shape):
            # Grid-invariant weights: constant block index -> never re-DMA'd.
            n = len(shape)
            idx = lambda b, c, _n=n: (0,) * _n
            if single_buf:
                return pl.BlockSpec(shape, idx, pipeline_mode=pl.Buffered(1))
            return pl.BlockSpec(shape, idx)

        in_specs = [pl.BlockSpec((1, TL, dim), lambda b, c: (b, c, 0))]
        in_specs += [const_spec(w.shape) for w in weights]

        return pl.pallas_call(
            kernel,
            out_shape=jax.ShapeDtypeStruct((B, L, dim), x.dtype),
            grid_spec=pltpu.PrefetchScalarGridSpec(
                num_scalar_prefetch=0,
                grid=(B, n_chunks),       # chunk axis must stay innermost & sequential
                in_specs=in_specs,
                out_specs=pl.BlockSpec((1, TL, dim), lambda b, c: (b, c, 0)),
                scratch_shapes=scratch_shapes,
            ),
            compiler_params=pltpu.CompilerParams(
                dimension_semantics=("parallel", "arbitrary"),
                vmem_limit_bytes=vmem_limit),
        )

    want_single = single_buffer_weights and hasattr(pl, "Buffered")
    if not want_single or _SINGLE_BUF_STATE["ok"] is False:
        return build(False)(x, *weights)
    if _SINGLE_BUF_STATE["ok"]:
        return build(True)(x, *weights)
    try:
        out = jax.block_until_ready(build(True)(x, *weights))
        _SINGLE_BUF_STATE["ok"] = True
        return out
    except Exception:
        _SINGLE_BUF_STATE["ok"] = False
        return build(False)(x, *weights)


def init_params(key, *, dim, d_inner, d_state, dt_rank, d_conv,
                dt_min=0.001, dt_max=0.1, dt_init_floor=1e-4):
    ks = jax.random.split(key, 8)
    u = lambda k, shp, b: jax.random.uniform(k, shp, jnp.float32, -b, b)
    w_in = u(ks[0], (dim, 2 * d_inner), 1.0 / math.sqrt(dim))
    cb = 1.0 / math.sqrt(d_conv)
    w_conv = u(ks[1], (d_conv, d_inner), cb)
    b_conv = u(ks[2], (1, d_inner), cb)
    w_xp = u(ks[3], (d_inner, dt_rank + 2 * d_state), 1.0 / math.sqrt(d_inner))
    w_dt = u(ks[4], (dt_rank, d_inner), dt_rank ** -0.5)
    dt = jnp.exp(jax.random.uniform(ks[5], (d_inner,), jnp.float32)
                 * (math.log(dt_max) - math.log(dt_min)) + math.log(dt_min))
    dt = jnp.maximum(dt, dt_init_floor)
    b_dt = (dt + jnp.log(-jnp.expm1(-dt)))[None, :]
    A = jnp.tile(jnp.arange(1, d_state + 1, dtype=jnp.float32)[None, :], (d_inner, 1))
    A_log = jnp.log(A)
    D = jnp.ones((1, d_inner), jnp.float32)
    w_out = u(ks[6], (d_inner, dim), 1.0 / math.sqrt(d_inner))
    norm_w = jnp.ones((1, dim), jnp.float32)
    return dict(norm_w=norm_w, w_in=w_in, w_conv=w_conv, b_conv=b_conv,
                w_xp=w_xp, w_dt=w_dt, b_dt=b_dt, A_log=A_log, D=D, w_out=w_out)


def reference_forward(x, p, *, d_inner, d_state, dt_rank, d_conv, eps=1e-5):
    """Pure-JAX reference matching the PyTorch ResidualBlock.forward semantics."""
    B, L, dim = x.shape
    xn = x * lax.rsqrt(jnp.mean(x * x, axis=-1, keepdims=True) + eps) * p['norm_w'][0]
    xz = xn @ p['w_in']
    xp, z = xz[..., :d_inner], xz[..., d_inner:]
    xpad = jnp.pad(xp, ((0, 0), (d_conv - 1, 0), (0, 0)))
    xc = sum(p['w_conv'][k] * xpad[:, k:k + L] for k in range(d_conv)) + p['b_conv'][0]
    xc = jax.nn.silu(xc)
    dbc = xc @ p['w_xp']
    delta_r = dbc[..., :dt_rank]
    Bm = dbc[..., dt_rank:dt_rank + d_state]
    Cm = dbc[..., dt_rank + d_state:dt_rank + 2 * d_state]
    delta = jax.nn.softplus(delta_r @ p['w_dt'] + p['b_dt'][0])
    A = -jnp.exp(p['A_log'])
    dA = jnp.exp(delta[..., None] * A)                       # (B, L, d_inner, d_state)
    bx = (delta * xc)[..., None] * Bm[:, :, None, :]

    def scan_fn(h, inp):
        dA_t, bx_t = inp
        h = dA_t * h + bx_t
        return h, h

    def per_batch(dA_b, bx_b):
        _, hs = lax.scan(scan_fn, jnp.zeros((d_inner, d_state), jnp.float32), (dA_b, bx_b))
        return hs

    hs = jax.vmap(per_batch)(dA, bx)
    y = jnp.sum(hs * Cm[:, :, None, :], axis=-1) + p['D'][0] * xc
    return (y * jax.nn.silu(z)) @ p['w_out'] + x


if __name__ == "__main__":
    # MambaConfig(dim=32): d_inner = 64, dt_rank = ceil(32/16) = 2, d_state = 16, d_conv = 4
    dim, d_state, d_conv = 32, 16, 4
    d_inner = 2 * dim
    dt_rank = math.ceil(dim / 16)
    cfg = dict(d_inner=d_inner, d_state=d_state, dt_rank=dt_rank, d_conv=d_conv)

    key = jax.random.PRNGKey(0)
    kx, kp, kx2 = jax.random.split(key, 3)
    params = init_params(kp, dim=dim, **cfg)

    # 1) single chunk, f32 matmuls + f32 scan
    x1 = jax.random.normal(kx, (2, 8, dim), jnp.float32)
    out1 = jax.block_until_ready(residual_block_forward(x1, params, **cfg))
    ref1 = jax.block_until_ready(reference_forward(x1, params, **cfg))
    np.testing.assert_allclose(np.asarray(out1), np.asarray(ref1), atol=2e-3, rtol=2e-3)

    # 2) multi-chunk (L=16, chunk=8): exercises the h / conv-tail carry across chunks
    x2 = jax.random.normal(kx2, (2, 16, dim), jnp.float32)
    out2 = jax.block_until_ready(residual_block_forward(x2, params, chunk=8, **cfg))
    ref2 = jax.block_until_ready(reference_forward(x2, params, **cfg))
    np.testing.assert_allclose(np.asarray(out2), np.asarray(ref2), atol=2e-3, rtol=2e-3)

    # 3) bf16 MXU operands (v6e/v7x fast path); recurrence stays f32
    out3 = jax.block_until_ready(
        residual_block_forward(x1, params, matmul_dtype=jnp.bfloat16, **cfg))
    np.testing.assert_allclose(np.asarray(out3), np.asarray(ref1), atol=5e-2, rtol=5e-2)

    # 4) bf16 dA/bx scan tensors (f32 matmuls, f32 h accumulation)
    out4 = jax.block_until_ready(
        residual_block_forward(x1, params, scan_dtype=jnp.bfloat16, **cfg))
    np.testing.assert_allclose(np.asarray(out4), np.asarray(ref1), atol=2e-2, rtol=2e-2)

    print("KERNEL_OK")
</pallas_src>

<mosaic_0001>
module attributes {stable_mosaic.version = 11 : i64} {
  func.func @residual_block_kernel(%arg0: i32, %arg1: i32, %arg2: memref<1x8x32xf32, #tpu.memory_space<vmem>>, %arg3: memref<1x32xf32, #tpu.memory_space<vmem>>, %arg4: memref<32x64xf32, #tpu.memory_space<vmem>>, %arg5: memref<32x64xf32, #tpu.memory_space<vmem>>, %arg6: memref<4x64xf32, #tpu.memory_space<vmem>>, %arg7: memref<1x64xf32, #tpu.memory_space<vmem>>, %arg8: memref<64x384xf32, #tpu.memory_space<vmem>>, %arg9: memref<2x64xf32, #tpu.memory_space<vmem>>, %arg10: memref<1x64xf32, #tpu.memory_space<vmem>>, %arg11: memref<16x64xf32, #tpu.memory_space<vmem>>, %arg12: memref<1x64xf32, #tpu.memory_space<vmem>>, %arg13: memref<64x32xf32, #tpu.memory_space<vmem>>, %arg14: memref<1x8x32xf32, #tpu.memory_space<vmem>>, %arg15: memref<16x64xf32, #tpu.memory_space<vmem>>, %arg16: memref<16x64xf32, #tpu.memory_space<vmem>>, %arg17: memref<8x64xf32, #tpu.memory_space<vmem>>, %arg18: memref<8x64xf32, #tpu.memory_space<vmem>>, %arg19: memref<8x16xf32, #tpu.memory_space<vmem>>, %arg20: memref<8x16xf32, #tpu.memory_space<vmem>>, %arg21: memref<8x64xf32, #tpu.memory_space<vmem>>, %arg22: memref<8x16x64xf32, #tpu.memory_space<vmem>>) attributes {dimension_semantics = [#tpu.dimension_semantics<parallel>, #tpu.dimension_semantics<arbitrary>], iteration_bounds = array<i64: 2, 1>, scalar_prefetch = 0 : i64, scratch_operands = 8 : i64, tpu.core_type = #tpu.core_type<tc>, window_params = [{transform_indices = @transform_0, window_bounds = array<i64: 1, 8, 32>}, {pipeline_mode = #tpu.pipeline_mode<synchronous>, transform_indices = @transform_1, window_bounds = array<i64: 1, 32>}, {pipeline_mode = #tpu.pipeline_mode<synchronous>, transform_indices = @transform_2, window_bounds = array<i64: 32, 64>}, {pipeline_mode = #tpu.pipeline_mode<synchronous>, transform_indices = @transform_3, window_bounds = array<i64: 32, 64>}, {pipeline_mode = #tpu.pipeline_mode<synchronous>, transform_indices = @transform_4, window_bounds = array<i64: 4, 64>}, {pipeline_mode = #tpu.pipeline_mode<synchronous>, transform_indices = @transform_5, window_bounds = array<i64: 1, 64>}, {pipeline_mode = #tpu.pipeline_mode<synchronous>, transform_indices = @transform_6, window_bounds = array<i64: 64, 384>}, {pipeline_mode = #tpu.pipeline_mode<synchronous>, transform_indices = @transform_7, window_bounds = array<i64: 2, 64>}, {pipeline_mode = #tpu.pipeline_mode<synchronous>, transform_indices = @transform_8, window_bounds = array<i64: 1, 64>}, {pipeline_mode = #tpu.pipeline_mode<synchronous>, transform_indices = @transform_9, window_bounds = array<i64: 16, 64>}, {pipeline_mode = #tpu.pipeline_mode<synchronous>, transform_indices = @transform_10, window_bounds = array<i64: 1, 64>}, {pipeline_mode = #tpu.pipeline_mode<synchronous>, transform_indices = @transform_11, window_bounds = array<i64: 64, 32>}, {transform_indices = @transform_12, window_bounds = array<i64: 1, 8, 32>}]} {
    %c0_i32 = arith.constant 0 : i32
    %0 = arith.cmpi eq, %arg1, %c0_i32 : i32
    %1 = arith.extui %0 : i1 to i32
    %c0_i32_0 = arith.constant 0 : i32
    %2 = arith.cmpi ne, %1, %c0_i32_0 : i32
    scf.if %2 {
      %cst_99 = arith.constant 0.000000e+00 : f32
      %214 = vector.broadcast %cst_99 : f32 to vector<16x64xf32>
      %c0_100 = arith.constant 0 : index
      %c0_101 = arith.constant 0 : index
      %215 = vector.load %arg15[%c0_100, %c0_101] : memref<16x64xf32, #tpu.memory_space<vmem>>, vector<16x64xf32>
      tpu.vector_store %arg15[%c0_100, %c0_101], %214 {strides = array<i32>} : memref<16x64xf32, #tpu.memory_space<vmem>>, vector<16x64xf32>,
      %cst_102 = arith.constant 0.000000e+00 : f32
      %216 = vector.broadcast %cst_102 : f32 to vector<8x64xf32>
      %c0_103 = arith.constant 0 : index
      %c0_104 = arith.constant 0 : index
      %217 = vector.load %arg16[%c0_103, %c0_104] : memref<16x64xf32, #tpu.memory_space<vmem>>, vector<8x64xf32>
      tpu.vector_store %arg16[%c0_103, %c0_104], %216 {strides = array<i32>} : memref<16x64xf32, #tpu.memory_space<vmem>>, vector<8x64xf32>,
    } else {
    }
    %c0 = arith.constant 0 : index
    %c0_1 = arith.constant 0 : index
    %c0_2 = arith.constant 0 : index
    %3 = vector.load %arg2[%c0, %c0_1, %c0_2] : memref<1x8x32xf32, #tpu.memory_space<vmem>>, vector<1x8x32xf32>
    %4 = vector.shape_cast %3 : vector<1x8x32xf32> to vector<8x32xf32>
    %5 = arith.mulf %4, %4 : vector<8x32xf32>
    %cst = arith.constant dense<0.000000e+00> : vector<8xf32>
    %6 = vector.multi_reduction <add>, %5, %cst [1] : vector<8x32xf32> to vector<8xf32>
    %7 = vector.shape_cast %6 : vector<8xf32> to vector<8x1xf32>
    %cst_3 = arith.constant 3.200000e+01 : f32
    %8 = vector.broadcast %cst_3 : f32 to vector<8x1xf32>
    %9 = arith.divf %7, %8 : vector<8x1xf32>
    %cst_4 = arith.constant 9.99999974E-6 : f32
    %10 = vector.broadcast %cst_4 : f32 to vector<8x1xf32>
    %11 = arith.addf %9, %10 : vector<8x1xf32>
    %12 = math.rsqrt %11 : vector<8x1xf32>
    %13 = vector.broadcast %12 : vector<8x1xf32> to vector<8x32xf32>
    %14 = arith.mulf %4, %13 : vector<8x32xf32>
    %c0_5 = arith.constant 0 : index
    %c0_6 = arith.constant 0 : index
    %15 = vector.load %arg3[%c0_5, %c0_6] : memref<1x32xf32, #tpu.memory_space<vmem>>, vector<1x32xf32>
    %16 = vector.broadcast %15 : vector<1x32xf32> to vector<8x32xf32>
    %17 = arith.mulf %14, %16 : vector<8x32xf32>
    %c0_7 = arith.constant 0 : index
    %c0_8 = arith.constant 0 : index
    %18 = vector.load %arg4[%c0_7, %c0_8] : memref<32x64xf32, #tpu.memory_space<vmem>>, vector<32x64xf32>
    %cst_9 = arith.constant dense<0.000000e+00> : vector<8x64xf32>
    %19 = tpu.matmul %17, %18, %cst_9 {dimension_numbers = #tpu.dot_dimension_numbers<[1], [0], [0], [1], [0, 0, 1, 1], [], []>} : vector<8x32xf32>, vector<32x64xf32>, vector<8x64xf32> -> vector<8x64xf32>
    %c0_10 = arith.constant 0 : index
    %c0_11 = arith.constant 0 : index
    %20 = vector.load %arg5[%c0_10, %c0_11] : memref<32x64xf32, #tpu.memory_space<vmem>>, vector<32x64xf32>
    %cst_12 = arith.constant dense<0.000000e+00> : vector<8x64xf32>
    %21 = tpu.matmul %17, %20, %cst_12 {dimension_numbers = #tpu.dot_dimension_numbers<[1], [0], [0], [1], [0, 0, 1, 1], [], []>} : vector<8x32xf32>, vector<32x64xf32>, vector<8x64xf32> -> vector<8x64xf32>
    %c8 = arith.constant 8 : index
    %c0_13 = arith.constant 0 : index
    %22 = vector.load %arg16[%c8, %c0_13] : memref<16x64xf32, #tpu.memory_space<vmem>>, vector<8x64xf32>
    tpu.vector_store %arg16[%c8, %c0_13], %19 {strides = array<i32>} : memref<16x64xf32, #tpu.memory_space<vmem>>, vector<8x64xf32>,
    %c0_14 = arith.constant 0 : index
    %c0_15 = arith.constant 0 : index
    %23 = vector.load %arg7[%c0_14, %c0_15] : memref<1x64xf32, #tpu.memory_space<vmem>>, vector<1x64xf32>
    %24 = vector.shape_cast %23 : vector<1x64xf32> to vector<1x64xf32>
    %25 = vector.broadcast %24 : vector<1x64xf32> to vector<8x64xf32>
    %c0_16 = arith.constant 0 : index
    %c0_17 = arith.constant 0 : index
    %26 = vector.load %arg6[%c0_16, %c0_17] : memref<4x64xf32, #tpu.memory_space<vmem>>, vector<1x64xf32>
    %c5 = arith.constant 5 : index
    %c0_18 = arith.constant 0 : index
    %27 = vector.load %arg16[%c5, %c0_18] : memref<16x64xf32, #tpu.memory_space<vmem>>, vector<8x64xf32>
    %28 = vector.broadcast %26 : vector<1x64xf32> to vector<8x64xf32>
    %29 = arith.mulf %28, %27 : vector<8x64xf32>
    %30 = arith.addf %25, %29 : vector<8x64xf32>
    %c1 = arith.constant 1 : index
    %c0_19 = arith.constant 0 : index
    %31 = vector.load %arg6[%c1, %c0_19] : memref<4x64xf32, #tpu.memory_space<vmem>>, vector<1x64xf32>
    %c6 = arith.constant 6 : index
    %c0_20 = arith.constant 0 : index
    %32 = vector.load %arg16[%c6, %c0_20] : memref<16x64xf32, #tpu.memory_space<vmem>>, vector<8x64xf32>
    %33 = vector.broadcast %31 : vector<1x64xf32> to vector<8x64xf32>
    %34 = arith.mulf %33, %32 : vector<8x64xf32>
    %35 = arith.addf %30, %34 : vector<8x64xf32>
    %c2 = arith.constant 2 : index
    %c0_21 = arith.constant 0 : index
    %36 = vector.load %arg6[%c2, %c0_21] : memref<4x64xf32, #tpu.memory_space<vmem>>, vector<1x64xf32>
    %c7 = arith.constant 7 : index
    %c0_22 = arith.constant 0 : index
    %37 = vector.load %arg16[%c7, %c0_22] : memref<16x64xf32, #tpu.memory_space<vmem>>, vector<8x64xf32>
    %38 = vector.broadcast %36 : vector<1x64xf32> to vector<8x64xf32>
    %39 = arith.mulf %38, %37 : vector<8x64xf32>
    %40 = arith.addf %35, %39 : vector<8x64xf32>
    %c3 = arith.constant 3 : index
    %c0_23 = arith.constant 0 : index
    %41 = vector.load %arg6[%c3, %c0_23] : memref<4x64xf32, #tpu.memory_space<vmem>>, vector<1x64xf32>
    %c8_24 = arith.constant 8 : index
    %c0_25 = arith.constant 0 : index
    %42 = vector.load %arg16[%c8_24, %c0_25] : memref<16x64xf32, #tpu.memory_space<vmem>>, vector<8x64xf32>
    %43 = vector.broadcast %41 : vector<1x64xf32> to vector<8x64xf32>
    %44 = arith.mulf %43, %42 : vector<8x64xf32>
    %45 = arith.addf %40, %44 : vector<8x64xf32>
    %c13 = arith.constant 13 : index
    %c0_26 = arith.constant 0 : index
    %46 = vector.load %arg16[%c13, %c0_26] : memref<16x64xf32, #tpu.memory_space<vmem>>, vector<3x64xf32>
    %c5_27 = arith.constant 5 : index
    %c0_28 = arith.constant 0 : index
    %47 = vector.load %arg16[%c5_27, %c0_28] : memref<16x64xf32, #tpu.memory_space<vmem>>, vector<3x64xf32>
    tpu.vector_store %arg16[%c5_27, %c0_28], %46 {strides = array<i32>} : memref<16x64xf32, #tpu.memory_space<vmem>>, vector<3x64xf32>,
    %48 = arith.negf %45 : vector<8x64xf32>
    %49 = math.exp %48 : vector<8x64xf32>
    %cst_29 = arith.constant 1.000000e+00 : f32
    %50 = vector.broadcast %cst_29 : f32 to vector<8x64xf32>
    %51 = arith.addf %50, %49 : vector<8x64xf32>
    %52 = arith.divf %50, %51 : vector<8x64xf32>
    %53 = arith.mulf %45, %52 : vector<8x64xf32>
    %c0_30 = arith.constant 0 : index
    %c0_31 = arith.constant 0 : index
    %54 = vector.load %arg8[%c0_30, %c0_31] : memref<64x384xf32, #tpu.memory_space<vmem>>, vector<64x384xf32>
    %cst_32 = arith.constant dense<0.000000e+00> : vector<8x384xf32>
    %55 = tpu.matmul %53, %54, %cst_32 {dimension_numbers = #tpu.dot_dimension_numbers<[1], [0], [0], [1], [0, 0, 1, 1], [], []>} : vector<8x64xf32>, vector<64x384xf32>, vector<8x384xf32> -> vector<8x384xf32>
    %56 = vector.extract_strided_slice %55 {offsets = [0, 0], sizes = [8, 2], strides = [1, 1]} : vector<8x384xf32> to vector<8x2xf32>
    %57 = vector.extract_strided_slice %55 {offsets = [0, 128], sizes = [8, 16], strides = [1, 1]} : vector<8x384xf32> to vector<8x16xf32>
    %58 = vector.extract_strided_slice %55 {offsets = [0, 256], sizes = [8, 16], strides = [1, 1]} : vector<8x384xf32> to vector<8x16xf32>
    %c0_33 = arith.constant 0 : index
    %c0_34 = arith.constant 0 : index
    %59 = vector.load %arg10[%c0_33, %c0_34] : memref<1x64xf32, #tpu.memory_space<vmem>>, vector<1x64xf32>
    %60 = vector.shape_cast %59 : vector<1x64xf32> to vector<1x64xf32>
    %61 = vector.broadcast %60 : vector<1x64xf32> to vector<8x64xf32>
    %62 = vector.extract_strided_slice %56 {offsets = [0, 0], sizes = [8, 1], strides = [1, 1]} : vector<8x2xf32> to vector<8x1xf32>
    %c0_35 = arith.constant 0 : index
    %c0_36 = arith.constant 0 : index
    %63 = vector.load %arg9[%c0_35, %c0_36] : memref<2x64xf32, #tpu.memory_space<vmem>>, vector<1x64xf32>
    %64 = vector.broadcast %62 : vector<8x1xf32> to vector<8x64xf32>
    %65 = vector.broadcast %63 : vector<1x64xf32> to vector<8x64xf32>
    %66 = arith.mulf %64, %65 : vector<8x64xf32>
    %67 = arith.addf %61, %66 : vector<8x64xf32>
    %68 = vector.extract_strided_slice %56 {offsets = [0, 1], sizes = [8, 1], strides = [1, 1]} : vector<8x2xf32> to vector<8x1xf32>
    %c1_37 = arith.constant 1 : index
    %c0_38 = arith.constant 0 : index
    %69 = vector.load %arg9[%c1_37, %c0_38] : memref<2x64xf32, #tpu.memory_space<vmem>>, vector<1x64xf32>
    %70 = vector.broadcast %68 : vector<8x1xf32> to vector<8x64xf32>
    %71 = vector.broadcast %69 : vector<1x64xf32> to vector<8x64xf32>
    %72 = arith.mulf %70, %71 : vector<8x64xf32>
    %73 = arith.addf %67, %72 : vector<8x64xf32>
    %cst_39 = arith.constant 0.000000e+00 : f32
    %74 = vector.broadcast %cst_39 : f32 to vector<8x64xf32>
    %75 = arith.maximumf %73, %74 : vector<8x64xf32>
    %76 = vector.broadcast %cst_39 : f32 to vector<8x64xf32>
    %77 = arith.subf %73, %76 : vector<8x64xf32>
    %78 = arith.cmpf one, %77, %77 : vector<8x64xf32>
    %79 = vector.broadcast %cst_39 : f32 to vector<8x64xf32>
    %80 = arith.addf %73, %79 : vector<8x64xf32>
    %81 = math.absf %77 : vector<8x64xf32>
    %cst_40 = arith.constant 0.000000e+00 : f32
    %82 = vector.broadcast %cst_40 : f32 to vector<8x64xf32>
    %83 = arith.subf %82, %81 : vector<8x64xf32>
    %84 = math.exp %83 : vector<8x64xf32>
    %85 = math.log1p %84 : vector<8x64xf32>
    %86 = arith.addf %75, %85 : vector<8x64xf32>
    %87 = arith.select %78, %80, %86 : vector<8x64xi1>, vector<8x64xf32>
    %c0_41 = arith.constant 0 : index
    %c0_42 = arith.constant 0 : index
    %88 = vector.load %arg17[%c0_41, %c0_42] : memref<8x64xf32, #tpu.memory_space<vmem>>, vector<8x64xf32>
    tpu.vector_store %arg17[%c0_41, %c0_42], %87 {strides = array<i32>} : memref<8x64xf32, #tpu.memory_space<vmem>>, vector<8x64xf32>,
    %89 = arith.mulf %87, %53 : vector<8x64xf32>
    %c0_43 = arith.constant 0 : index
    %c0_44 = arith.constant 0 : index
    %90 = vector.load %arg18[%c0_43, %c0_44] : memref<8x64xf32, #tpu.memory_space<vmem>>, vector<8x64xf32>
    tpu.vector_store %arg18[%c0_43, %c0_44], %89 {strides = array<i32>} : memref<8x64xf32, #tpu.memory_space<vmem>>, vector<8x64xf32>,
    %c0_45 = arith.constant 0 : index
    %c0_46 = arith.constant 0 : index
    %91 = vector.load %arg19[%c0_45, %c0_46] : memref<8x16xf32, #tpu.memory_space<vmem>>, vector<8x16xf32>
    tpu.vector_store %arg19[%c0_45, %c0_46], %57 {strides = array<i32>} : memref<8x16xf32, #tpu.memory_space<vmem>>, vector<8x16xf32>,
    %c0_47 = arith.constant 0 : index
    %c0_48 = arith.constant 0 : index
    %92 = vector.load %arg20[%c0_47, %c0_48] : memref<8x16xf32, #tpu.memory_space<vmem>>, vector<8x16xf32>
    tpu.vector_store %arg20[%c0_47, %c0_48], %58 {strides = array<i32>} : memref<8x16xf32, #tpu.memory_space<vmem>>, vector<8x16xf32>,
    %c0_49 = arith.constant 0 : index
    %c0_50 = arith.constant 0 : index
    %93 = vector.load %arg11[%c0_49, %c0_50] : memref<16x64xf32, #tpu.memory_space<vmem>>, vector<16x64xf32>
    %c0_51 = arith.constant 0 : index
    %c0_52 = arith.constant 0 : index
    %94 = vector.load %arg15[%c0_51, %c0_52] : memref<16x64xf32, #tpu.memory_space<vmem>>, vector<16x64xf32>
    %c0_i32_53 = arith.constant 0 : i32
    %c8_i32 = arith.constant 8 : i32
    %95 = arith.muli %c0_i32_53, %c8_i32 : i32
    %96 = tpu.assume_multiple %95, 8 : i32
    %97 = arith.index_cast %96 : i32 to index
    %c0_54 = arith.constant 0 : index
    %98 = vector.load %arg17[%97, %c0_54] : memref<8x64xf32, #tpu.memory_space<vmem>>, vector<8x64xf32>
    %99 = arith.index_cast %96 : i32 to index
    %c0_55 = arith.constant 0 : index
    %100 = vector.load %arg18[%99, %c0_55] : memref<8x64xf32, #tpu.memory_space<vmem>>, vector<8x64xf32>
    %101 = arith.index_cast %96 : i32 to index
    %c0_56 = arith.constant 0 : index
    %102 = vector.load %arg19[%101, %c0_56] : memref<8x16xf32, #tpu.memory_space<vmem>>, vector<8x16xf32>
    %103 = arith.index_cast %96 : i32 to index
    %c0_57 = arith.constant 0 : index
    %104 = vector.load %arg20[%103, %c0_57] : memref<8x16xf32, #tpu.memory_space<vmem>>, vector<8x16xf32>
    %105 = vector.shape_cast %98 : vector<8x64xf32> to vector<8x1x64xf32>
    %106 = vector.shape_cast %93 : vector<16x64xf32> to vector<1x16x64xf32>
    %107 = vector.broadcast %105 : vector<8x1x64xf32> to vector<8x16x64xf32>
    %108 = vector.broadcast %106 : vector<1x16x64xf32> to vector<8x16x64xf32>
    %109 = arith.mulf %107, %108 : vector<8x16x64xf32>
    %110 = math.exp %109 : vector<8x16x64xf32>
    %111 = vector.shape_cast %100 : vector<8x64xf32> to vector<8x1x64xf32>
    %112 = vector.shape_cast %102 : vector<8x16xf32> to vector<8x16x1xf32>
    %113 = vector.broadcast %111 : vector<8x1x64xf32> to vector<8x16x64xf32>
    %114 = vector.broadcast %112 : vector<8x16x1xf32> to vector<8x16x64xf32>
    %115 = arith.mulf %113, %114 : vector<8x16x64xf32>
    %116 = vector.extract_strided_slice %110 {offsets = [0, 0, 0], sizes = [1, 16, 64], strides = [1, 1, 1]} : vector<8x16x64xf32> to vector<1x16x64xf32>
    %117 = vector.shape_cast %116 : vector<1x16x64xf32> to vector<16x64xf32>
    %118 = arith.mulf %117, %94 : vector<16x64xf32>
    %119 = vector.extract_strided_slice %115 {offsets = [0, 0, 0], sizes = [1, 16, 64], strides = [1, 1, 1]} : vector<8x16x64xf32> to vector<1x16x64xf32>
    %120 = vector.shape_cast %119 : vector<1x16x64xf32> to vector<16x64xf32>
    %121 = arith.addf %118, %120 : vector<16x64xf32>
    %c0_58 = arith.constant 0 : index
    %c0_59 = arith.constant 0 : index
    %c0_60 = arith.constant 0 : index
    %122 = vector.load %arg22[%c0_58, %c0_59, %c0_60] : memref<8x16x64xf32, #tpu.memory_space<vmem>>, vector<1x16x64xf32>
    %123 = vector.shape_cast %122 : vector<1x16x64xf32> to vector<16x64xf32>
    %124 = vector.shape_cast %121 : vector<16x64xf32> to vector<1x16x64xf32>
    tpu.vector_store %arg22[%c0_58, %c0_59, %c0_60], %124 {strides = array<i32>} : memref<8x16x64xf32, #tpu.memory_space<vmem>>, vector<1x16x64xf32>,
    %125 = vector.extract_strided_slice %110 {offsets = [1, 0, 0], sizes = [1, 16, 64], strides = [1, 1, 1]} : vector<8x16x64xf32> to vector<1x16x64xf32>
    %126 = vector.shape_cast %125 : vector<1x16x64xf32> to vector<16x64xf32>
    %127 = arith.mulf %126, %121 : vector<16x64xf32>
    %128 = vector.extract_strided_slice %115 {offsets = [1, 0, 0], sizes = [1, 16, 64], strides = [1, 1, 1]} : vector<8x16x64xf32> to vector<1x16x64xf32>
    %129 = vector.shape_cast %128 : vector<1x16x64xf32> to vector<16x64xf32>
    %130 = arith.addf %127, %129 : vector<16x64xf32>
    %c1_61 = arith.constant 1 : index
    %c0_62 = arith.constant 0 : index
    %c0_63 = arith.constant 0 : index
    %131 = vector.load %arg22[%c1_61, %c0_62, %c0_63] : memref<8x16x64xf32, #tpu.memory_space<vmem>>, vector<1x16x64xf32>
    %132 = vector.shape_cast %131 : vector<1x16x64xf32> to vector<16x64xf32>
    %133 = vector.shape_cast %130 : vector<16x64xf32> to vector<1x16x64xf32>
    tpu.vector_store %arg22[%c1_61, %c0_62, %c0_63], %133 {strides = array<i32>} : memref<8x16x64xf32, #tpu.memory_space<vmem>>, vector<1x16x64xf32>,
    %134 = vector.extract_strided_slice %110 {offsets = [2, 0, 0], sizes = [1, 16, 64], strides = [1, 1, 1]} : vector<8x16x64xf32> to vector<1x16x64xf32>
    %135 = vector.shape_cast %134 : vector<1x16x64xf32> to vector<16x64xf32>
    %136 = arith.mulf %135, %130 : vector<16x64xf32>
    %137 = vector.extract_strided_slice %115 {offsets = [2, 0, 0], sizes = [1, 16, 64], strides = [1, 1, 1]} : vector<8x16x64xf32> to vector<1x16x64xf32>
    %138 = vector.shape_cast %137 : vector<1x16x64xf32> to vector<16x64xf32>
    %139 = arith.addf %136, %138 : vector<16x64xf32>
    %c2_64 = arith.constant 2 : index
    %c0_65 = arith.constant 0 : index
    %c0_66 = arith.constant 0 : index
    %140 = vector.load %arg22[%c2_64, %c0_65, %c0_66] : memref<8x16x64xf32, #tpu.memory_space<vmem>>, vector<1x16x64xf32>
    %141 = vector.shape_cast %140 : vector<1x16x64xf32> to vector<16x64xf32>
    %142 = vector.shape_cast %139 : vector<16x64xf32> to vector<1x16x64xf32>
    tpu.vector_store %arg22[%c2_64, %c0_65, %c0_66], %142 {strides = array<i32>} : memref<8x16x64xf32, #tpu.memory_space<vmem>>, vector<1x16x64xf32>,
    %143 = vector.extract_strided_slice %110 {offsets = [3, 0, 0], sizes = [1, 16, 64], strides = [1, 1, 1]} : vector<8x16x64xf32> to vector<1x16x64xf32>
    %144 = vector.shape_cast %143 : vector<1x16x64xf32> to vector<16x64xf32>
    %145 = arith.mulf %144, %139 : vector<16x64xf32>
    %146 = vector.extract_strided_slice %115 {offsets = [3, 0, 0], sizes = [1, 16, 64], strides = [1, 1, 1]} : vector<8x16x64xf32> to vector<1x16x64xf32>
    %147 = vector.shape_cast %146 : vector<1x16x64xf32> to vector<16x64xf32>
    %148 = arith.addf %145, %147 : vector<16x64xf32>
    %c3_67 = arith.constant 3 : index
    %c0_68 = arith.constant 0 : index
    %c0_69 = arith.constant 0 : index
    %149 = vector.load %arg22[%c3_67, %c0_68, %c0_69] : memref<8x16x64xf32, #tpu.memory_space<vmem>>, vector<1x16x64xf32>
    %150 = vector.shape_cast %149 : vector<1x16x64xf32> to vector<16x64xf32>
    %151 = vector.shape_cast %148 : vector<16x64xf32> to vector<1x16x64xf32>
    tpu.vector_store %arg22[%c3_67, %c0_68, %c0_69], %151 {strides = array<i32>} : memref<8x16x64xf32, #tpu.memory_space<vmem>>, vector<1x16x64xf32>,
    %152 = vector.extract_strided_slice %110 {offsets = [4, 0, 0], sizes = [1, 16, 64], strides = [1, 1, 1]} : vector<8x16x64xf32> to vector<1x16x64xf32>
    %153 = vector.shape_cast %152 : vector<1x16x64xf32> to vector<16x64xf32>
    %154 = arith.mulf %153, %148 : vector<16x64xf32>
    %155 = vector.extract_strided_slice %115 {offsets = [4, 0, 0], sizes = [1, 16, 64], strides = [1, 1, 1]} : vector<8x16x64xf32> to vector<1x16x64xf32>
    %156 = vector.shape_cast %155 : vector<1x16x64xf32> to vector<16x64xf32>
    %157 = arith.addf %154, %156 : vector<16x64xf32>
    %c4 = arith.constant 4 : index
    %c0_70 = arith.constant 0 : index
    %c0_71 = arith.constant 0 : index
    %158 = vector.load %arg22[%c4, %c0_70, %c0_71] : memref<8x16x64xf32, #tpu.memory_space<vmem>>, vector<1x16x64xf32>
    %159 = vector.shape_cast %158 : vector<1x16x64xf32> to vector<16x64xf32>
    %160 = vector.shape_cast %157 : vector<16x64xf32> to vector<1x16x64xf32>
    tpu.vector_store %arg22[%c4, %c0_70, %c0_71], %160 {strides = array<i32>} : memref<8x16x64xf32, #tpu.memory_space<vmem>>, vector<1x16x64xf32>,
    %161 = vector.extract_strided_slice %110 {offsets = [5, 0, 0], sizes = [1, 16, 64], strides = [1, 1, 1]} : vector<8x16x64xf32> to vector<1x16x64xf32>
    %162 = vector.shape_cast %161 : vector<1x16x64xf32> to vector<16x64xf32>
    %163 = arith.mulf %162, %157 : vector<16x64xf32>
    %164 = vector.extract_strided_slice %115 {offsets = [5, 0, 0], sizes = [1, 16, 64], strides = [1, 1, 1]} : vector<8x16x64xf32> to vector<1x16x64xf32>
    %165 = vector.shape_cast %164 : vector<1x16x64xf32> to vector<16x64xf32>
    %166 = arith.addf %163, %165 : vector<16x64xf32>
    %c5_72 = arith.constant 5 : index
    %c0_73 = arith.constant 0 : index
    %c0_74 = arith.constant 0 : index
    %167 = vector.load %arg22[%c5_72, %c0_73, %c0_74] : memref<8x16x64xf32, #tpu.memory_space<vmem>>, vector<1x16x64xf32>
    %168 = vector.shape_cast %167 : vector<1x16x64xf32> to vector<16x64xf32>
    %169 = vector.shape_cast %166 : vector<16x64xf32> to vector<1x16x64xf32>
    tpu.vector_store %arg22[%c5_72, %c0_73, %c0_74], %169 {strides = array<i32>} : memref<8x16x64xf32, #tpu.memory_space<vmem>>, vector<1x16x64xf32>,
    %170 = vector.extract_strided_slice %110 {offsets = [6, 0, 0], sizes = [1, 16, 64], strides = [1, 1, 1]} : vector<8x16x64xf32> to vector<1x16x64xf32>
    %171 = vector.shape_cast %170 : vector<1x16x64xf32> to vector<16x64xf32>
    %172 = arith.mulf %171, %166 : vector<16x64xf32>
    %173 = vector.extract_strided_slice %115 {offsets = [6, 0, 0], sizes = [1, 16, 64], strides = [1, 1, 1]} : vector<8x16x64xf32> to vector<1x16x64xf32>
    %174 = vector.shape_cast %173 : vector<1x16x64xf32> to vector<16x64xf32>
    %175 = arith.addf %172, %174 : vector<16x64xf32>
    %c6_75 = arith.constant 6 : index
    %c0_76 = arith.constant 0 : index
    %c0_77 = arith.constant 0 : index
    %176 = vector.load %arg22[%c6_75, %c0_76, %c0_77] : memref<8x16x64xf32, #tpu.memory_space<vmem>>, vector<1x16x64xf32>
    %177 = vector.shape_cast %176 : vector<1x16x64xf32> to vector<16x64xf32>
    %178 = vector.shape_cast %175 : vector<16x64xf32> to vector<1x16x64xf32>
    tpu.vector_store %arg22[%c6_75, %c0_76, %c0_77], %178 {strides = array<i32>} : memref<8x16x64xf32, #tpu.memory_space<vmem>>, vector<1x16x64xf32>,
    %179 = vector.extract_strided_slice %110 {offsets = [7, 0, 0], sizes = [1, 16, 64], strides = [1, 1, 1]} : vector<8x16x64xf32> to vector<1x16x64xf32>
    %180 = vector.shape_cast %179 : vector<1x16x64xf32> to vector<16x64xf32>
    %181 = arith.mulf %180, %175 : vector<16x64xf32>
    %182 = vector.extract_strided_slice %115 {offsets = [7, 0, 0], sizes = [1, 16, 64], strides = [1, 1, 1]} : vector<8x16x64xf32> to vector<1x16x64xf32>
    %183 = vector.shape_cast %182 : vector<1x16x64xf32> to vector<16x64xf32>
    %184 = arith.addf %181, %183 : vector<16x64xf32>
    %c7_78 = arith.constant 7 : index
    %c0_79 = arith.constant 0 : index
    %c0_80 = arith.constant 0 : index
    %185 = vector.load %arg22[%c7_78, %c0_79, %c0_80] : memref<8x16x64xf32, #tpu.memory_space<vmem>>, vector<1x16x64xf32>
    %186 = vector.shape_cast %185 : vector<1x16x64xf32> to vector<16x64xf32>
    %187 = vector.shape_cast %184 : vector<16x64xf32> to vector<1x16x64xf32>
    tpu.vector_store %arg22[%c7_78, %c0_79, %c0_80], %187 {strides = array<i32>} : memref<8x16x64xf32, #tpu.memory_space<vmem>>, vector<1x16x64xf32>,
    %c0_81 = arith.constant 0 : index
    %c0_82 = arith.constant 0 : index
    %c0_83 = arith.constant 0 : index
    %188 = vector.load %arg22[%c0_81, %c0_82, %c0_83] : memref<8x16x64xf32, #tpu.memory_space<vmem>>, vector<8x16x64xf32>
    %189 = vector.shape_cast %104 : vector<8x16xf32> to vector<8x16x1xf32>
    %190 = vector.broadcast %189 : vector<8x16x1xf32> to vector<8x16x64xf32>
    %191 = arith.mulf %188, %190 : vector<8x16x64xf32>
    %cst_84 = arith.constant dense<0.000000e+00> : vector<8x64xf32>
    %192 = vector.multi_reduction <add>, %191, %cst_84 [1] : vector<8x16x64xf32> to vector<8x64xf32>
    %193 = arith.index_cast %96 : i32 to index
    %c0_85 = arith.constant 0 : index
    %194 = vector.load %arg21[%193, %c0_85] : memref<8x64xf32, #tpu.memory_space<vmem>>, vector<8x64xf32>
    tpu.vector_store %arg21[%193, %c0_85], %192 {strides = array<i32>} : memref<8x64xf32, #tpu.memory_space<vmem>>, vector<8x64xf32>,
    %c1_i32 = arith.constant 1 : i32
    %c0_86 = arith.constant 0 : index
    %c0_87 = arith.constant 0 : index
    %195 = vector.load %arg15[%c0_86, %c0_87] : memref<16x64xf32, #tpu.memory_space<vmem>>, vector<16x64xf32>
    tpu.vector_store %arg15[%c0_86, %c0_87], %184 {strides = array<i32>} : memref<16x64xf32, #tpu.memory_space<vmem>>, vector<16x64xf32>,
    %c0_88 = arith.constant 0 : index
    %c0_89 = arith.constant 0 : index
    %196 = vector.load %arg21[%c0_88, %c0_89] : memref<8x64xf32, #tpu.memory_space<vmem>>, vector<8x64xf32>
    %c0_90 = arith.constant 0 : index
    %c0_91 = arith.constant 0 : index
    %197 = vector.load %arg12[%c0_90, %c0_91] : memref<1x64xf32, #tpu.memory_space<vmem>>, vector<1x64xf32>
    %198 = vector.broadcast %197 : vector<1x64xf32> to vector<8x64xf32>
    %199 = arith.mulf %198, %53 : vector<8x64xf32>
    %200 = arith.addf %196, %199 : vector<8x64xf32>
    %201 = arith.negf %21 : vector<8x64xf32>
    %202 = math.exp %201 : vector<8x64xf32>
    %cst_92 = arith.constant 1.000000e+00 : f32
    %203 = vector.broadcast %cst_92 : f32 to vector<8x64xf32>
    %204 = arith.addf %203, %202 : vector<8x64xf32>
    %205 = arith.divf %203, %204 : vector<8x64xf32>
    %206 = arith.mulf %21, %205 : vector<8x64xf32>
    %207 = arith.mulf %200, %206 : vector<8x64xf32>
    %c0_93 = arith.constant 0 : index
    %c0_94 = arith.constant 0 : index
    %208 = vector.load %arg13[%c0_93, %c0_94] : memref<64x32xf32, #tpu.memory_space<vmem>>, vector<64x32xf32>
    %cst_95 = arith.constant dense<0.000000e+00> : vector<8x32xf32>
    %209 = tpu.matmul %207, %208, %cst_95 {dimension_numbers = #tpu.dot_dimension_numbers<[1], [0], [0], [1], [0, 0, 1, 1], [], []>} : vector<8x64xf32>, vector<64x32xf32>, vector<8x32xf32> -> vector<8x32xf32>
    %210 = arith.addf %209, %4 : vector<8x32xf32>
    %c0_96 = arith.constant 0 : index
    %c0_97 = arith.constant 0 : index
    %c0_98 = arith.constant 0 : index
    %211 = vector.load %arg14[%c0_96, %c0_97, %c0_98] : memref<1x8x32xf32, #tpu.memory_space<vmem>>, vector<1x8x32xf32>
    %212 = vector.shape_cast %211 : vector<1x8x32xf32> to vector<8x32xf32>
    %213 = vector.shape_cast %210 : vector<8x32xf32> to vector<1x8x32xf32>
    tpu.vector_store %arg14[%c0_96, %c0_97, %c0_98], %213 {strides = array<i32>} : memref<1x8x32xf32, #tpu.memory_space<vmem>>, vector<1x8x32xf32>,
    return
  }
  func.func @transform_0(%arg0: i32, %arg1: i32) -> (i32, i32, i32) {
    %c0_i32 = arith.constant 0 : i32
    %c0_i32_0 = arith.constant 0 : i32
    return %arg0, %arg1, %c0_i32 : i32, i32, i32
  }
  func.func @transform_1(%arg0: i32, %arg1: i32) -> (i32, i32) {
    %c0_i32 = arith.constant 0 : i32
    %c0_i32_0 = arith.constant 0 : i32
    %c0_i32_1 = arith.constant 0 : i32
    return %c0_i32, %c0_i32_0 : i32, i32
  }
  func.func @transform_2(%arg0: i32, %arg1: i32) -> (i32, i32) {
    %c0_i32 = arith.constant 0 : i32
    %c0_i32_0 = arith.constant 0 : i32
    %c0_i32_1 = arith.constant 0 : i32
    return %c0_i32, %c0_i32_0 : i32, i32
  }
  func.func @transform_3(%arg0: i32, %arg1: i32) -> (i32, i32) {
    %c0_i32 = arith.constant 0 : i32
    %c0_i32_0 = arith.constant 0 : i32
    %c0_i32_1 = arith.constant 0 : i32
    return %c0_i32, %c0_i32_0 : i32, i32
  }
  func.func @transform_4(%arg0: i32, %arg1: i32) -> (i32, i32) {
    %c0_i32 = arith.constant 0 : i32
    %c0_i32_0 = arith.constant 0 : i32
    %c0_i32_1 = arith.constant 0 : i32
    return %c0_i32, %c0_i32_0 : i32, i32
  }
  func.func @transform_5(%arg0: i32, %arg1: i32) -> (i32, i32) {
    %c0_i32 = arith.constant 0 : i32
    %c0_i32_0 = arith.constant 0 : i32
    %c0_i32_1 = arith.constant 0 : i32
    return %c0_i32, %c0_i32_0 : i32, i32
  }
  func.func @transform_6(%arg0: i32, %arg1: i32) -> (i32, i32) {
    %c0_i32 = arith.constant 0 : i32
    %c0_i32_0 = arith.constant 0 : i32
    %c0_i32_1 = arith.constant 0 : i32
    return %c0_i32, %c0_i32_0 : i32, i32
  }
  func.func @transform_7(%arg0: i32, %arg1: i32) -> (i32, i32) {
    %c0_i32 = arith.constant 0 : i32
    %c0_i32_0 = arith.constant 0 : i32
    %c0_i32_1 = arith.constant 0 : i32
    return %c0_i32, %c0_i32_0 : i32, i32
  }
  func.func @transform_8(%arg0: i32, %arg1: i32) -> (i32, i32) {
    %c0_i32 = arith.constant 0 : i32
    %c0_i32_0 = arith.constant 0 : i32
    %c0_i32_1 = arith.constant 0 : i32
    return %c0_i32, %c0_i32_0 : i32, i32
  }
  func.func @transform_9(%arg0: i32, %arg1: i32) -> (i32, i32) {
    %c0_i32 = arith.constant 0 : i32
    %c0_i32_0 = arith.constant 0 : i32
    %c0_i32_1 = arith.constant 0 : i32
    return %c0_i32, %c0_i32_0 : i32, i32
  }
  func.func @transform_10(%arg0: i32, %arg1: i32) -> (i32, i32) {
    %c0_i32 = arith.constant 0 : i32
    %c0_i32_0 = arith.constant 0 : i32
    %c0_i32_1 = arith.constant 0 : i32
    return %c0_i32, %c0_i32_0 : i32, i32
  }
  func.func @transform_11(%arg0: i32, %arg1: i32) -> (i32, i32) {
    %c0_i32 = arith.constant 0 : i32
    %c0_i32_0 = arith.constant 0 : i32
    %c0_i32_1 = arith.constant 0 : i32
    return %c0_i32, %c0_i32_0 : i32, i32
  }
  func.func @transform_12(%arg0: i32, %arg1: i32) -> (i32, i32, i32) {
    %c0_i32 = arith.constant 0 : i32
    %c0_i32_0 = arith.constant 0 : i32
    return %arg0, %arg1, %c0_i32 : i32, i32, i32
  }
}

module attributes {stable_mosaic.version = 11 : i64} {
  func.func @residual_block_kernel(%arg0: i32, %arg1: i32, %arg2: memref<1x8x32xf32, #tpu.memory_space<vmem>>, %arg3: memref<1x32xf32, #tpu.memory_space<vmem>>, %arg4: memref<32x64xf32, #tpu.memory_space<vmem>>, %arg5: memref<32x64xf32, #tpu.memory_space<vmem>>, %arg6: memref<4x64xf32, #tpu.memory_space<vmem>>, %arg7: memref<1x64xf32, #tpu.memory_space<vmem>>, %arg8: memref<64x384xf32, #tpu.memory_space<vmem>>, %arg9: memref<2x64xf32, #tpu.memory_space<vmem>>, %arg10: memref<1x64xf32, #tpu.memory_space<vmem>>, %arg11: memref<16x64xf32, #tpu.memory_space<vmem>>, %arg12: memref<1x64xf32, #tpu.memory_space<vmem>>, %arg13: memref<64x32xf32, #tpu.memory_space<vmem>>, %arg14: memref<1x8x32xf32, #tpu.memory_space<vmem>>, %arg15: memref<16x64xf32, #tpu.memory_space<vmem>>, %arg16: memref<16x64xf32, #tpu.memory_space<vmem>>, %arg17: memref<8x64xf32, #tpu.memory_space<vmem>>, %arg18: memref<8x64xf32, #tpu.memory_space<vmem>>, %arg19: memref<8x16xf32, #tpu.memory_space<vmem>>, %arg20: memref<8x16xf32, #tpu.memory_space<vmem>>, %arg21: memref<8x64xf32, #tpu.memory_space<vmem>>, %arg22: memref<8x16x64xf32, #tpu.memory_space<vmem>>) attributes {dimension_semantics = [#tpu.dimension_semantics<parallel>, #tpu.dimension_semantics<arbitrary>], iteration_bounds = array<i64: 2, 1>, scalar_prefetch = 0 : i64, scratch_operands = 8 : i64, tpu.core_type = #tpu.core_type<tc>, window_params = [{transform_indices = @transform_0, window_bounds = array<i64: 1, 8, 32>}, {pipeline_mode = #tpu.pipeline_mode<synchronous>, transform_indices = @transform_1, window_bounds = array<i64: 1, 32>}, {pipeline_mode = #tpu.pipeline_mode<synchronous>, transform_indices = @transform_2, window_bounds = array<i64: 32, 64>}, {pipeline_mode = #tpu.pipeline_mode<synchronous>, transform_indices = @transform_3, window_bounds = array<i64: 32, 64>}, {pipeline_mode = #tpu.pipeline_mode<synchronous>, transform_indices = @transform_4, window_bounds = array<i64: 4, 64>}, {pipeline_mode = #tpu.pipeline_mode<synchronous>, transform_indices = @transform_5, window_bounds = array<i64: 1, 64>}, {pipeline_mode = #tpu.pipeline_mode<synchronous>, transform_indices = @transform_6, window_bounds = array<i64: 64, 384>}, {pipeline_mode = #tpu.pipeline_mode<synchronous>, transform_indices = @transform_7, window_bounds = array<i64: 2, 64>}, {pipeline_mode = #tpu.pipeline_mode<synchronous>, transform_indices = @transform_8, window_bounds = array<i64: 1, 64>}, {pipeline_mode = #tpu.pipeline_mode<synchronous>, transform_indices = @transform_9, window_bounds = array<i64: 16, 64>}, {pipeline_mode = #tpu.pipeline_mode<synchronous>, transform_indices = @transform_10, window_bounds = array<i64: 1, 64>}, {pipeline_mode = #tpu.pipeline_mode<synchronous>, transform_indices = @transform_11, window_bounds = array<i64: 64, 32>}, {transform_indices = @transform_12, window_bounds = array<i64: 1, 8, 32>}]} {
    %c0_i32 = arith.constant 0 : i32
    %0 = arith.cmpi eq, %arg1, %c0_i32 : i32
    %1 = arith.extui %0 : i1 to i32
    %c0_i32_0 = arith.constant 0 : i32
    %2 = arith.cmpi ne, %1, %c0_i32_0 : i32
    scf.if %2 {
      %cst_99 = arith.constant 0.000000e+00 : f32
      %214 = vector.broadcast %cst_99 : f32 to vector<16x64xf32>
      %c0_100 = arith.constant 0 : index
      %c0_101 = arith.constant 0 : index
      %215 = vector.load %arg15[%c0_100, %c0_101] : memref<16x64xf32, #tpu.memory_space<vmem>>, vector<16x64xf32>
      tpu.vector_store %arg15[%c0_100, %c0_101], %214 {strides = array<i32>} : memref<16x64xf32, #tpu.memory_space<vmem>>, vector<16x64xf32>,
      %cst_102 = arith.constant 0.000000e+00 : f32
      %216 = vector.broadcast %cst_102 : f32 to vector<8x64xf32>
      %c0_103 = arith.constant 0 : index
      %c0_104 = arith.constant 0 : index
      %217 = vector.load %arg16[%c0_103, %c0_104] : memref<16x64xf32, #tpu.memory_space<vmem>>, vector<8x64xf32>
      tpu.vector_store %arg16[%c0_103, %c0_104], %216 {strides = array<i32>} : memref<16x64xf32, #tpu.memory_space<vmem>>, vector<8x64xf32>,
    } else {
    }
    %c0 = arith.constant 0 : index
    %c0_1 = arith.constant 0 : index
    %c0_2 = arith.constant 0 : index
    %3 = vector.load %arg2[%c0, %c0_1, %c0_2] : memref<1x8x32xf32, #tpu.memory_space<vmem>>, vector<1x8x32xf32>
    %4 = vector.shape_cast %3 : vector<1x8x32xf32> to vector<8x32xf32>
    %5 = arith.mulf %4, %4 : vector<8x32xf32>
    %cst = arith.constant dense<0.000000e+00> : vector<8xf32>
    %6 = vector.multi_reduction <add>, %5, %cst [1] : vector<8x32xf32> to vector<8xf32>
    %7 = vector.shape_cast %6 : vector<8xf32> to vector<8x1xf32>
    %cst_3 = arith.constant 3.200000e+01 : f32
    %8 = vector.broadcast %cst_3 : f32 to vector<8x1xf32>
    %9 = arith.divf %7, %8 : vector<8x1xf32>
    %cst_4 = arith.constant 9.99999974E-6 : f32
    %10 = vector.broadcast %cst_4 : f32 to vector<8x1xf32>
    %11 = arith.addf %9, %10 : vector<8x1xf32>
    %12 = math.rsqrt %11 : vector<8x1xf32>
    %13 = vector.broadcast %12 : vector<8x1xf32> to vector<8x32xf32>
    %14 = arith.mulf %4, %13 : vector<8x32xf32>
    %c0_5 = arith.constant 0 : index
    %c0_6 = arith.constant 0 : index
    %15 = vector.load %arg3[%c0_5, %c0_6] : memref<1x32xf32, #tpu.memory_space<vmem>>, vector<1x32xf32>
    %16 = vector.broadcast %15 : vector<1x32xf32> to vector<8x32xf32>
    %17 = arith.mulf %14, %16 : vector<8x32xf32>
    %c0_7 = arith.constant 0 : index
    %c0_8 = arith.constant 0 : index
    %18 = vector.load %arg4[%c0_7, %c0_8] : memref<32x64xf32, #tpu.memory_space<vmem>>, vector<32x64xf32>
    %cst_9 = arith.constant dense<0.000000e+00> : vector<8x64xf32>
    %19 = tpu.matmul %17, %18, %cst_9 {dimension_numbers = #tpu.dot_dimension_numbers<[1], [0], [0], [1], [0, 0, 1, 1], [], []>} : vector<8x32xf32>, vector<32x64xf32>, vector<8x64xf32> -> vector<8x64xf32>
    %c0_10 = arith.constant 0 : index
    %c0_11 = arith.constant 0 : index
    %20 = vector.load %arg5[%c0_10, %c0_11] : memref<32x64xf32, #tpu.memory_space<vmem>>, vector<32x64xf32>
    %cst_12 = arith.constant dense<0.000000e+00> : vector<8x64xf32>
    %21 = tpu.matmul %17, %20, %cst_12 {dimension_numbers = #tpu.dot_dimension_numbers<[1], [0], [0], [1], [0, 0, 1, 1], [], []>} : vector<8x32xf32>, vector<32x64xf32>, vector<8x64xf32> -> vector<8x64xf32>
    %c8 = arith.constant 8 : index
    %c0_13 = arith.constant 0 : index
    %22 = vector.load %arg16[%c8, %c0_13] : memref<16x64xf32, #tpu.memory_space<vmem>>, vector<8x64xf32>
    tpu.vector_store %arg16[%c8, %c0_13], %19 {strides = array<i32>} : memref<16x64xf32, #tpu.memory_space<vmem>>, vector<8x64xf32>,
    %c0_14 = arith.constant 0 : index
    %c0_15 = arith.constant 0 : index
    %23 = vector.load %arg7[%c0_14, %c0_15] : memref<1x64xf32, #tpu.memory_space<vmem>>, vector<1x64xf32>
    %24 = vector.shape_cast %23 : vector<1x64xf32> to vector<1x64xf32>
    %25 = vector.broadcast %24 : vector<1x64xf32> to vector<8x64xf32>
    %c0_16 = arith.constant 0 : index
    %c0_17 = arith.constant 0 : index
    %26 = vector.load %arg6[%c0_16, %c0_17] : memref<4x64xf32, #tpu.memory_space<vmem>>, vector<1x64xf32>
    %c5 = arith.constant 5 : index
    %c0_18 = arith.constant 0 : index
    %27 = vector.load %arg16[%c5, %c0_18] : memref<16x64xf32, #tpu.memory_space<vmem>>, vector<8x64xf32>
    %28 = vector.broadcast %26 : vector<1x64xf32> to vector<8x64xf32>
    %29 = arith.mulf %28, %27 : vector<8x64xf32>
    %30 = arith.addf %25, %29 : vector<8x64xf32>
    %c1 = arith.constant 1 : index
    %c0_19 = arith.constant 0 : index
    %31 = vector.load %arg6[%c1, %c0_19] : memref<4x64xf32, #tpu.memory_space<vmem>>, vector<1x64xf32>
    %c6 = arith.constant 6 : index
    %c0_20 = arith.constant 0 : index
    %32 = vector.load %arg16[%c6, %c0_20] : memref<16x64xf32, #tpu.memory_space<vmem>>, vector<8x64xf32>
    %33 = vector.broadcast %31 : vector<1x64xf32> to vector<8x64xf32>
    %34 = arith.mulf %33, %32 : vector<8x64xf32>
    %35 = arith.addf %30, %34 : vector<8x64xf32>
    %c2 = arith.constant 2 : index
    %c0_21 = arith.constant 0 : index
    %36 = vector.load %arg6[%c2, %c0_21] : memref<4x64xf32, #tpu.memory_space<vmem>>, vector<1x64xf32>
    %c7 = arith.constant 7 : index
    %c0_22 = arith.constant 0 : index
    %37 = vector.load %arg16[%c7, %c0_22] : memref<16x64xf32, #tpu.memory_space<vmem>>, vector<8x64xf32>
    %38 = vector.broadcast %36 : vector<1x64xf32> to vector<8x64xf32>
    %39 = arith.mulf %38, %37 : vector<8x64xf32>
    %40 = arith.addf %35, %39 : vector<8x64xf32>
    %c3 = arith.constant 3 : index
    %c0_23 = arith.constant 0 : index
    %41 = vector.load %arg6[%c3, %c0_23] : memref<4x64xf32, #tpu.memory_space<vmem>>, vector<1x64xf32>
    %c8_24 = arith.constant 8 : index
    %c0_25 = arith.constant 0 : index
    %42 = vector.load %arg16[%c8_24, %c0_25] : memref<16x64xf32, #tpu.memory_space<vmem>>, vector<8x64xf32>
    %43 = vector.broadcast %41 : vector<1x64xf32> to vector<8x64xf32>
    %44 = arith.mulf %43, %42 : vector<8x64xf32>
    %45 = arith.addf %40, %44 : vector<8x64xf32>
    %c13 = arith.constant 13 : index
    %c0_26 = arith.constant 0 : index
    %46 = vector.load %arg16[%c13, %c0_26] : memref<16x64xf32, #tpu.memory_space<vmem>>, vector<3x64xf32>
    %c5_27 = arith.constant 5 : index
    %c0_28 = arith.constant 0 : index
    %47 = vector.load %arg16[%c5_27, %c0_28] : memref<16x64xf32, #tpu.memory_space<vmem>>, vector<3x64xf32>
    tpu.vector_store %arg16[%c5_27, %c0_28], %46 {strides = array<i32>} : memref<16x64xf32, #tpu.memory_space<vmem>>, vector<3x64xf32>,
    %48 = arith.negf %45 : vector<8x64xf32>
    %49 = math.exp %48 : vector<8x64xf32>
    %cst_29 = arith.constant 1.000000e+00 : f32
    %50 = vector.broadcast %cst_29 : f32 to vector<8x64xf32>
    %51 = arith.addf %50, %49 : vector<8x64xf32>
    %52 = arith.divf %50, %51 : vector<8x64xf32>
    %53 = arith.mulf %45, %52 : vector<8x64xf32>
    %c0_30 = arith.constant 0 : index
    %c0_31 = arith.constant 0 : index
    %54 = vector.load %arg8[%c0_30, %c0_31] : memref<64x384xf32, #tpu.memory_space<vmem>>, vector<64x384xf32>
    %cst_32 = arith.constant dense<0.000000e+00> : vector<8x384xf32>
    %55 = tpu.matmul %53, %54, %cst_32 {dimension_numbers = #tpu.dot_dimension_numbers<[1], [0], [0], [1], [0, 0, 1, 1], [], []>} : vector<8x64xf32>, vector<64x384xf32>, vector<8x384xf32> -> vector<8x384xf32>
    %56 = vector.extract_strided_slice %55 {offsets = [0, 0], sizes = [8, 2], strides = [1, 1]} : vector<8x384xf32> to vector<8x2xf32>
    %57 = vector.extract_strided_slice %55 {offsets = [0, 128], sizes = [8, 16], strides = [1, 1]} : vector<8x384xf32> to vector<8x16xf32>
    %58 = vector.extract_strided_slice %55 {offsets = [0, 256], sizes = [8, 16], strides = [1, 1]} : vector<8x384xf32> to vector<8x16xf32>
    %c0_33 = arith.constant 0 : index
    %c0_34 = arith.constant 0 : index
    %59 = vector.load %arg10[%c0_33, %c0_34] : memref<1x64xf32, #tpu.memory_space<vmem>>, vector<1x64xf32>
    %60 = vector.shape_cast %59 : vector<1x64xf32> to vector<1x64xf32>
    %61 = vector.broadcast %60 : vector<1x64xf32> to vector<8x64xf32>
    %62 = vector.extract_strided_slice %56 {offsets = [0, 0], sizes = [8, 1], strides = [1, 1]} : vector<8x2xf32> to vector<8x1xf32>
    %c0_35 = arith.constant 0 : index
    %c0_36 = arith.constant 0 : index
    %63 = vector.load %arg9[%c0_35, %c0_36] : memref<2x64xf32, #tpu.memory_space<vmem>>, vector<1x64xf32>
    %64 = vector.broadcast %62 : vector<8x1xf32> to vector<8x64xf32>
    %65 = vector.broadcast %63 : vector<1x64xf32> to vector<8x64xf32>
    %66 = arith.mulf %64, %65 : vector<8x64xf32>
    %67 = arith.addf %61, %66 : vector<8x64xf32>
    %68 = vector.extract_strided_slice %56 {offsets = [0, 1], sizes = [8, 1], strides = [1, 1]} : vector<8x2xf32> to vector<8x1xf32>
    %c1_37 = arith.constant 1 : index
    %c0_38 = arith.constant 0 : index
    %69 = vector.load %arg9[%c1_37, %c0_38] : memref<2x64xf32, #tpu.memory_space<vmem>>, vector<1x64xf32>
    %70 = vector.broadcast %68 : vector<8x1xf32> to vector<8x64xf32>
    %71 = vector.broadcast %69 : vector<1x64xf32> to vector<8x64xf32>
    %72 = arith.mulf %70, %71 : vector<8x64xf32>
    %73 = arith.addf %67, %72 : vector<8x64xf32>
    %cst_39 = arith.constant 0.000000e+00 : f32
    %74 = vector.broadcast %cst_39 : f32 to vector<8x64xf32>
    %75 = arith.maximumf %73, %74 : vector<8x64xf32>
    %76 = vector.broadcast %cst_39 : f32 to vector<8x64xf32>
    %77 = arith.subf %73, %76 : vector<8x64xf32>
    %78 = arith.cmpf one, %77, %77 : vector<8x64xf32>
    %79 = vector.broadcast %cst_39 : f32 to vector<8x64xf32>
    %80 = arith.addf %73, %79 : vector<8x64xf32>
    %81 = math.absf %77 : vector<8x64xf32>
    %cst_40 = arith.constant 0.000000e+00 : f32
    %82 = vector.broadcast %cst_40 : f32 to vector<8x64xf32>
    %83 = arith.subf %82, %81 : vector<8x64xf32>
    %84 = math.exp %83 : vector<8x64xf32>
    %85 = math.log1p %84 : vector<8x64xf32>
    %86 = arith.addf %75, %85 : vector<8x64xf32>
    %87 = arith.select %78, %80, %86 : vector<8x64xi1>, vector<8x64xf32>
    %c0_41 = arith.constant 0 : index
    %c0_42 = arith.constant 0 : index
    %88 = vector.load %arg17[%c0_41, %c0_42] : memref<8x64xf32, #tpu.memory_space<vmem>>, vector<8x64xf32>
    tpu.vector_store %arg17[%c0_41, %c0_42], %87 {strides = array<i32>} : memref<8x64xf32, #tpu.memory_space<vmem>>, vector<8x64xf32>,
    %89 = arith.mulf %87, %53 : vector<8x64xf32>
    %c0_43 = arith.constant 0 : index
    %c0_44 = arith.constant 0 : index
    %90 = vector.load %arg18[%c0_43, %c0_44] : memref<8x64xf32, #tpu.memory_space<vmem>>, vector<8x64xf32>
    tpu.vector_store %arg18[%c0_43, %c0_44], %89 {strides = array<i32>} : memref<8x64xf32, #tpu.memory_space<vmem>>, vector<8x64xf32>,
    %c0_45 = arith.constant 0 : index
    %c0_46 = arith.constant 0 : index
    %91 = vector.load %arg19[%c0_45, %c0_46] : memref<8x16xf32, #tpu.memory_space<vmem>>, vector<8x16xf32>
    tpu.vector_store %arg19[%c0_45, %c0_46], %57 {strides = array<i32>} : memref<8x16xf32, #tpu.memory_space<vmem>>, vector<8x16xf32>,
    %c0_47 = arith.constant 0 : index
    %c0_48 = arith.constant 0 : index
    %92 = vector.load %arg20[%c0_47, %c0_48] : memref<8x16xf32, #tpu.memory_space<vmem>>, vector<8x16xf32>
    tpu.vector_store %arg20[%c0_47, %c0_48], %58 {strides = array<i32>} : memref<8x16xf32, #tpu.memory_space<vmem>>, vector<8x16xf32>,
    %c0_49 = arith.constant 0 : index
    %c0_50 = arith.constant 0 : index
    %93 = vector.load %arg11[%c0_49, %c0_50] : memref<16x64xf32, #tpu.memory_space<vmem>>, vector<16x64xf32>
    %c0_51 = arith.constant 0 : index
    %c0_52 = arith.constant 0 : index
    %94 = vector.load %arg15[%c0_51, %c0_52] : memref<16x64xf32, #tpu.memory_space<vmem>>, vector<16x64xf32>
    %c0_i32_53 = arith.constant 0 : i32
    %c8_i32 = arith.constant 8 : i32
    %95 = arith.muli %c0_i32_53, %c8_i32 : i32
    %96 = tpu.assume_multiple %95, 8 : i32
    %97 = arith.index_cast %96 : i32 to index
    %c0_54 = arith.constant 0 : index
    %98 = vector.load %arg17[%97, %c0_54] : memref<8x64xf32, #tpu.memory_space<vmem>>, vector<8x64xf32>
    %99 = arith.index_cast %96 : i32 to index
    %c0_55 = arith.constant 0 : index
    %100 = vector.load %arg18[%99, %c0_55] : memref<8x64xf32, #tpu.memory_space<vmem>>, vector<8x64xf32>
    %101 = arith.index_cast %96 : i32 to index
    %c0_56 = arith.constant 0 : index
    %102 = vector.load %arg19[%101, %c0_56] : memref<8x16xf32, #tpu.memory_space<vmem>>, vector<8x16xf32>
    %103 = arith.index_cast %96 : i32 to index
    %c0_57 = arith.constant 0 : index
    %104 = vector.load %arg20[%103, %c0_57] : memref<8x16xf32, #tpu.memory_space<vmem>>, vector<8x16xf32>
    %105 = vector.shape_cast %98 : vector<8x64xf32> to vector<8x1x64xf32>
    %106 = vector.shape_cast %93 : vector<16x64xf32> to vector<1x16x64xf32>
    %107 = vector.broadcast %105 : vector<8x1x64xf32> to vector<8x16x64xf32>
    %108 = vector.broadcast %106 : vector<1x16x64xf32> to vector<8x16x64xf32>
    %109 = arith.mulf %107, %108 : vector<8x16x64xf32>
    %110 = math.exp %109 : vector<8x16x64xf32>
    %111 = vector.shape_cast %100 : vector<8x64xf32> to vector<8x1x64xf32>
    %112 = vector.shape_cast %102 : vector<8x16xf32> to vector<8x16x1xf32>
    %113 = vector.broadcast %111 : vector<8x1x64xf32> to vector<8x16x64xf32>
    %114 = vector.broadcast %112 : vector<8x16x1xf32> to vector<8x16x64xf32>
    %115 = arith.mulf %113, %114 : vector<8x16x64xf32>
    %116 = vector.extract_strided_slice %110 {offsets = [0, 0, 0], sizes = [1, 16, 64], strides = [1, 1, 1]} : vector<8x16x64xf32> to vector<1x16x64xf32>
    %117 = vector.shape_cast %116 : vector<1x16x64xf32> to vector<16x64xf32>
    %118 = arith.mulf %117, %94 : vector<16x64xf32>
    %119 = vector.extract_strided_slice %115 {offsets = [0, 0, 0], sizes = [1, 16, 64], strides = [1, 1, 1]} : vector<8x16x64xf32> to vector<1x16x64xf32>
    %120 = vector.shape_cast %119 : vector<1x16x64xf32> to vector<16x64xf32>
    %121 = arith.addf %118, %120 : vector<16x64xf32>
    %c0_58 = arith.constant 0 : index
    %c0_59 = arith.constant 0 : index
    %c0_60 = arith.constant 0 : index
    %122 = vector.load %arg22[%c0_58, %c0_59, %c0_60] : memref<8x16x64xf32, #tpu.memory_space<vmem>>, vector<1x16x64xf32>
    %123 = vector.shape_cast %122 : vector<1x16x64xf32> to vector<16x64xf32>
    %124 = vector.shape_cast %121 : vector<16x64xf32> to vector<1x16x64xf32>
    tpu.vector_store %arg22[%c0_58, %c0_59, %c0_60], %124 {strides = array<i32>} : memref<8x16x64xf32, #tpu.memory_space<vmem>>, vector<1x16x64xf32>,
    %125 = vector.extract_strided_slice %110 {offsets = [1, 0, 0], sizes = [1, 16, 64], strides = [1, 1, 1]} : vector<8x16x64xf32> to vector<1x16x64xf32>
    %126 = vector.shape_cast %125 : vector<1x16x64xf32> to vector<16x64xf32>
    %127 = arith.mulf %126, %121 : vector<16x64xf32>
    %128 = vector.extract_strided_slice %115 {offsets = [1, 0, 0], sizes = [1, 16, 64], strides = [1, 1, 1]} : vector<8x16x64xf32> to vector<1x16x64xf32>
    %129 = vector.shape_cast %128 : vector<1x16x64xf32> to vector<16x64xf32>
    %130 = arith.addf %127, %129 : vector<16x64xf32>
    %c1_61 = arith.constant 1 : index
    %c0_62 = arith.constant 0 : index
    %c0_63 = arith.constant 0 : index
    %131 = vector.load %arg22[%c1_61, %c0_62, %c0_63] : memref<8x16x64xf32, #tpu.memory_space<vmem>>, vector<1x16x64xf32>
    %132 = vector.shape_cast %131 : vector<1x16x64xf32> to vector<16x64xf32>
    %133 = vector.shape_cast %130 : vector<16x64xf32> to vector<1x16x64xf32>
    tpu.vector_store %arg22[%c1_61, %c0_62, %c0_63], %133 {strides = array<i32>} : memref<8x16x64xf32, #tpu.memory_space<vmem>>, vector<1x16x64xf32>,
    %134 = vector.extract_strided_slice %110 {offsets = [2, 0, 0], sizes = [1, 16, 64], strides = [1, 1, 1]} : vector<8x16x64xf32> to vector<1x16x64xf32>
    %135 = vector.shape_cast %134 : vector<1x16x64xf32> to vector<16x64xf32>
    %136 = arith.mulf %135, %130 : vector<16x64xf32>
    %137 = vector.extract_strided_slice %115 {offsets = [2, 0, 0], sizes = [1, 16, 64], strides = [1, 1, 1]} : vector<8x16x64xf32> to vector<1x16x64xf32>
    %138 = vector.shape_cast %137 : vector<1x16x64xf32> to vector<16x64xf32>
    %139 = arith.addf %136, %138 : vector<16x64xf32>
    %c2_64 = arith.constant 2 : index
    %c0_65 = arith.constant 0 : index
    %c0_66 = arith.constant 0 : index
    %140 = vector.load %arg22[%c2_64, %c0_65, %c0_66] : memref<8x16x64xf32, #tpu.memory_space<vmem>>, vector<1x16x64xf32>
    %141 = vector.shape_cast %140 : vector<1x16x64xf32> to vector<16x64xf32>
    %142 = vector.shape_cast %139 : vector<16x64xf32> to vector<1x16x64xf32>
    tpu.vector_store %arg22[%c2_64, %c0_65, %c0_66], %142 {strides = array<i32>} : memref<8x16x64xf32, #tpu.memory_space<vmem>>, vector<1x16x64xf32>,
    %143 = vector.extract_strided_slice %110 {offsets = [3, 0, 0], sizes = [1, 16, 64], strides = [1, 1, 1]} : vector<8x16x64xf32> to vector<1x16x64xf32>
    %144 = vector.shape_cast %143 : vector<1x16x64xf32> to vector<16x64xf32>
    %145 = arith.mulf %144, %139 : vector<16x64xf32>
    %146 = vector.extract_strided_slice %115 {offsets = [3, 0, 0], sizes = [1, 16, 64], strides = [1, 1, 1]} : vector<8x16x64xf32> to vector<1x16x64xf32>
    %147 = vector.shape_cast %146 : vector<1x16x64xf32> to vector<16x64xf32>
    %148 = arith.addf %145, %147 : vector<16x64xf32>
    %c3_67 = arith.constant 3 : index
    %c0_68 = arith.constant 0 : index
    %c0_69 = arith.constant 0 : index
    %149 = vector.load %arg22[%c3_67, %c0_68, %c0_69] : memref<8x16x64xf32, #tpu.memory_space<vmem>>, vector<1x16x64xf32>
    %150 = vector.shape_cast %149 : vector<1x16x64xf32> to vector<16x64xf32>
    %151 = vector.shape_cast %148 : vector<16x64xf32> to vector<1x16x64xf32>
    tpu.vector_store %arg22[%c3_67, %c0_68, %c0_69], %151 {strides = array<i32>} : memref<8x16x64xf32, #tpu.memory_space<vmem>>, vector<1x16x64xf32>,
    %152 = vector.extract_strided_slice %110 {offsets = [4, 0, 0], sizes = [1, 16, 64], strides = [1, 1, 1]} : vector<8x16x64xf32> to vector<1x16x64xf32>
    %153 = vector.shape_cast %152 : vector<1x16x64xf32> to vector<16x64xf32>
    %154 = arith.mulf %153, %148 : vector<16x64xf32>
    %155 = vector.extract_strided_slice %115 {offsets = [4, 0, 0], sizes = [1, 16, 64], strides = [1, 1, 1]} : vector<8x16x64xf32> to vector<1x16x64xf32>
    %156 = vector.shape_cast %155 : vector<1x16x64xf32> to vector<16x64xf32>
    %157 = arith.addf %154, %156 : vector<16x64xf32>
    %c4 = arith.constant 4 : index
    %c0_70 = arith.constant 0 : index
    %c0_71 = arith.constant 0 : index
    %158 = vector.load %arg22[%c4, %c0_70, %c0_71] : memref<8x16x64xf32, #tpu.memory_space<vmem>>, vector<1x16x64xf32>
    %159 = vector.shape_cast %158 : vector<1x16x64xf32> to vector<16x64xf32>
    %160 = vector.shape_cast %157 : vector<16x64xf32> to vector<1x16x64xf32>
    tpu.vector_store %arg22[%c4, %c0_70, %c0_71], %160 {strides = array<i32>} : memref<8x16x64xf32, #tpu.memory_space<vmem>>, vector<1x16x64xf32>,
    %161 = vector.extract_strided_slice %110 {offsets = [5, 0, 0], sizes = [1, 16, 64], strides = [1, 1, 1]} : vector<8x16x64xf32> to vector<1x16x64xf32>
    %162 = vector.shape_cast %161 : vector<1x16x64xf32> to vector<16x64xf32>
    %163 = arith.mulf %162, %157 : vector<16x64xf32>
    %164 = vector.extract_strided_slice %115 {offsets = [5, 0, 0], sizes = [1, 16, 64], strides = [1, 1, 1]} : vector<8x16x64xf32> to vector<1x16x64xf32>
    %165 = vector.shape_cast %164 : vector<1x16x64xf32> to vector<16x64xf32>
    %166 = arith.addf %163, %165 : vector<16x64xf32>
    %c5_72 = arith.constant 5 : index
    %c0_73 = arith.constant 0 : index
    %c0_74 = arith.constant 0 : index
    %167 = vector.load %arg22[%c5_72, %c0_73, %c0_74] : memref<8x16x64xf32, #tpu.memory_space<vmem>>, vector<1x16x64xf32>
    %168 = vector.shape_cast %167 : vector<1x16x64xf32> to vector<16x64xf32>
    %169 = vector.shape_cast %166 : vector<16x64xf32> to vector<1x16x64xf32>
    tpu.vector_store %arg22[%c5_72, %c0_73, %c0_74], %169 {strides = array<i32>} : memref<8x16x64xf32, #tpu.memory_space<vmem>>, vector<1x16x64xf32>,
    %170 = vector.extract_strided_slice %110 {offsets = [6, 0, 0], sizes = [1, 16, 64], strides = [1, 1, 1]} : vector<8x16x64xf32> to vector<1x16x64xf32>
    %171 = vector.shape_cast %170 : vector<1x16x64xf32> to vector<16x64xf32>
    %172 = arith.mulf %171, %166 : vector<16x64xf32>
    %173 = vector.extract_strided_slice %115 {offsets = [6, 0, 0], sizes = [1, 16, 64], strides = [1, 1, 1]} : vector<8x16x64xf32> to vector<1x16x64xf32>
    %174 = vector.shape_cast %173 : vector<1x16x64xf32> to vector<16x64xf32>
    %175 = arith.addf %172, %174 : vector<16x64xf32>
    %c6_75 = arith.constant 6 : index
    %c0_76 = arith.constant 0 : index
    %c0_77 = arith.constant 0 : index
    %176 = vector.load %arg22[%c6_75, %c0_76, %c0_77] : memref<8x16x64xf32, #tpu.memory_space<vmem>>, vector<1x16x64xf32>
    %177 = vector.shape_cast %176 : vector<1x16x64xf32> to vector<16x64xf32>
    %178 = vector.shape_cast %175 : vector<16x64xf32> to vector<1x16x64xf32>
    tpu.vector_store %arg22[%c6_75, %c0_76, %c0_77], %178 {strides = array<i32>} : memref<8x16x64xf32, #tpu.memory_space<vmem>>, vector<1x16x64xf32>,
    %179 = vector.extract_strided_slice %110 {offsets = [7, 0, 0], sizes = [1, 16, 64], strides = [1, 1, 1]} : vector<8x16x64xf32> to vector<1x16x64xf32>
    %180 = vector.shape_cast %179 : vector<1x16x64xf32> to vector<16x64xf32>
    %181 = arith.mulf %180, %175 : vector<16x64xf32>
    %182 = vector.extract_strided_slice %115 {offsets = [7, 0, 0], sizes = [1, 16, 64], strides = [1, 1, 1]} : vector<8x16x64xf32> to vector<1x16x64xf32>
    %183 = vector.shape_cast %182 : vector<1x16x64xf32> to vector<16x64xf32>
    %184 = arith.addf %181, %183 : vector<16x64xf32>
    %c7_78 = arith.constant 7 : index
    %c0_79 = arith.constant 0 : index
    %c0_80 = arith.constant 0 : index
    %185 = vector.load %arg22[%c7_78, %c0_79, %c0_80] : memref<8x16x64xf32, #tpu.memory_space<vmem>>, vector<1x16x64xf32>
    %186 = vector.shape_cast %185 : vector<1x16x64xf32> to vector<16x64xf32>
    %187 = vector.shape_cast %184 : vector<16x64xf32> to vector<1x16x64xf32>
    tpu.vector_store %arg22[%c7_78, %c0_79, %c0_80], %187 {strides = array<i32>} : memref<8x16x64xf32, #tpu.memory_space<vmem>>, vector<1x16x64xf32>,
    %c0_81 = arith.constant 0 : index
    %c0_82 = arith.constant 0 : index
    %c0_83 = arith.constant 0 : index
    %188 = vector.load %arg22[%c0_81, %c0_82, %c0_83] : memref<8x16x64xf32, #tpu.memory_space<vmem>>, vector<8x16x64xf32>
    %189 = vector.shape_cast %104 : vector<8x16xf32> to vector<8x16x1xf32>
    %190 = vector.broadcast %189 : vector<8x16x1xf32> to vector<8x16x64xf32>
    %191 = arith.mulf %188, %190 : vector<8x16x64xf32>
    %cst_84 = arith.constant dense<0.000000e+00> : vector<8x64xf32>
    %192 = vector.multi_reduction <add>, %191, %cst_84 [1] : vector<8x16x64xf32> to vector<8x64xf32>
    %193 = arith.index_cast %96 : i32 to index
    %c0_85 = arith.constant 0 : index
    %194 = vector.load %arg21[%193, %c0_85] : memref<8x64xf32, #tpu.memory_space<vmem>>, vector<8x64xf32>
    tpu.vector_store %arg21[%193, %c0_85], %192 {strides = array<i32>} : memref<8x64xf32, #tpu.memory_space<vmem>>, vector<8x64xf32>,
    %c1_i32 = arith.constant 1 : i32
    %c0_86 = arith.constant 0 : index
    %c0_87 = arith.constant 0 : index
    %195 = vector.load %arg15[%c0_86, %c0_87] : memref<16x64xf32, #tpu.memory_space<vmem>>, vector<16x64xf32>
    tpu.vector_store %arg15[%c0_86, %c0_87], %184 {strides = array<i32>} : memref<16x64xf32, #tpu.memory_space<vmem>>, vector<16x64xf32>,
    %c0_88 = arith.constant 0 : index
    %c0_89 = arith.constant 0 : index
    %196 = vector.load %arg21[%c0_88, %c0_89] : memref<8x64xf32, #tpu.memory_space<vmem>>, vector<8x64xf32>
    %c0_90 = arith.constant 0 : index
    %c0_91 = arith.constant 0 : index
    %197 = vector.load %arg12[%c0_90, %c0_91] : memref<1x64xf32, #tpu.memory_space<vmem>>, vector<1x64xf32>
    %198 = vector.broadcast %197 : vector<1x64xf32> to vector<8x64xf32>
    %199 = arith.mulf %198, %53 : vector<8x64xf32>
    %200 = arith.addf %196, %199 : vector<8x64xf32>
    %201 = arith.negf %21 : vector<8x64xf32>
    %202 = math.exp %201 : vector<8x64xf32>
    %cst_92 = arith.constant 1.000000e+00 : f32
    %203 = vector.broadcast %cst_92 : f32 to vector<8x64xf32>
    %204 = arith.addf %203, %202 : vector<8x64xf32>
    %205 = arith.divf %203, %204 : vector<8x64xf32>
    %206 = arith.mulf %21, %205 : vector<8x64xf32>
    %207 = arith.mulf %200, %206 : vector<8x64xf32>
    %c0_93 = arith.constant 0 : index
    %c0_94 = arith.constant 0 : index
    %208 = vector.load %arg13[%c0_93, %c0_94] : memref<64x32xf32, #tpu.memory_space<vmem>>, vector<64x32xf32>
    %cst_95 = arith.constant dense<0.000000e+00> : vector<8x32xf32>
    %209 = tpu.matmul %207, %208, %cst_95 {dimension_numbers = #tpu.dot_dimension_numbers<[1], [0], [0], [1], [0, 0, 1, 1], [], []>} : vector<8x64xf32>, vector<64x32xf32>, vector<8x32xf32> -> vector<8x32xf32>
    %210 = arith.addf %209, %4 : vector<8x32xf32>
    %c0_96 = arith.constant 0 : index
    %c0_97 = arith.constant 0 : index
    %c0_98 = arith.constant 0 : index
    %211 = vector.load %arg14[%c0_96, %c0_97, %c0_98] : memref<1x8x32xf32, #tpu.memory_space<vmem>>, vector<1x8x32xf32>
    %212 = vector.shape_cast %211 : vector<1x8x32xf32> to vector<8x32xf32>
    %213 = vector.shape_cast %210 : vector<8x32xf32> to vector<1x8x32xf32>
    tpu.vector_store %arg14[%c0_96, %c0_97, %c0_98], %213 {strides = array<i32>} : memref<1x8x32xf32, #tpu.memory_space<vmem>>, vector<1x8x32xf32>,
    return
  }
  func.func @transform_0(%arg0: i32, %arg1: i32) -> (i32, i32, i32) {
    %c0_i32 = arith.constant 0 : i32
    %c0_i32_0 = arith.constant 0 : i32
    return %arg0, %arg1, %c0_i32 : i32, i32, i32
  }
  func.func @transform_1(%arg0: i32, %arg1: i32) -> (i32, i32) {
    %c0_i32 = arith.constant 0 : i32
    %c0_i32_0 = arith.constant 0 : i32
    %c0_i32_1 = arith.constant 0 : i32
    return %c0_i32, %c0_i32_0 : i32, i32
  }
  func.func @transform_2(%arg0: i32, %arg1: i32) -> (i32, i32) {
    %c0_i32 = arith.constant 0 : i32
    %c0_i32_0 = arith.constant 0 : i32
    %c0_i32_1 = arith.constant 0 : i32
    return %c0_i32, %c0_i32_0 : i32, i32
  }
  func.func @transform_3(%arg0: i32, %arg1: i32) -> (i32, i32) {
    %c0_i32 = arith.constant 0 : i32
    %c0_i32_0 = arith.constant 0 : i32
    %c0_i32_1 = arith.constant 0 : i32
    return %c0_i32, %c0_i32_0 : i32, i32
  }
  func.func @transform_4(%arg0: i32, %arg1: i32) -> (i32, i32) {
    %c0_i32 = arith.constant 0 : i32
    %c0_i32_0 = arith.constant 0 : i32
    %c0_i32_1 = arith.constant 0 : i32
    return %c0_i32, %c0_i32_0 : i32, i32
  }
  func.func @transform_5(%arg0: i32, %arg1: i32) -> (i32, i32) {
    %c0_i32 = arith.constant 0 : i32
    %c0_i32_0 = arith.constant 0 : i32
    %c0_i32_1 = arith.constant 0 : i32
    return %c0_i32, %c0_i32_0 : i32, i32
  }
  func.func @transform_6(%arg0: i32, %arg1: i32) -> (i32, i32) {
    %c0_i32 = arith.constant 0 : i32
    %c0_i32_0 = arith.constant 0 : i32
    %c0_i32_1 = arith.constant 0 : i32
    return %c0_i32, %c0_i32_0 : i32, i32
  }
  func.func @transform_7(%arg0: i32, %arg1: i32) -> (i32, i32) {
    %c0_i32 = arith.constant 0 : i32
    %c0_i32_0 = arith.constant 0 : i32
    %c0_i32_1 = arith.constant 0 : i32
    return %c0_i32, %c0_i32_0 : i32, i32
  }
  func.func @transform_8(%arg0: i32, %arg1: i32) -> (i32, i32) {
    %c0_i32 = arith.constant 0 : i32
    %c0_i32_0 = arith.constant 0 : i32
    %c0_i32_1 = arith.constant 0 : i32
    return %c0_i32, %c0_i32_0 : i32, i32
  }
  func.func @transform_9(%arg0: i32, %arg1: i32) -> (i32, i32) {
    %c0_i32 = arith.constant 0 : i32
    %c0_i32_0 = arith.constant 0 : i32
    %c0_i32_1 = arith.constant 0 : i32
    return %c0_i32, %c0_i32_0 : i32, i32
  }
  func.func @transform_10(%arg0: i32, %arg1: i32) -> (i32, i32) {
    %c0_i32 = arith.constant 0 : i32
    %c0_i32_0 = arith.constant 0 : i32
    %c0_i32_1 = arith.constant 0 : i32
    return %c0_i32, %c0_i32_0 : i32, i32
  }
  func.func @transform_11(%arg0: i32, %arg1: i32) -> (i32, i32) {
    %c0_i32 = arith.constant 0 : i32
    %c0_i32_0 = arith.constant 0 : i32
    %c0_i32_1 = arith.constant 0 : i32
    return %c0_i32, %c0_i32_0 : i32, i32
  }
  func.func @transform_12(%arg0: i32, %arg1: i32) -> (i32, i32, i32) {
    %c0_i32 = arith.constant 0 : i32
    %c0_i32_0 = arith.constant 0 : i32
    return %arg0, %arg1, %c0_i32 : i32, i32, i32
  }
}

</mosaic_0001>

<llo_original>
// kernel: tpu_custom_call.1
$region0: #{tpu_custom_call.1}
  #allocation0 [shape = 'u32[]', space=smem, size = 0x4, offset = 0x4, fixed_abs, tag = 'smem constant byte address 0x4 - core index']
  #allocation1 [shape = 'u32[72,128]{1,0:T(1,128)}', space=vmem, size = 0x9000, scoped, tag = 'internal scratch']
  #allocation2 [shape = 'f32[16,64]{1,0:T(8,128)}', space=vmem, size = 0x2000, scoped, tag = 'scratch operand']
  #allocation3 [shape = 'f32[16,64]{1,0:T(8,128)}', space=vmem, size = 0x2000, scoped, tag = 'scratch operand']
  #allocation4 [shape = 'f32[8,64]{1,0:T(8,128)}', space=vmem, size = 0x1000, scoped, tag = 'scratch operand']
  #allocation5 [shape = 'f32[8,64]{1,0:T(8,128)}', space=vmem, size = 0x1000, scoped, tag = 'scratch operand']
  #allocation6 [shape = 'f32[8,16]{1,0:T(8,128)}', space=vmem, size = 0x1000, scoped, tag = 'scratch operand']
  #allocation7 [shape = 'f32[8,16]{1,0:T(8,128)}', space=vmem, size = 0x1000, scoped, tag = 'scratch operand']
  #allocation8 [shape = 'f32[8,64]{1,0:T(8,128)}', space=vmem, size = 0x1000, scoped, tag = 'scratch operand']
  #allocation9 [shape = 'f32[8,16,64]{2,1,0:T(8,128)}', space=vmem, size = 0x10000, scoped, tag = 'scratch operand']
  %s0 = inlined_call_operand.vmem [shape: f32[2,8,32], index: 0, kind: input, shape index: {}]
  %s1 = inlined_call_operand.hbm [shape: f32[1,32], index: 1, kind: input, shape index: {}]
  %s2 = inlined_call_operand.vmem [shape: f32[32,64], index: 2, kind: input, shape index: {}]
  %s3 = inlined_call_operand.vmem [shape: f32[32,64], index: 3, kind: input, shape index: {}]
  %s4 = inlined_call_operand.hbm [shape: f32[4,64], index: 4, kind: input, shape index: {}]
  %s5 = inlined_call_operand.vmem [shape: f32[1,64], index: 5, kind: input, shape index: {}]
  %s6 = inlined_call_operand.hbm [shape: f32[64,384], index: 6, kind: input, shape index: {}]
  %s7 = inlined_call_operand.vmem [shape: f32[2,64], index: 7, kind: input, shape index: {}]
  %s8 = inlined_call_operand.vmem [shape: f32[1,64], index: 8, kind: input, shape index: {}]
  %s9 = inlined_call_operand.vmem [shape: f32[16,64], index: 9, kind: input, shape index: {}]
  %s10 = inlined_call_operand.vmem [shape: f32[1,64], index: 10, kind: input, shape index: {}]
  %s11 = inlined_call_operand.vmem [shape: f32[64,32], index: 11, kind: input, shape index: {}]
  %s12 = inlined_call_operand.hbm [shape: f32[2,8,32], index: 12, kind: output, shape index: {}]
  %s13 = sld [smem:[#allocation0]]
  $region97: #{tpu_custom_call.1} parent=0
    _
  %s15 = ssub.s32 1, %s13
  %s16 = scalar_select 0, %s15, %s13
  $region1: #{tpu_custom_call.1} parent=0
    #allocation10 [shape = 'u8[512]{0}', space=vmem, size = 0x400, scoped, tag = 'input window, operand 1, single buffered']
    #allocation11 [shape = 's32[2]{0}', space=sflag, size = 0x8, scoped, tag = 'scoped memory for tpu_custom_call.1']
    #allocation12 [shape = 's32[2]{0}', space=sflag, size = 0x8, scoped, tag = 'scoped memory for tpu_custom_call.1']
    #allocation13 [shape = 'u8[2048]{0}', space=vmem, size = 0x800, scoped, tag = 'input window, operand 4, single buffered']
    #allocation14 [shape = 's32[1]{0}', space=sflag, size = 0x4, scoped, tag = 'scoped memory for tpu_custom_call.1']
    #allocation15 [shape = 'u8[98304]{0}', space=vmem, size = 0x18000, scoped, tag = 'input window, operand 6, single buffered']
    #allocation16 [shape = 'u8[8192]{0}', space=vmem, size = 0x2000, scoped, tag = 'output window, operand 0']
    %17 = vsyncpa [#allocation11], 0
    %18 = vsyncpa [#allocation14], 0
    %19 = vsyncpa [#allocation12], 0
    %s20 = scalar_lea.sflag [#allocation12], 1
    %21 = vsyncpa %s20, 0
    loop: start=0, step=1, limit=4
    $region2: #{tpu_custom_call.1} parent=1 // loop_pre_header
      _
    $region3: #{tpu_custom_call.1} parent=1 // loop_header
      %s23 = sphi 0, %s27
      %p24 = scmp.ge.s32.totalorder %s23, 4
      %s30 = sphi 0, %s42
      %s31 = sphi 0, %s38
      %s32 = sphi 0, %s30
      %s33 = sphi 0, %s31
      %s34 = sphi 0, %s32
      %s35 = sphi 0, %s33
      %s47 = sphi 0, %s49
      %s50 = sphi 0, %s47
      %s51 = sphi 0, %s50
      %s67 = sphi 0, %s51
      %s71 = sphi 0, %s71
      %s73 = sphi 0, %s71
      %s74 = sphi 0, %s73
      %s88 = sphi 0, %s74
      %s92 = sphi 0, %s92
      %s94 = sphi 0, %s92
      %s95 = sphi 0, %s94
      %s109 = sphi 0, %s95
      %s113 = sphi 0, %s113
      %s115 = sphi 0, %s113
      %s116 = sphi 0, %s115
      %s130 = sphi 0, %s116
      %s134 = sphi 0, %s134
      %s136 = sphi 0, %s134
      %s137 = sphi 0, %s136
      %s151 = sphi 0, %s137
      %s155 = sphi 0, %s155
      %s157 = sphi 0, %s155
      %s158 = sphi 0, %s157
      %s172 = sphi 0, %s158
      %s176 = sphi 0, %s176
      %s178 = sphi 0, %s176
      %s179 = sphi 0, %s178
      %s193 = sphi 0, %s179
      %s197 = sphi 0, %s197
      %s199 = sphi 0, %s197
      %s200 = sphi 0, %s199
      %s214 = sphi 0, %s200
      %s218 = sphi 0, %s218
      %s220 = sphi 0, %s218
      %s221 = sphi 0, %s220
      %s235 = sphi 0, %s221
      %s239 = sphi 0, %s239
      %s241 = sphi 0, %s239
      %s242 = sphi 0, %s241
      %s256 = sphi 0, %s242
      %s260 = sphi 0, %s260
      %s262 = sphi 0, %s260
      %s263 = sphi 0, %s262
      %s277 = sphi 0, %s263
      %s281 = sphi 0, %s281
      %s283 = sphi 0, %s281
      %s284 = sphi 0, %s283
      %s298 = sphi 0, %s284
      %s306 = sphi 0, %s308
      %s309 = sphi 0, %s306
      %s310 = sphi 0, %s309
      %s326 = sphi 0, %s310
    $region4: #{tpu_custom_call.1} parent=1 // loop_header_branch
      %26 = sbr.rel (%p24) target = $region8
    $region5: #{tpu_custom_call.1} parent=1 // loop_body
      %s28 = ssub.s32 %s23, 1
      %s29 = ssub.s32 %s23, 2
      %s36 = sadd.s32 1, %s31
      %p37 = scmp.ge.s32.totalorder %s36, 1
      %s38 = scalar_select %p37, 0, %s36
      %s39 = sadd.s32 1, %s30
      %s40 = scalar_select %p37, %s39, %s30
      %p41 = scmp.ge.s32.totalorder %s40, 2
      %s42 = scalar_select %p41, 0, %s40
      %s43 = ssub.s32 %s30, %s42
      %s44 = ssub.s32 %s31, %s38
      %s45 = sor.u32 %s43, %s44
      %p46 = scmp.eq.s32.totalorder %s45, 0
      %s48 = sadd.s32 %s47, 1
      %s49 = scalar_select %p46, %s47, %s48
      %p52 = pneg %p46
      %p53 = scmp.eq.s32.totalorder %s23, 1
      %p54 = por %p52, %p53
      %p55 = scmp.ne.s32.totalorder %s47, %s50
      %p56 = scmp.eq.s32.totalorder %s23, 0
      %p57 = por %p55, %p56
      %p58 = scmp.ne.s32.totalorder %s47, %s50
      %p59 = scmp.eq.s32.totalorder %s28, 1
      %p60 = por %p58, %p59
      %p61 = scmp.ne.s32.totalorder %s50, %s51
      %p62 = scmp.eq.s32.totalorder %s28, 0
      %p63 = por %p61, %p62
      %p64 = scmp.ne.s32.totalorder %s50, %s51
      %p65 = scmp.eq.s32.totalorder %s29, 1
      %p66 = por %p64, %p65
      %p68 = scmp.ne.s32.totalorder %s51, %s67
      %p69 = scmp.eq.s32.totalorder %s29, 0
      %p70 = por %p68, %p69
      %s72 = sadd.s32 %s71, 1
      %p75 = scmp.eq.s32.totalorder %s23, 1
      %p76 = scmp.ne.s32.totalorder %s71, %s73
      %p77 = scmp.eq.s32.totalorder %s23, 0
      %p78 = por %p76, %p77
      %p79 = scmp.ne.s32.totalorder %s71, %s73
      %p80 = scmp.eq.s32.totalorder %s28, 1
      %p81 = por %p79, %p80
      %p82 = scmp.ne.s32.totalorder %s73, %s74
      %p83 = scmp.eq.s32.totalorder %s28, 0
      %p84 = por %p82, %p83
      %p85 = scmp.ne.s32.totalorder %s73, %s74
      %p86 = scmp.eq.s32.totalorder %s29, 1
      %p87 = por %p85, %p86
      %p89 = scmp.ne.s32.totalorder %s74, %s88
      %p90 = scmp.eq.s32.totalorder %s29, 0
      %p91 = por %p89, %p90
      %s93 = sadd.s32 %s92, 1
      %p96 = scmp.eq.s32.totalorder %s23, 1
      %p97 = scmp.ne.s32.totalorder %s92, %s94
      %p98 = scmp.eq.s32.totalorder %s23, 0
      %p99 = por %p97, %p98
      %p100 = scmp.ne.s32.totalorder %s92, %s94
      %p101 = scmp.eq.s32.totalorder %s28, 1
      %p102 = por %p100, %p101
      %p103 = scmp.ne.s32.totalorder %s94, %s95
      %p104 = scmp.eq.s32.totalorder %s28, 0
      %p105 = por %p103, %p104
      %p106 = scmp.ne.s32.totalorder %s94, %s95
      %p107 = scmp.eq.s32.totalorder %s29, 1
      %p108 = por %p106, %p107
      %p110 = scmp.ne.s32.totalorder %s95, %s109
      %p111 = scmp.eq.s32.totalorder %s29, 0
      %p112 = por %p110, %p111
      %s114 = sadd.s32 %s113, 1
      %p117 = scmp.eq.s32.totalorder %s23, 1
      %p118 = scmp.ne.s32.totalorder %s113, %s115
      %p119 = scmp.eq.s32.totalorder %s23, 0
      %p120 = por %p118, %p119
      %p121 = scmp.ne.s32.totalorder %s113, %s115
      %p122 = scmp.eq.s32.totalorder %s28, 1
      %p123 = por %p121, %p122
      %p124 = scmp.ne.s32.totalorder %s115, %s116
      %p125 = scmp.eq.s32.totalorder %s28, 0
      %p126 = por %p124, %p125
      %p127 = scmp.ne.s32.totalorder %s115, %s116
      %p128 = scmp.eq.s32.totalorder %s29, 1
      %p129 = por %p127, %p128
      %p131 = scmp.ne.s32.totalorder %s116, %s130
      %p132 = scmp.eq.s32.totalorder %s29, 0
      %p133 = por %p131, %p132
      %s135 = sadd.s32 %s134, 1
      %p138 = scmp.eq.s32.totalorder %s23, 1
      %p139 = scmp.ne.s32.totalorder %s134, %s136
      %p140 = scmp.eq.s32.totalorder %s23, 0
      %p141 = por %p139, %p140
      %p142 = scmp.ne.s32.totalorder %s134, %s136
      %p143 = scmp.eq.s32.totalorder %s28, 1
      %p144 = por %p142, %p143
      %p145 = scmp.ne.s32.totalorder %s136, %s137
      %p146 = scmp.eq.s32.totalorder %s28, 0
      %p147 = por %p145, %p146
      %p148 = scmp.ne.s32.totalorder %s136, %s137
      %p149 = scmp.eq.s32.totalorder %s29, 1
      %p150 = por %p148, %p149
      %p152 = scmp.ne.s32.totalorder %s137, %s151
      %p153 = scmp.eq.s32.totalorder %s29, 0
      %p154 = por %p152, %p153
      %s156 = sadd.s32 %s155, 1
      %p159 = scmp.eq.s32.totalorder %s23, 1
      %p160 = scmp.ne.s32.totalorder %s155, %s157
      %p161 = scmp.eq.s32.totalorder %s23, 0
      %p162 = por %p160, %p161
      %p163 = scmp.ne.s32.totalorder %s155, %s157
      %p164 = scmp.eq.s32.totalorder %s28, 1
      %p165 = por %p163, %p164
      %p166 = scmp.ne.s32.totalorder %s157, %s158
      %p167 = scmp.eq.s32.totalorder %s28, 0
      %p168 = por %p166, %p167
      %p169 = scmp.ne.s32.totalorder %s157, %s158
      %p170 = scmp.eq.s32.totalorder %s29, 1
      %p171 = por %p169, %p170
      %p173 = scmp.ne.s32.totalorder %s158, %s172
      %p174 = scmp.eq.s32.totalorder %s29, 0
      %p175 = por %p173, %p174
      %s177 = sadd.s32 %s176, 1
      %p180 = scmp.eq.s32.totalorder %s23, 1
      %p181 = scmp.ne.s32.totalorder %s176, %s178
      %p182 = scmp.eq.s32.totalorder %s23, 0
      %p183 = por %p181, %p182
      %p184 = scmp.ne.s32.totalorder %s176, %s178
      %p185 = scmp.eq.s32.totalorder %s28, 1
      %p186 = por %p184, %p185
      %p187 = scmp.ne.s32.totalorder %s178, %s179
      %p188 = scmp.eq.s32.totalorder %s28, 0
      %p189 = por %p187, %p188
      %p190 = scmp.ne.s32.totalorder %s178, %s179
      %p191 = scmp.eq.s32.totalorder %s29, 1
      %p192 = por %p190, %p191
      %p194 = scmp.ne.s32.totalorder %s179, %s193
      %p195 = scmp.eq.s32.totalorder %s29, 0
      %p196 = por %p194, %p195
      %s198 = sadd.s32 %s197, 1
      %p201 = scmp.eq.s32.totalorder %s23, 1
      %p202 = scmp.ne.s32.totalorder %s197, %s199
      %p203 = scmp.eq.s32.totalorder %s23, 0
      %p204 = por %p202, %p203
      %p205 = scmp.ne.s32.totalorder %s197, %s199
      %p206 = scmp.eq.s32.totalorder %s28, 1
      %p207 = por %p205, %p206
      %p208 = scmp.ne.s32.totalorder %s199, %s200
      %p209 = scmp.eq.s32.totalorder %s28, 0
      %p210 = por %p208, %p209
      %p211 = scmp.ne.s32.totalorder %s199, %s200
      %p212 = scmp.eq.s32.totalorder %s29, 1
      %p213 = por %p211, %p212
      %p215 = scmp.ne.s32.totalorder %s200, %s214
      %p216 = scmp.eq.s32.totalorder %s29, 0
      %p217 = por %p215, %p216
      %s219 = sadd.s32 %s218, 1
      %p222 = scmp.eq.s32.totalorder %s23, 1
      %p223 = scmp.ne.s32.totalorder %s218, %s220
      %p224 = scmp.eq.s32.totalorder %s23, 0
      %p225 = por %p223, %p224
      %p226 = scmp.ne.s32.totalorder %s218, %s220
      %p227 = scmp.eq.s32.totalorder %s28, 1
      %p228 = por %p226, %p227
      %p229 = scmp.ne.s32.totalorder %s220, %s221
      %p230 = scmp.eq.s32.totalorder %s28, 0
      %p231 = por %p229, %p230
      %p232 = scmp.ne.s32.totalorder %s220, %s221
      %p233 = scmp.eq.s32.totalorder %s29, 1
      %p234 = por %p232, %p233
      %p236 = scmp.ne.s32.totalorder %s221, %s235
      %p237 = scmp.eq.s32.totalorder %s29, 0
      %p238 = por %p236, %p237
      %s240 = sadd.s32 %s239, 1
      %p243 = scmp.eq.s32.totalorder %s23, 1
      %p244 = scmp.ne.s32.totalorder %s239, %s241
      %p245 = scmp.eq.s32.totalorder %s23, 0
      %p246 = por %p244, %p245
      %p247 = scmp.ne.s32.totalorder %s239, %s241
      %p248 = scmp.eq.s32.totalorder %s28, 1
      %p249 = por %p247, %p248
      %p250 = scmp.ne.s32.totalorder %s241, %s242
      %p251 = scmp.eq.s32.totalorder %s28, 0
      %p252 = por %p250, %p251
      %p253 = scmp.ne.s32.totalorder %s241, %s242
      %p254 = scmp.eq.s32.totalorder %s29, 1
      %p255 = por %p253, %p254
      %p257 = scmp.ne.s32.totalorder %s242, %s256
      %p258 = scmp.eq.s32.totalorder %s29, 0
      %p259 = por %p257, %p258
      %s261 = sadd.s32 %s260, 1
      %p264 = scmp.eq.s32.totalorder %s23, 1
      %p265 = scmp.ne.s32.totalorder %s260, %s262
      %p266 = scmp.eq.s32.totalorder %s23, 0
      %p267 = por %p265, %p266
      %p268 = scmp.ne.s32.totalorder %s260, %s262
      %p269 = scmp.eq.s32.totalorder %s28, 1
      %p270 = por %p268, %p269
      %p271 = scmp.ne.s32.totalorder %s262, %s263
      %p272 = scmp.eq.s32.totalorder %s28, 0
      %p273 = por %p271, %p272
      %p274 = scmp.ne.s32.totalorder %s262, %s263
      %p275 = scmp.eq.s32.totalorder %s29, 1
      %p276 = por %p274, %p275
      %p278 = scmp.ne.s32.totalorder %s263, %s277
      %p279 = scmp.eq.s32.totalorder %s29, 0
      %p280 = por %p278, %p279
      %s282 = sadd.s32 %s281, 1
      %p285 = scmp.eq.s32.totalorder %s23, 1
      %p286 = scmp.ne.s32.totalorder %s281, %s283
      %p287 = scmp.eq.s32.totalorder %s23, 0
      %p288 = por %p286, %p287
      %p289 = scmp.ne.s32.totalorder %s281, %s283
      %p290 = scmp.eq.s32.totalorder %s28, 1
      %p291 = por %p289, %p290
      %p292 = scmp.ne.s32.totalorder %s283, %s284
      %p293 = scmp.eq.s32.totalorder %s28, 0
      %p294 = por %p292, %p293
      %p295 = scmp.ne.s32.totalorder %s283, %s284
      %p296 = scmp.eq.s32.totalorder %s29, 1
      %p297 = por %p295, %p296
      %p299 = scmp.ne.s32.totalorder %s284, %s298
      %p300 = scmp.eq.s32.totalorder %s29, 0
      %p301 = por %p299, %p300
      %s302 = ssub.s32 %s30, %s42
      %s303 = ssub.s32 %s31, %s38
      %s304 = sor.u32 %s302, %s303
      %p305 = scmp.eq.s32.totalorder %s304, 0
      %s307 = sadd.s32 %s306, 1
      %s308 = scalar_select %p305, %s306, %s307
      %p311 = pneg %p305
      %p312 = scmp.eq.s32.totalorder %s23, 1
      %p313 = por %p311, %p312
      %p314 = scmp.ne.s32.totalorder %s306, %s309
      %p315 = scmp.eq.s32.totalorder %s23, 0
      %p316 = por %p314, %p315
      %p317 = scmp.ne.s32.totalorder %s306, %s309
      %p318 = scmp.eq.s32.totalorder %s28, 1
      %p319 = por %p317, %p318
      %p320 = scmp.ne.s32.totalorder %s309, %s310
      %p321 = scmp.eq.s32.totalorder %s28, 0
      %p322 = por %p320, %p321
      %p323 = scmp.ne.s32.totalorder %s309, %s310
      %p324 = scmp.eq.s32.totalorder %s29, 1
      %p325 = por %p323, %p324
      %p327 = scmp.ne.s32.totalorder %s310, %s326
      %p328 = scmp.eq.s32.totalorder %s29, 0
      %p329 = por %p327, %p328
      %p330 = scmp.le.s32.totalorder 1, %s23
      %p331 = scmp.lt.s32.totalorder %s23, 3
      %p332 = pnand %p330, %p331
      %p333 = pneg %p332
      // Predicated region
      $region9: #{tpu_custom_call.1} parent=5 // pred_check
        _
      $region10: #{tpu_custom_call.1} parent=5 // pred_check_branch
        %335 = sbr.rel (%p332) target = $region12
      $region11: #{tpu_custom_call.1} parent=5 // pred_region
        %s336 = ssub.s32 %s23, 1
        // Predicated region
        $region13: #{tpu_custom_call.1} parent=11 // pred_check
          %p337 = pneg %p84
        $region14: #{tpu_custom_call.1} parent=11 // pred_check_branch
          %339 = sbr.rel (%p337) target = $region16
        $region15: #{tpu_custom_call.1} parent=11 // pred_region
          %341 = vsyncadd [#allocation11], 0
          %s343 = sshll.u32 %s1, 4
          %s344 = int_to_ptr.hbm [resolvable:$true] %s343
          %s345 = sshll.u32 [#allocation10], 4
          %s346 = int_to_ptr.vmem [resolvable:$true] %s345
          %348 = dma.hbm_to_vmem [thread:$0]  %s344, 16, %s346, [#allocation11]
        $region16: #{tpu_custom_call.1} parent=11 // pred_fallthru
          _
        // Predicated region
        $region17: #{tpu_custom_call.1} parent=11 // pred_check
          %p349 = pneg %p105
        $region18: #{tpu_custom_call.1} parent=11 // pred_check_branch
          %351 = sbr.rel (%p349) target = $region20
        $region19: #{tpu_custom_call.1} parent=11 // pred_region
          _
        $region20: #{tpu_custom_call.1} parent=11 // pred_fallthru
          _
        // Predicated region
        $region21: #{tpu_custom_call.1} parent=11 // pred_check
          %p352 = pneg %p126
        $region22: #{tpu_custom_call.1} parent=11 // pred_check_branch
          %354 = sbr.rel (%p352) target = $region24
        $region23: #{tpu_custom_call.1} parent=11 // pred_region
          _
        $region24: #{tpu_custom_call.1} parent=11 // pred_fallthru
          _
        // Predicated region
        $region25: #{tpu_custom_call.1} parent=11 // pred_check
          %p355 = pneg %p147
        $region26: #{tpu_custom_call.1} parent=11 // pred_check_branch
          %357 = sbr.rel (%p355) target = $region28
        $region27: #{tpu_custom_call.1} parent=11 // pred_region
          %359 = vsyncadd [#allocation14], 0
          %s361 = sshll.u32 %s4, 4
          %s362 = int_to_ptr.hbm [resolvable:$true] %s361
          %s363 = sshll.u32 [#allocation13], 4
          %s364 = int_to_ptr.vmem [resolvable:$true] %s363
          %366 = dma.hbm_to_vmem [thread:$0]  %s362, 64, %s364, [#allocation14]
        $region28: #{tpu_custom_call.1} parent=11 // pred_fallthru
          _
        // Predicated region
        $region29: #{tpu_custom_call.1} parent=11 // pred_check
          %p367 = pneg %p168
        $region30: #{tpu_custom_call.1} parent=11 // pred_check_branch
          %369 = sbr.rel (%p367) target = $region32
        $region31: #{tpu_custom_call.1} parent=11 // pred_region
          _
        $region32: #{tpu_custom_call.1} parent=11 // pred_fallthru
          _
        // Predicated region
        $region33: #{tpu_custom_call.1} parent=11 // pred_check
          %p370 = pneg %p189
        $region34: #{tpu_custom_call.1} parent=11 // pred_check_branch
          %372 = sbr.rel (%p370) target = $region36
        $region35: #{tpu_custom_call.1} parent=11 // pred_region
          %374 = vsyncadd [#allocation14], 0
          %s375 = sshll.u32 %s6, 4
          %s376 = int_to_ptr.hbm [resolvable:$true] %s375
          %s377 = sshll.u32 [#allocation15], 4
          %s378 = int_to_ptr.vmem [resolvable:$true] %s377
          %383 = dma.hbm_to_vmem [thread:$0]  %s376, 3072, %s378, [#allocation14], 384, 384, 24
        $region36: #{tpu_custom_call.1} parent=11 // pred_fallthru
          _
        // Predicated region
        $region37: #{tpu_custom_call.1} parent=11 // pred_check
          %p384 = pneg %p210
        $region38: #{tpu_custom_call.1} parent=11 // pred_check_branch
          %386 = sbr.rel (%p384) target = $region40
        $region39: #{tpu_custom_call.1} parent=11 // pred_region
          _
        $region40: #{tpu_custom_call.1} parent=11 // pred_fallthru
          _
        // Predicated region
        $region41: #{tpu_custom_call.1} parent=11 // pred_check
          %p387 = pneg %p231
        $region42: #{tpu_custom_call.1} parent=11 // pred_check_branch
          %389 = sbr.rel (%p387) target = $region44
        $region43: #{tpu_custom_call.1} parent=11 // pred_region
          _
        $region44: #{tpu_custom_call.1} parent=11 // pred_fallthru
          _
        // Predicated region
        $region45: #{tpu_custom_call.1} parent=11 // pred_check
          %p390 = pneg %p252
        $region46: #{tpu_custom_call.1} parent=11 // pred_check_branch
          %392 = sbr.rel (%p390) target = $region48
        $region47: #{tpu_custom_call.1} parent=11 // pred_region
          _
        $region48: #{tpu_custom_call.1} parent=11 // pred_fallthru
          _
        // Predicated region
        $region49: #{tpu_custom_call.1} parent=11 // pred_check
          %p393 = pneg %p273
        $region50: #{tpu_custom_call.1} parent=11 // pred_check_branch
          %395 = sbr.rel (%p393) target = $region52
        $region51: #{tpu_custom_call.1} parent=11 // pred_region
          _
        $region52: #{tpu_custom_call.1} parent=11 // pred_fallthru
          _
        // Predicated region
        $region53: #{tpu_custom_call.1} parent=11 // pred_check
          %p396 = pneg %p294
        $region54: #{tpu_custom_call.1} parent=11 // pred_check_branch
          %398 = sbr.rel (%p396) target = $region56
        $region55: #{tpu_custom_call.1} parent=11 // pred_region
          _
        $region56: #{tpu_custom_call.1} parent=11 // pred_fallthru
          _
      $region12: #{tpu_custom_call.1} parent=5 // pred_fallthru
        _
      %p399 = scmp.lt.s32.totalorder %s23, 2
      // Predicated region
      $region57: #{tpu_custom_call.1} parent=5 // pred_check
        %p400 = pneg %p399
      $region58: #{tpu_custom_call.1} parent=5 // pred_check_branch
        %402 = sbr.rel (%p400) target = $region60
      $region59: #{tpu_custom_call.1} parent=5 // pred_region
        // Predicated region
        $region61: #{tpu_custom_call.1} parent=59 // pred_check
          %p403 = pneg %p57
        $region62: #{tpu_custom_call.1} parent=59 // pred_check_branch
          %405 = sbr.rel (%p403) target = $region64
        $region63: #{tpu_custom_call.1} parent=59 // pred_region
          %p406 = scmp.lt.s32.totalorder %s30, 1
          %s407 = scalar_select %p406, %s30, 1
          %p408 = scmp.lt.s32.totalorder %s31, 0
          %s409 = scalar_select %p408, %s31, 0
          %s410 = sadd.s32 %s409, %s407
          %s411 = smul.addr %s410, 8
          %s412 = scalar_lea.vmem %s0, %s411
        $region64: #{tpu_custom_call.1} parent=59 // pred_fallthru
          _
      $region60: #{tpu_custom_call.1} parent=5 // pred_fallthru
        _
      %p413 = scmp.le.s32.totalorder 1, %s23
      %p414 = scmp.lt.s32.totalorder %s23, 3
      %p415 = pnand %p413, %p414
      %p416 = pneg %p415
      // Predicated region
      $region65: #{tpu_custom_call.1} parent=5 // pred_check
        _
      $region66: #{tpu_custom_call.1} parent=5 // pred_check_branch
        %418 = sbr.rel (%p415) target = $region68
      $region67: #{tpu_custom_call.1} parent=5 // pred_region
        %s419 = ssub.s32 %s23, 1
        // Predicated region
        $region69: #{tpu_custom_call.1} parent=67 // pred_check
          %p420 = pneg %p84
        $region70: #{tpu_custom_call.1} parent=67 // pred_check_branch
          %422 = sbr.rel (%p420) target = $region72
        $region71: #{tpu_custom_call.1} parent=67 // pred_region
          %424 = dma.done [#allocation11], 16
        $region72: #{tpu_custom_call.1} parent=67 // pred_fallthru
          _
        // Predicated region
        $region73: #{tpu_custom_call.1} parent=67 // pred_check
          %p425 = pneg %p147
        $region74: #{tpu_custom_call.1} parent=67 // pred_check_branch
          %427 = sbr.rel (%p425) target = $region76
        $region75: #{tpu_custom_call.1} parent=67 // pred_region
          %429 = dma.done [#allocation14], 64
        $region76: #{tpu_custom_call.1} parent=67 // pred_fallthru
          _
        // Predicated region
        $region77: #{tpu_custom_call.1} parent=67 // pred_check
          %p430 = pneg %p189
        $region78: #{tpu_custom_call.1} parent=67 // pred_check_branch
          %432 = sbr.rel (%p430) target = $region80
        $region79: #{tpu_custom_call.1} parent=67 // pred_region
          %434 = dma.done [#allocation14], 3072
        $region80: #{tpu_custom_call.1} parent=67 // pred_fallthru
          _
        %p435 = scmp.lt.s32.totalorder %s32, 1
        %s436 = scalar_select %p435, %s32, 1
        %p437 = scmp.lt.s32.totalorder %s33, 0
        %s438 = scalar_select %p437, %s33, 0
        %s439 = sadd.s32 %s438, %s436
        %s440 = smul.addr %s439, 8
        %s441 = scalar_lea.vmem %s0, %s440
        %p442 = pneg %p63
        %p443 = pneg %p60
        %p444 = pneg %p84
        %p445 = pneg %p81
        %p446 = pneg %p105
        %p447 = pneg %p102
        %p448 = pneg %p126
        %p449 = pneg %p123
        %p450 = pneg %p147
        %p451 = pneg %p144
        %p452 = pneg %p168
        %p453 = pneg %p165
        %p454 = pneg %p189
        %p455 = pneg %p186
        %p456 = pneg %p210
        %p457 = pneg %p207
        %p458 = pneg %p231
        %p459 = pneg %p228
        %p460 = pneg %p252
        %p461 = pneg %p249
        %p462 = pneg %p273
        %p463 = pneg %p270
        %p464 = pneg %p294
        %p465 = pneg %p291
        %p466 = pneg %p322
        %p467 = pneg %p319
        %s468 = sand.u32 %s309, 1
        %s469 = scalar_lea.sflag [#allocation12], %s468
        %s470 = sand.u32 %s309, 1
        %s471 = smul.addr %s470, 8
        %s472 = scalar_lea.vmem [#allocation16], %s471
        %p473 = scmp.lt.s32.totalorder %s32, 1
        %s474 = scalar_select %p473, %s32, 1
        %p475 = scmp.lt.s32.totalorder %s33, 0
        %s476 = scalar_select %p475, %s33, 0
        %s477 = sadd.s32 %s476, %s474
        %s478 = smul.addr %s477, 8
        %s479 = scalar_lea.vmem %s0, %s478
        %p480 = scmp.eq.s32.totalorder %s33, 0
        // Predicated region
        $region81: #{tpu_custom_call.1} parent=67 // pred_check
          %p481 = pneg %p480
        $region82: #{tpu_custom_call.1} parent=67 // pred_check_branch
          %483 = sbr.rel (%p481) target = $region84
        $region83: #{tpu_custom_call.1} parent=67 // pred_region
          %vm484 = vcmask 523264
          %485 = vst.msk [vmem:[#allocation2] sm:$0xff] %vm484, 0.0
          %486 = vst.msk [vmem:[#allocation2 + $0x8] sm:$0xff] %vm484, 0.0
          %487 = vst.msk [vmem:[#allocation3] sm:$0xff] %vm484, 0.0
        $region84: #{tpu_custom_call.1} parent=67 // pred_fallthru
          _
        %v488 = vld [vmem:[%s479] sm:$0xff]
        %v489 = vmul.f32 %v488, %v488
        %vm490 = vcmask 261120
        %v491 = vsel %vm490, %v489, 0.0
        %492 = vadd.xlane.f32.xlu0 %v491
        %v493 = vpop.xlane.xlu0 %492
        %v494 = vrcp.pop 32.0
        %v495 = vmul.f32 32.0, %v494
        %v496 = vsub.f32 1.0, %v495
        %v497 = vmul.f32 %v494, %v496
        %v498 = vadd.f32 %v494, %v497
        %vm499 = vweird.f32 %v494
        %v500 = vsel %vm499, %v494, %v498
        %v501 = vmul.f32 %v493, %v500
        %v502 = vadd.f32 %v501, 1e-05
        %v503 = vrsqrt.pop %v502
        %v504 = vmul.f32 %v503, %v502
        %v505 = vmul.f32 %v504, %v503
        %v506 = vmul.f32 0.5, %v505
        %v507 = vsub.f32 1.5, %v506
        %v508 = vmul.f32 %v503, %v507
        %vm509 = vweird.f32 %v502
        %vm510 = vweird.f32 %v503
        %vm511 = vmor %vm509, %vm510
        %v512 = vsel %vm511, %v503, %v508
        %v513 = vmul.f32 %v488, %v512
        %v514 = vld [vmem:[#allocation10] sm:$0x1]
        %v516 = vperm.slane %v514, 0
        %v518 = vmul.f32 %v513, %v516
        %v519 = vld [vmem:[%s2] sm:$0xff]
        %v520 = vld [vmem:[%s2 + $0x8] sm:$0xff]
        %v521 = vld [vmem:[%s2 + $0x10] sm:$0xff]
        %v522 = vld [vmem:[%s2 + $0x18] sm:$0xff]
        %v524 = vsel %vm490, %v518, 0
        %526 = vmatpush.msra.mxu0 0.0
        %527 = vmatpush.msra.mxu0 0.0
        %528 = vmatpush.msra.mxu0 0.0
        %529 = vmatpush.msra.mxu0 0.0
        %530 = vmatpush.msra.mxu0 0.0
        %531 = vmatpush.msra.mxu0 0.0
        %532 = vmatpush.msra.mxu0 0.0
        %533 = vmatpush.msra.mxu0 0.0
        %534 = vmatpush.msra.mxu0 0.0
        %535 = vmatpush.msra.mxu0 0.0
        %536 = vmatpush.msra.mxu0 0.0
        %537 = vmatpush.msra.mxu0 0.0
        %538 = vmatpush.msra.mxu0 %v522
        %539 = vmatpush.msra.mxu0 %v521
        %540 = vmatpush.msra.mxu0 %v520
        %541 = vmatpush.msra.mxu0 %v519
        %542 = vmatmul.f32.gmra.mxu0 %v524
        %v543 = vpop.f32.mrf.mxu0
        %v544 = vadd.f32 0.0, %v543
        %545 = vdwg.mxu0
        %v546 = vld [vmem:[%s3] sm:$0xff]
        %v547 = vld [vmem:[%s3 + $0x8] sm:$0xff]
        %v548 = vld [vmem:[%s3 + $0x10] sm:$0xff]
        %v549 = vld [vmem:[%s3 + $0x18] sm:$0xff]
        %550 = vmatpush.msra.mxu0 0.0
        %551 = vmatpush.msra.mxu0 0.0
        %552 = vmatpush.msra.mxu0 0.0
        %553 = vmatpush.msra.mxu0 0.0
        %554 = vmatpush.msra.mxu0 0.0
        %555 = vmatpush.msra.mxu0 0.0
        %556 = vmatpush.msra.mxu0 0.0
        %557 = vmatpush.msra.mxu0 0.0
        %558 = vmatpush.msra.mxu0 0.0
        %559 = vmatpush.msra.mxu0 0.0
        %560 = vmatpush.msra.mxu0 0.0
        %561 = vmatpush.msra.mxu0 0.0
        %562 = vmatpush.msra.mxu0 %v549
        %563 = vmatpush.msra.mxu0 %v548
        %564 = vmatpush.msra.mxu0 %v547
        %565 = vmatpush.msra.mxu0 %v546
        %566 = vmatmul.f32.gmra.mxu0 %v524
        %v567 = vpop.f32.mrf.mxu0
        %v568 = vadd.f32 0.0, %v567
        %569 = vdwg.mxu0
        %vm570 = vcmask 523264
        %571 = vst.msk [vmem:[#allocation3 + $0x8] sm:$0xff] %vm570, %v544
        %v572 = vld [vmem:[%s5] sm:$0x1]
        %v574 = vperm.slane %v572, 0
        %v576 = vld [vmem:[#allocation13] sm:$0x1]
        %v577 = vld [vmem:[#allocation3 + $0x5] sm:$0xff]
        %v578 = vperm.slane %v576, 0
        %v579 = vmul.f32 %v578, %v577
        %v580 = vadd.f32 %v574, %v579
        %v581 = vld [vmem:[#allocation13 + $0x1] sm:$0x1]
        %v582 = vld [vmem:[#allocation3 + $0x6] sm:$0xff]
        %v583 = vperm.slane %v581, 0
        %v584 = vmul.f32 %v583, %v582
        %v585 = vadd.f32 %v580, %v584
        %v586 = vld [vmem:[#allocation13 + $0x2] sm:$0x1]
        %v587 = vld [vmem:[#allocation3 + $0x7] sm:$0xff]
        %v588 = vperm.slane %v586, 0
        %v589 = vmul.f32 %v588, %v587
        %v590 = vadd.f32 %v585, %v589
        %v591 = vld [vmem:[#allocation13 + $0x3] sm:$0x1]
        %v592 = vld [vmem:[#allocation3 + $0x8] sm:$0xff]
        %v593 = vperm.slane %v591, 0
        %v594 = vmul.f32 %v593, %v592
        %v595 = vadd.f32 %v590, %v594
        %v596 = vld [vmem:[#allocation3 + $0xd] sm:$0x7]
        %vm597 = vcmask 518144
        %598 = vst.msk [vmem:[#allocation3 + $0x5] sm:$0x7] %vm597, %v596
        %v599 = vxor.u32 %v595, 2147483648
        %v600 = vmul.f32 %v599, 1.442695
        %v601 = vpow.pop %v600
        %v602 = vadd.f32 %v601, 1.0
        %v603 = vrcp.pop %v602
        %v604 = vmul.f32 %v602, %v603
        %v605 = vsub.f32 1.0, %v604
        %v606 = vmul.f32 %v603, %v605
        %v607 = vadd.f32 %v603, %v606
        %vm608 = vweird.f32 %v602
        %vm609 = vweird.f32 %v603
        %vm610 = vmor %vm608, %vm609
        %v611 = vsel %vm610, %v603, %v607
        %v612 = vand.u32 2147483647, %v602
        %vm613 = vcmp.eq.f32.partialorder %v612, 8.507059e+37
        %v614 = vand.u32 %v602, 2147483648
        %v615 = vor.u32 1.1754944e-38, %v614
        %v616 = vsel %vm613, %v615, %v611
        %v617 = vmul.f32 1.0, %v616
        %v618 = vmul.f32 %v595, %v617
        %v619 = vld [vmem:[#allocation15] sm:$0xff]
        %v620 = vld [vmem:[#allocation15 + $0x8] sm:$0xff]
        %v621 = vld [vmem:[#allocation15 + $0x10] sm:$0xff]
        %v622 = vld [vmem:[#allocation15 + $0x18] sm:$0xff]
        %v623 = vld [vmem:[#allocation15 + $0x20] sm:$0xff]
        %v624 = vld [vmem:[#allocation15 + $0x28] sm:$0xff]
        %v625 = vld [vmem:[#allocation15 + $0x30] sm:$0xff]
        %v626 = vld [vmem:[#allocation15 + $0x38] sm:$0xff]
        %v627 = vld [vmem:[#allocation15 + $0x40] sm:$0xff]
        %v628 = vld [vmem:[#allocation15 + $0x48] sm:$0xff]
        %v629 = vld [vmem:[#allocation15 + $0x50] sm:$0xff]
        %v630 = vld [vmem:[#allocation15 + $0x58] sm:$0xff]
        %v631 = vld [vmem:[#allocation15 + $0x60] sm:$0xff]
        %v632 = vld [vmem:[#allocation15 + $0x68] sm:$0xff]
        %v633 = vld [vmem:[#allocation15 + $0x70] sm:$0xff]
        %v634 = vld [vmem:[#allocation15 + $0x78] sm:$0xff]
        %v635 = vld [vmem:[#allocation15 + $0x80] sm:$0xff]
        %v636 = vld [vmem:[#allocation15 + $0x88] sm:$0xff]
        %v637 = vld [vmem:[#allocation15 + $0x90] sm:$0xff]
        %v638 = vld [vmem:[#allocation15 + $0x98] sm:$0xff]
        %v639 = vld [vmem:[#allocation15 + $0xa0] sm:$0xff]
        %v640 = vld [vmem:[#allocation15 + $0xa8] sm:$0xff]
        %v641 = vld [vmem:[#allocation15 + $0xb0] sm:$0xff]
        %v642 = vld [vmem:[#allocation15 + $0xb8] sm:$0xff]
        %v644 = vsel %vm570, %v618, 0
        %646 = vmatpush.msra.mxu0 0.0
        %647 = vmatpush.msra.mxu0 0.0
        %648 = vmatpush.msra.mxu0 0.0
        %649 = vmatpush.msra.mxu0 0.0
        %650 = vmatpush.msra.mxu0 0.0
        %651 = vmatpush.msra.mxu0 0.0
        %652 = vmatpush.msra.mxu0 0.0
        %653 = vmatpush.msra.mxu0 0.0
        %654 = vmatpush.msra.mxu0 %v640
        %655 = vmatpush.msra.mxu0 %v637
        %656 = vmatpush.msra.mxu0 %v634
        %657 = vmatpush.msra.mxu0 %v631
        %658 = vmatpush.msra.mxu0 %v628
        %659 = vmatpush.msra.mxu0 %v625
        %660 = vmatpush.msra.mxu0 %v622
        %661 = vmatpush.msra.mxu0 %v619
        %662 = vmatmul.f32.gmra.mxu0 %v644
        %v663 = vpop.f32.mrf.mxu0
        %v664 = vadd.f32 0.0, %v663
        %665 = vdwg.mxu0
        %666 = vmatpush.msra.mxu0 0.0
        %667 = vmatpush.msra.mxu0 0.0
        %668 = vmatpush.msra.mxu0 0.0
        %669 = vmatpush.msra.mxu0 0.0
        %670 = vmatpush.msra.mxu0 0.0
        %671 = vmatpush.msra.mxu0 0.0
        %672 = vmatpush.msra.mxu0 0.0
        %673 = vmatpush.msra.mxu0 0.0
        %674 = vmatpush.msra.mxu0 %v641
        %675 = vmatpush.msra.mxu0 %v638
        %676 = vmatpush.msra.mxu0 %v635
        %677 = vmatpush.msra.mxu0 %v632
        %678 = vmatpush.msra.mxu0 %v629
        %679 = vmatpush.msra.mxu0 %v626
        %680 = vmatpush.msra.mxu0 %v623
        %681 = vmatpush.msra.mxu0 %v620
        %682 = vmatmul.f32.gmra.mxu0 %v644
        %v683 = vpop.f32.mrf.mxu0
        %v684 = vadd.f32 0.0, %v683
        %685 = vdwg.mxu0
        %686 = vmatpush.msra.mxu0 0.0
        %687 = vmatpush.msra.mxu0 0.0
        %688 = vmatpush.msra.mxu0 0.0
        %689 = vmatpush.msra.mxu0 0.0
        %690 = vmatpush.msra.mxu0 0.0
        %691 = vmatpush.msra.mxu0 0.0
        %692 = vmatpush.msra.mxu0 0.0
        %693 = vmatpush.msra.mxu0 0.0
        %694 = vmatpush.msra.mxu0 %v642
        %695 = vmatpush.msra.mxu0 %v639
        %696 = vmatpush.msra.mxu0 %v636
        %697 = vmatpush.msra.mxu0 %v633
        %698 = vmatpush.msra.mxu0 %v630
        %699 = vmatpush.msra.mxu0 %v627
        %700 = vmatpush.msra.mxu0 %v624
        %701 = vmatpush.msra.mxu0 %v621
        %702 = vmatmul.f32.gmra.mxu0 %v644
        %v703 = vpop.f32.mrf.mxu0
        %v704 = vadd.f32 0.0, %v703
        %705 = vdwg.mxu0
        %v706 = vld [vmem:[%s8] sm:$0x1]
        %v708 = vperm.slane %v706, 0
        %v710 = vld [vmem:[%s7] sm:$0x1]
        %712 = vset.pattern.permute.xlu0 0
        %713 = vperm.xlu0 %712, %v664
        %v714 = vpop.permute.xlu0 %713
        %v716 = vperm.slane %v710, 0
        %v717 = vmul.f32 %v714, %v716
        %v718 = vadd.f32 %v708, %v717
        %v719 = vld [vmem:[%s7 + $0x1] sm:$0x1]
        %720 = vset.pattern.permute.xlu0 1
        %721 = vperm.xlu0 %720, %v664
        %v722 = vpop.permute.xlu0 %721
        %v724 = vperm.slane %v719, 0
        %v725 = vmul.f32 %v722, %v724
        %v726 = vadd.f32 %v718, %v725
        %v727 = vmax.f32 %v726, 0.0
        %vm728 = vcmp.ne.f32.partialorder %v726, %v726
        %v729 = vadd.f32 %v726, 0.0
        %v730 = vand.u32 2147483647, %v726
        %v731 = vsub.f32 0.0, %v730
        %v732 = vmul.f32 %v731, 1.442695
        %v733 = vpow.pop %v732
        %v734 = vadd.f32 %v733, 1.0
        %v735 = vlog2.pop %v734
        %v736 = vmul.f32 %v735, 0.6931472
        %v737 = vmul.f32 -0.5, %v733
        %v738 = vadd.f32 %v737, 1.0
        %v739 = vmul.f32 %v738, %v733
        %v740 = vand.u32 2147483647, %v733
        %vm741 = vcmp.lt.f32.partialorder %v740, 0.0004427343
        %v742 = vsel %vm741, %v739, %v736
        %v743 = vadd.f32 %v727, %v742
        %v744 = vsel %vm728, %v729, %v743
        %745 = vst.msk [vmem:[#allocation4] sm:$0xff] %vm570, %v744
        %v746 = vmul.f32 %v744, %v618
        %747 = vst.msk [vmem:[#allocation5] sm:$0xff] %vm570, %v746
        %vm748 = vcmask 130048
        %749 = vst.msk [vmem:[#allocation6] sm:$0xff] %vm748, %v684
        %750 = vst.msk [vmem:[#allocation7] sm:$0xff] %vm748, %v704
        %v751 = vld [vmem:[%s9] sm:$0xff]
        %v752 = vld [vmem:[%s9 + $0x8] sm:$0xff]
        %v753 = vld [vmem:[#allocation2] sm:$0xff]
        %v754 = vld [vmem:[#allocation2 + $0x8] sm:$0xff]
        %v755 = vld [vmem:[#allocation4] sm:$0xff]
        %v756 = vld [vmem:[#allocation5] sm:$0xff]
        %v757 = vld [vmem:[#allocation6] sm:$0xff]
        %v758 = vld [vmem:[#allocation7] sm:$0xff]
        %v760 = vrot.slane %v755, 1
        %v761 = vrot.slane %v755, 2
        %v762 = vrot.slane %v755, 3
        %v763 = vrot.slane %v755, 4
        %v764 = vrot.slane %v755, 5
        %v765 = vrot.slane %v755, 6
        %v766 = vrot.slane %v755, 7
        %v767 = vperm.slane %v755, 0
        %v768 = vperm.slane %v760, 0
        %v769 = vperm.slane %v761, 0
        %v770 = vperm.slane %v762, 0
        %v771 = vperm.slane %v763, 0
        %v772 = vperm.slane %v764, 0
        %v773 = vperm.slane %v765, 0
        %v774 = vperm.slane %v766, 0
        %v783 = vmul.f32 %v767, %v751
        %v784 = vmul.f32 %v767, %v752
        %v785 = vmul.f32 %v768, %v751
        %v786 = vmul.f32 %v768, %v752
        %v787 = vmul.f32 %v769, %v751
        %v788 = vmul.f32 %v769, %v752
        %v789 = vmul.f32 %v770, %v751
        %v790 = vmul.f32 %v770, %v752
        %v791 = vmul.f32 %v771, %v751
        %v792 = vmul.f32 %v771, %v752
        %v793 = vmul.f32 %v772, %v751
        %v794 = vmul.f32 %v772, %v752
        %v795 = vmul.f32 %v773, %v751
        %v796 = vmul.f32 %v773, %v752
        %v797 = vmul.f32 %v774, %v751
        %v798 = vmul.f32 %v774, %v752
        %v799 = vmul.f32 %v783, 1.442695
        %v800 = vpow.pop %v799
        %v801 = vmul.f32 %v784, 1.442695
        %v802 = vpow.pop %v801
        %v803 = vmul.f32 %v785, 1.442695
        %v804 = vpow.pop %v803
        %v805 = vmul.f32 %v786, 1.442695
        %v806 = vpow.pop %v805
        %v807 = vmul.f32 %v787, 1.442695
        %v808 = vpow.pop %v807
        %v809 = vmul.f32 %v788, 1.442695
        %v810 = vpow.pop %v809
        %v811 = vmul.f32 %v789, 1.442695
        %v812 = vpow.pop %v811
        %v813 = vmul.f32 %v790, 1.442695
        %v814 = vpow.pop %v813
        %v815 = vmul.f32 %v791, 1.442695
        %v816 = vpow.pop %v815
        %v817 = vmul.f32 %v792, 1.442695
        %v818 = vpow.pop %v817
        %v819 = vmul.f32 %v793, 1.442695
        %v820 = vpow.pop %v819
        %v821 = vmul.f32 %v794, 1.442695
        %v822 = vpow.pop %v821
        %v823 = vmul.f32 %v795, 1.442695
        %v824 = vpow.pop %v823
        %v825 = vmul.f32 %v796, 1.442695
        %v826 = vpow.pop %v825
        %v827 = vmul.f32 %v797, 1.442695
        %v828 = vpow.pop %v827
        %v829 = vmul.f32 %v798, 1.442695
        %v830 = vpow.pop %v829
        %v832 = vrot.slane %v756, 1
        %v833 = vrot.slane %v756, 2
        %v834 = vrot.slane %v756, 3
        %v835 = vrot.slane %v756, 4
        %v836 = vrot.slane %v756, 5
        %v837 = vrot.slane %v756, 6
        %v838 = vrot.slane %v756, 7
        %v839 = vperm.slane %v757, 0
        %v840 = vlaneseq
        %v841 = vshrl.u32 %v840, 7
        %843 = vset.pattern.permute.xlu0 %v841
        %844 = vperm.xlu0 %843, %v839
        %v845 = vpop.permute.xlu0 %844
        %v846 = vlaneseq
        %v847 = vshrl.u32 %v846, 7
        %v848 = vadd.s32 %v847, 8
        %849 = vset.pattern.permute.xlu0 %v848
        %850 = vperm.xlu0 %849, %v839
        %v851 = vpop.permute.xlu0 %850
        %v852 = vperm.slane %v757, 1
        %v853 = vlaneseq
        %v854 = vshrl.u32 %v853, 7
        %856 = vset.pattern.permute.xlu0 %v854
        %857 = vperm.xlu0 %856, %v852
        %v858 = vpop.permute.xlu0 %857
        %v859 = vlaneseq
        %v860 = vshrl.u32 %v859, 7
        %v861 = vadd.s32 %v860, 8
        %862 = vset.pattern.permute.xlu0 %v861
        %863 = vperm.xlu0 %862, %v852
        %v864 = vpop.permute.xlu0 %863
        %v865 = vperm.slane %v757, 2
        %v866 = vlaneseq
        %v867 = vshrl.u32 %v866, 7
        %869 = vset.pattern.permute.xlu0 %v867
        %870 = vperm.xlu0 %869, %v865
        %v871 = vpop.permute.xlu0 %870
        %v872 = vlaneseq
        %v873 = vshrl.u32 %v872, 7
        %v874 = vadd.s32 %v873, 8
        %875 = vset.pattern.permute.xlu0 %v874
        %876 = vperm.xlu0 %875, %v865
        %v877 = vpop.permute.xlu0 %876
        %v878 = vperm.slane %v757, 3
        %v879 = vlaneseq
        %v880 = vshrl.u32 %v879, 7
        %882 = vset.pattern.permute.xlu0 %v880
        %883 = vperm.xlu0 %882, %v878
        %v884 = vpop.permute.xlu0 %883
        %v885 = vlaneseq
        %v886 = vshrl.u32 %v885, 7
        %v887 = vadd.s32 %v886, 8
        %888 = vset.pattern.permute.xlu0 %v887
        %889 = vperm.xlu0 %888, %v878
        %v890 = vpop.permute.xlu0 %889
        %v891 = vperm.slane %v757, 4
        %v892 = vlaneseq
        %v893 = vshrl.u32 %v892, 7
        %895 = vset.pattern.permute.xlu0 %v893
        %896 = vperm.xlu0 %895, %v891
        %v897 = vpop.permute.xlu0 %896
        %v898 = vlaneseq
        %v899 = vshrl.u32 %v898, 7
        %v900 = vadd.s32 %v899, 8
        %901 = vset.pattern.permute.xlu0 %v900
        %902 = vperm.xlu0 %901, %v891
        %v903 = vpop.permute.xlu0 %902
        %v904 = vperm.slane %v757, 5
        %v905 = vlaneseq
        %v906 = vshrl.u32 %v905, 7
        %908 = vset.pattern.permute.xlu0 %v906
        %909 = vperm.xlu0 %908, %v904
        %v910 = vpop.permute.xlu0 %909
        %v911 = vlaneseq
        %v912 = vshrl.u32 %v911, 7
        %v913 = vadd.s32 %v912, 8
        %914 = vset.pattern.permute.xlu0 %v913
        %915 = vperm.xlu0 %914, %v904
        %v916 = vpop.permute.xlu0 %915
        %v917 = vperm.slane %v757, 6
        %v918 = vlaneseq
        %v919 = vshrl.u32 %v918, 7
        %921 = vset.pattern.permute.xlu0 %v919
        %922 = vperm.xlu0 %921, %v917
        %v923 = vpop.permute.xlu0 %922
        %v924 = vlaneseq
        %v925 = vshrl.u32 %v924, 7
        %v926 = vadd.s32 %v925, 8
        %927 = vset.pattern.permute.xlu0 %v926
        %928 = vperm.xlu0 %927, %v917
        %v929 = vpop.permute.xlu0 %928
        %v930 = vperm.slane %v757, 7
        %v931 = vlaneseq
        %v932 = vshrl.u32 %v931, 7
        %934 = vset.pattern.permute.xlu0 %v932
        %935 = vperm.xlu0 %934, %v930
        %v936 = vpop.permute.xlu0 %935
        %v937 = vlaneseq
        %v938 = vshrl.u32 %v937, 7
        %v939 = vadd.s32 %v938, 8
        %940 = vset.pattern.permute.xlu0 %v939
        %941 = vperm.xlu0 %940, %v930
        %v942 = vpop.permute.xlu0 %941
        %v943 = vperm.slane %v756, 0
        %v944 = vperm.slane %v832, 0
        %v945 = vperm.slane %v833, 0
        %v946 = vperm.slane %v834, 0
        %v947 = vperm.slane %v835, 0
        %v948 = vperm.slane %v836, 0
        %v949 = vperm.slane %v837, 0
        %v950 = vperm.slane %v838, 0
        %v959 = vmul.f32 %v943, %v845
        %v960 = vmul.f32 %v943, %v851
        %v961 = vmul.f32 %v944, %v858
        %v962 = vmul.f32 %v944, %v864
        %v963 = vmul.f32 %v945, %v871
        %v964 = vmul.f32 %v945, %v877
        %v965 = vmul.f32 %v946, %v884
        %v966 = vmul.f32 %v946, %v890
        %v967 = vmul.f32 %v947, %v897
        %v968 = vmul.f32 %v947, %v903
        %v969 = vmul.f32 %v948, %v910
        %v970 = vmul.f32 %v948, %v916
        %v971 = vmul.f32 %v949, %v923
        %v972 = vmul.f32 %v949, %v929
        %v973 = vmul.f32 %v950, %v936
        %v974 = vmul.f32 %v950, %v942
        %v975 = vmul.f32 %v800, %v753
        %v976 = vmul.f32 %v802, %v754
        %v977 = vadd.f32 %v975, %v959
        %v978 = vadd.f32 %v976, %v960
        %979 = vst.msk [vmem:[#allocation9] sm:$0xff] %vm570, %v977
        %980 = vst.msk [vmem:[#allocation9 + $0x8] sm:$0xff] %vm570, %v978
        %v981 = vmul.f32 %v804, %v977
        %v982 = vmul.f32 %v806, %v978
        %v983 = vadd.f32 %v981, %v961
        %v984 = vadd.f32 %v982, %v962
        %s985 = scalar_lea.vmem [#allocation9], 16
        %986 = vst.msk [vmem:[%s985] sm:$0xff] %vm570, %v983
        %987 = vst.msk [vmem:[%s985 + $0x8] sm:$0xff] %vm570, %v984
        %v988 = vmul.f32 %v808, %v983
        %v989 = vmul.f32 %v810, %v984
        %v990 = vadd.f32 %v988, %v963
        %v991 = vadd.f32 %v989, %v964
        %s992 = scalar_lea.vmem [#allocation9], 32
        %993 = vst.msk [vmem:[%s992] sm:$0xff] %vm570, %v990
        %994 = vst.msk [vmem:[%s992 + $0x8] sm:$0xff] %vm570, %v991
        %v995 = vmul.f32 %v812, %v990
        %v996 = vmul.f32 %v814, %v991
        %v997 = vadd.f32 %v995, %v965
        %v998 = vadd.f32 %v996, %v966
        %s999 = scalar_lea.vmem [#allocation9], 48
        %1000 = vst.msk [vmem:[%s999] sm:$0xff] %vm570, %v997
        %1001 = vst.msk [vmem:[%s999 + $0x8] sm:$0xff] %vm570, %v998
        %v1002 = vmul.f32 %v816, %v997
        %v1003 = vmul.f32 %v818, %v998
        %v1004 = vadd.f32 %v1002, %v967
        %v1005 = vadd.f32 %v1003, %v968
        %s1006 = scalar_lea.vmem [#allocation9], 64
        %1007 = vst.msk [vmem:[%s1006] sm:$0xff] %vm570, %v1004
        %1008 = vst.msk [vmem:[%s1006 + $0x8] sm:$0xff] %vm570, %v1005
        %v1009 = vmul.f32 %v820, %v1004
        %v1010 = vmul.f32 %v822, %v1005
        %v1011 = vadd.f32 %v1009, %v969
        %v1012 = vadd.f32 %v1010, %v970
        %s1013 = scalar_lea.vmem [#allocation9], 80
        %1014 = vst.msk [vmem:[%s1013] sm:$0xff] %vm570, %v1011
        %1015 = vst.msk [vmem:[%s1013 + $0x8] sm:$0xff] %vm570, %v1012
        %v1016 = vmul.f32 %v824, %v1011
        %v1017 = vmul.f32 %v826, %v1012
        %v1018 = vadd.f32 %v1016, %v971
        %v1019 = vadd.f32 %v1017, %v972
        %s1020 = scalar_lea.vmem [#allocation9], 96
        %1021 = vst.msk [vmem:[%s1020] sm:$0xff] %vm570, %v1018
        %1022 = vst.msk [vmem:[%s1020 + $0x8] sm:$0xff] %vm570, %v1019
        %v1023 = vmul.f32 %v828, %v1018
        %v1024 = vmul.f32 %v830, %v1019
        %v1025 = vadd.f32 %v1023, %v973
        %v1026 = vadd.f32 %v1024, %v974
        %s1027 = scalar_lea.vmem [#allocation9], 112
        %1028 = vst.msk [vmem:[%s1027] sm:$0xff] %vm570, %v1025
        %1029 = vst.msk [vmem:[%s1027 + $0x8] sm:$0xff] %vm570, %v1026
        %v1030 = vld [vmem:[#allocation9] sm:$0xff]
        %v1031 = vld [vmem:[#allocation9 + $0x8] sm:$0xff]
        %v1032 = vld [vmem:[#allocation9 + $0x10] sm:$0xff]
        %v1033 = vld [vmem:[#allocation9 + $0x18] sm:$0xff]
        %v1034 = vld [vmem:[#allocation9 + $0x20] sm:$0xff]
        %v1035 = vld [vmem:[#allocation9 + $0x28] sm:$0xff]
        %v1036 = vld [vmem:[#allocation9 + $0x30] sm:$0xff]
        %v1037 = vld [vmem:[#allocation9 + $0x38] sm:$0xff]
        %v1038 = vld [vmem:[#allocation9 + $0x40] sm:$0xff]
        %v1039 = vld [vmem:[#allocation9 + $0x48] sm:$0xff]
        %v1040 = vld [vmem:[#allocation9 + $0x50] sm:$0xff]
        %v1041 = vld [vmem:[#allocation9 + $0x58] sm:$0xff]
        %v1042 = vld [vmem:[#allocation9 + $0x60] sm:$0xff]
        %v1043 = vld [vmem:[#allocation9 + $0x68] sm:$0xff]
        %v1044 = vld [vmem:[#allocation9 + $0x70] sm:$0xff]
        %v1045 = vld [vmem:[#allocation9 + $0x78] sm:$0xff]
        %v1046 = vperm.slane %v758, 0
        %v1047 = vlaneseq
        %v1048 = vshrl.u32 %v1047, 7
        %1050 = vset.pattern.permute.xlu0 %v1048
        %1051 = vperm.xlu0 %1050, %v1046
        %v1052 = vpop.permute.xlu0 %1051
        %v1053 = vlaneseq
        %v1054 = vshrl.u32 %v1053, 7
        %v1055 = vadd.s32 %v1054, 8
        %1056 = vset.pattern.permute.xlu0 %v1055
        %1057 = vperm.xlu0 %1056, %v1046
        %v1058 = vpop.permute.xlu0 %1057
        %v1059 = vperm.slane %v758, 1
        %v1060 = vlaneseq
        %v1061 = vshrl.u32 %v1060, 7
        %1063 = vset.pattern.permute.xlu0 %v1061
        %1064 = vperm.xlu0 %1063, %v1059
        %v1065 = vpop.permute.xlu0 %1064
        %v1066 = vlaneseq
        %v1067 = vshrl.u32 %v1066, 7
        %v1068 = vadd.s32 %v1067, 8
        %1069 = vset.pattern.permute.xlu0 %v1068
        %1070 = vperm.xlu0 %1069, %v1059
        %v1071 = vpop.permute.xlu0 %1070
        %v1072 = vperm.slane %v758, 2
        %v1073 = vlaneseq
        %v1074 = vshrl.u32 %v1073, 7
        %1076 = vset.pattern.permute.xlu0 %v1074
        %1077 = vperm.xlu0 %1076, %v1072
        %v1078 = vpop.permute.xlu0 %1077
        %v1079 = vlaneseq
        %v1080 = vshrl.u32 %v1079, 7
        %v1081 = vadd.s32 %v1080, 8
        %1082 = vset.pattern.permute.xlu0 %v1081
        %1083 = vperm.xlu0 %1082, %v1072
        %v1084 = vpop.permute.xlu0 %1083
        %v1085 = vperm.slane %v758, 3
        %v1086 = vlaneseq
        %v1087 = vshrl.u32 %v1086, 7
        %1089 = vset.pattern.permute.xlu0 %v1087
        %1090 = vperm.xlu0 %1089, %v1085
        %v1091 = vpop.permute.xlu0 %1090
        %v1092 = vlaneseq
        %v1093 = vshrl.u32 %v1092, 7
        %v1094 = vadd.s32 %v1093, 8
        %1095 = vset.pattern.permute.xlu0 %v1094
        %1096 = vperm.xlu0 %1095, %v1085
        %v1097 = vpop.permute.xlu0 %1096
        %v1098 = vperm.slane %v758, 4
        %v1099 = vlaneseq
        %v1100 = vshrl.u32 %v1099, 7
        %1102 = vset.pattern.permute.xlu0 %v1100
        %1103 = vperm.xlu0 %1102, %v1098
        %v1104 = vpop.permute.xlu0 %1103
        %v1105 = vlaneseq
        %v1106 = vshrl.u32 %v1105, 7
        %v1107 = vadd.s32 %v1106, 8
        %1108 = vset.pattern.permute.xlu0 %v1107
        %1109 = vperm.xlu0 %1108, %v1098
        %v1110 = vpop.permute.xlu0 %1109
        %v1111 = vperm.slane %v758, 5
        %v1112 = vlaneseq
        %v1113 = vshrl.u32 %v1112, 7
        %1115 = vset.pattern.permute.xlu0 %v1113
        %1116 = vperm.xlu0 %1115, %v1111
        %v1117 = vpop.permute.xlu0 %1116
        %v1118 = vlaneseq
        %v1119 = vshrl.u32 %v1118, 7
        %v1120 = vadd.s32 %v1119, 8
        %1121 = vset.pattern.permute.xlu0 %v1120
        %1122 = vperm.xlu0 %1121, %v1111
        %v1123 = vpop.permute.xlu0 %1122
        %v1124 = vperm.slane %v758, 6
        %v1125 = vlaneseq
        %v1126 = vshrl.u32 %v1125, 7
        %1128 = vset.pattern.permute.xlu0 %v1126
        %1129 = vperm.xlu0 %1128, %v1124
        %v1130 = vpop.permute.xlu0 %1129
        %v1131 = vlaneseq
        %v1132 = vshrl.u32 %v1131, 7
        %v1133 = vadd.s32 %v1132, 8
        %1134 = vset.pattern.permute.xlu0 %v1133
        %1135 = vperm.xlu0 %1134, %v1124
        %v1136 = vpop.permute.xlu0 %1135
        %v1137 = vperm.slane %v758, 7
        %v1138 = vlaneseq
        %v1139 = vshrl.u32 %v1138, 7
        %1141 = vset.pattern.permute.xlu0 %v1139
        %1142 = vperm.xlu0 %1141, %v1137
        %v1143 = vpop.permute.xlu0 %1142
        %v1144 = vlaneseq
        %v1145 = vshrl.u32 %v1144, 7
        %v1146 = vadd.s32 %v1145, 8
        %1147 = vset.pattern.permute.xlu0 %v1146
        %1148 = vperm.xlu0 %1147, %v1137
        %v1149 = vpop.permute.xlu0 %1148
        %v1150 = vmul.f32 %v1030, %v1052
        %v1151 = vmul.f32 %v1031, %v1058
        %v1152 = vmul.f32 %v1032, %v1065
        %v1153 = vmul.f32 %v1033, %v1071
        %v1154 = vmul.f32 %v1034, %v1078
        %v1155 = vmul.f32 %v1035, %v1084
        %v1156 = vmul.f32 %v1036, %v1091
        %v1157 = vmul.f32 %v1037, %v1097
        %v1158 = vmul.f32 %v1038, %v1104
        %v1159 = vmul.f32 %v1039, %v1110
        %v1160 = vmul.f32 %v1040, %v1117
        %v1161 = vmul.f32 %v1041, %v1123
        %v1162 = vmul.f32 %v1042, %v1130
        %v1163 = vmul.f32 %v1043, %v1136
        %v1164 = vmul.f32 %v1044, %v1143
        %v1165 = vmul.f32 %v1045, %v1149
        %v1166 = vsel %vm570, %v1150, 0.0
        %v1167 = vsel %vm570, %v1151, 0.0
        %v1168 = vadd.f32 %v1166, %v1167
        %v1169 = vrot.slane %v1168, 4
        %v1170 = vadd.f32 %v1168, %v1169
        %v1171 = vrot.slane %v1170, 2
        %v1172 = vadd.f32 %v1170, %v1171
        %v1173 = vrot.slane %v1172, 1
        %v1174 = vadd.f32 %v1172, %v1173
        %v1175 = vsel %vm570, %v1152, 0.0
        %v1176 = vsel %vm570, %v1153, 0.0
        %v1177 = vadd.f32 %v1175, %v1176
        %v1178 = vrot.slane %v1177, 4
        %v1179 = vadd.f32 %v1177, %v1178
        %v1180 = vrot.slane %v1179, 2
        %v1181 = vadd.f32 %v1179, %v1180
        %v1182 = vrot.slane %v1181, 1
        %v1183 = vadd.f32 %v1181, %v1182
        %v1184 = vsel %vm570, %v1154, 0.0
        %v1185 = vsel %vm570, %v1155, 0.0
        %v1186 = vadd.f32 %v1184, %v1185
        %v1187 = vrot.slane %v1186, 4
        %v1188 = vadd.f32 %v1186, %v1187
        %v1189 = vrot.slane %v1188, 2
        %v1190 = vadd.f32 %v1188, %v1189
        %v1191 = vrot.slane %v1190, 1
        %v1192 = vadd.f32 %v1190, %v1191
        %v1193 = vsel %vm570, %v1156, 0.0
        %v1194 = vsel %vm570, %v1157, 0.0
        %v1195 = vadd.f32 %v1193, %v1194
        %v1196 = vrot.slane %v1195, 4
        %v1197 = vadd.f32 %v1195, %v1196
        %v1198 = vrot.slane %v1197, 2
        %v1199 = vadd.f32 %v1197, %v1198
        %v1200 = vrot.slane %v1199, 1
        %v1201 = vadd.f32 %v1199, %v1200
        %v1202 = vsel %vm570, %v1158, 0.0
        %v1203 = vsel %vm570, %v1159, 0.0
        %v1204 = vadd.f32 %v1202, %v1203
        %v1205 = vrot.slane %v1204, 4
        %v1206 = vadd.f32 %v1204, %v1205
        %v1207 = vrot.slane %v1206, 2
        %v1208 = vadd.f32 %v1206, %v1207
        %v1209 = vrot.slane %v1208, 1
        %v1210 = vadd.f32 %v1208, %v1209
        %v1211 = vsel %vm570, %v1160, 0.0
        %v1212 = vsel %vm570, %v1161, 0.0
        %v1213 = vadd.f32 %v1211, %v1212
        %v1214 = vrot.slane %v1213, 4
        %v1215 = vadd.f32 %v1213, %v1214
        %v1216 = vrot.slane %v1215, 2
        %v1217 = vadd.f32 %v1215, %v1216
        %v1218 = vrot.slane %v1217, 1
        %v1219 = vadd.f32 %v1217, %v1218
        %v1220 = vsel %vm570, %v1162, 0.0
        %v1221 = vsel %vm570, %v1163, 0.0
        %v1222 = vadd.f32 %v1220, %v1221
        %v1223 = vrot.slane %v1222, 4
        %v1224 = vadd.f32 %v1222, %v1223
        %v1225 = vrot.slane %v1224, 2
        %v1226 = vadd.f32 %v1224, %v1225
        %v1227 = vrot.slane %v1226, 1
        %v1228 = vadd.f32 %v1226, %v1227
        %v1229 = vsel %vm570, %v1164, 0.0
        %v1230 = vsel %vm570, %v1165, 0.0
        %v1231 = vadd.f32 %v1229, %v1230
        %v1232 = vrot.slane %v1231, 4
        %v1233 = vadd.f32 %v1231, %v1232
        %v1234 = vrot.slane %v1233, 2
        %v1235 = vadd.f32 %v1233, %v1234
        %v1236 = vrot.slane %v1235, 1
        %v1237 = vadd.f32 %v1235, %v1236
        %vm1246 = vcmask 1041409
        %v1247 = vsel %vm1246, %v1183, %v1174
        %vm1248 = vcmask 1042434
        %v1249 = vsel %vm1248, %v1192, %v1247
        %vm1250 = vcmask 1043459
        %v1251 = vsel %vm1250, %v1201, %v1249
        %vm1252 = vcmask 1044484
        %v1253 = vsel %vm1252, %v1210, %v1251
        %vm1254 = vcmask 1045509
        %v1255 = vsel %vm1254, %v1219, %v1253
        %vm1256 = vcmask 1046534
        %v1257 = vsel %vm1256, %v1228, %v1255
        %vm1258 = vcmask 1047559
        %v1259 = vsel %vm1258, %v1237, %v1257
        %1261 = vst.msk [vmem:[#allocation8] sm:$0xff] %vm570, %v1259
        %1262 = vst.msk [vmem:[#allocation2] sm:$0xff] %vm570, %v1025
        %1263 = vst.msk [vmem:[#allocation2 + $0x8] sm:$0xff] %vm570, %v1026
        %v1264 = vld [vmem:[#allocation8] sm:$0xff]
        %v1265 = vld [vmem:[%s10] sm:$0x1]
        %v1267 = vperm.slane %v1265, 0
        %v1269 = vmul.f32 %v1267, %v618
        %v1270 = vadd.f32 %v1264, %v1269
        %v1271 = vxor.u32 %v568, 2147483648
        %v1272 = vmul.f32 %v1271, 1.442695
        %v1273 = vpow.pop %v1272
        %v1274 = vadd.f32 %v1273, 1.0
        %v1275 = vrcp.pop %v1274
        %v1276 = vmul.f32 %v1274, %v1275
        %v1277 = vsub.f32 1.0, %v1276
        %v1278 = vmul.f32 %v1275, %v1277
        %v1279 = vadd.f32 %v1275, %v1278
        %vm1280 = vweird.f32 %v1274
        %vm1281 = vweird.f32 %v1275
        %vm1282 = vmor %vm1280, %vm1281
        %v1283 = vsel %vm1282, %v1275, %v1279
        %v1284 = vand.u32 2147483647, %v1274
        %vm1285 = vcmp.eq.f32.partialorder %v1284, 8.507059e+37
        %v1286 = vand.u32 %v1274, 2147483648
        %v1287 = vor.u32 1.1754944e-38, %v1286
        %v1288 = vsel %vm1285, %v1287, %v1283
        %v1289 = vmul.f32 1.0, %v1288
        %v1290 = vmul.f32 %v568, %v1289
        %v1291 = vmul.f32 %v1270, %v1290
        %v1292 = vld [vmem:[%s11] sm:$0xff]
        %v1293 = vld [vmem:[%s11 + $0x8] sm:$0xff]
        %v1294 = vld [vmem:[%s11 + $0x10] sm:$0xff]
        %v1295 = vld [vmem:[%s11 + $0x18] sm:$0xff]
        %v1296 = vld [vmem:[%s11 + $0x20] sm:$0xff]
        %v1297 = vld [vmem:[%s11 + $0x28] sm:$0xff]
        %v1298 = vld [vmem:[%s11 + $0x30] sm:$0xff]
        %v1299 = vld [vmem:[%s11 + $0x38] sm:$0xff]
        %v1301 = vsel %vm570, %v1291, 0
        %1303 = vmatpush.msra.mxu0 0.0
        %1304 = vmatpush.msra.mxu0 0.0
        %1305 = vmatpush.msra.mxu0 0.0
        %1306 = vmatpush.msra.mxu0 0.0
        %1307 = vmatpush.msra.mxu0 0.0
        %1308 = vmatpush.msra.mxu0 0.0
        %1309 = vmatpush.msra.mxu0 0.0
        %1310 = vmatpush.msra.mxu0 0.0
        %1311 = vmatpush.msra.mxu0 %v1299
        %1312 = vmatpush.msra.mxu0 %v1298
        %1313 = vmatpush.msra.mxu0 %v1297
        %1314 = vmatpush.msra.mxu0 %v1296
        %1315 = vmatpush.msra.mxu0 %v1295
        %1316 = vmatpush.msra.mxu0 %v1294
        %1317 = vmatpush.msra.mxu0 %v1293
        %1318 = vmatpush.msra.mxu0 %v1292
        %1319 = vmatmul.f32.gmra.mxu0 %v1301
        %v1320 = vpop.f32.mrf.mxu0
        %v1321 = vadd.f32 %v488, %v1320
        %1322 = vdwg.mxu0
        %1323 = vst.msk [vmem:[%s472] sm:$0xff] %vm490, %v1321
        %s1324 = sand.u32 %s309, 1
        %s1325 = scalar_lea.sflag [#allocation12], %s1324
        %s1326 = sand.u32 %s309, 1
        %s1327 = smul.addr %s1326, 8
        %s1328 = scalar_lea.vmem [#allocation16], %s1327
        // Predicated region
        $region85: #{tpu_custom_call.1} parent=67 // pred_check
          %p1329 = pneg %p319
        $region86: #{tpu_custom_call.1} parent=67 // pred_check_branch
          %1331 = sbr.rel (%p1329) target = $region88
        $region87: #{tpu_custom_call.1} parent=67 // pred_region
          %1333 = vsyncadd %s1325, 0
          %s1334 = sadd.s32 %s33, %s32
          %s1335 = smul.addr %s1334, 8
          %s1336 = scalar_lea.hbm %s12, %s1335
          %s1338 = sshll.u32 %s1328, 4
          %s1339 = int_to_ptr.vmem [resolvable:$true] %s1338
          %s1340 = sshll.u32 %s1336, 4
          %s1341 = int_to_ptr.hbm [resolvable:$true] %s1340
          %1343 = dma.vmem_to_hbm [thread:$0]  %s1339, 128, %s1341, %s1325
        $region88: #{tpu_custom_call.1} parent=67 // pred_fallthru
          _
      $region68: #{tpu_custom_call.1} parent=5 // pred_fallthru
        _
      %p1344 = scmp.le.s32.totalorder 2, %s23
      // Predicated region
      $region89: #{tpu_custom_call.1} parent=5 // pred_check
        %p1345 = pneg %p1344
      $region90: #{tpu_custom_call.1} parent=5 // pred_check_branch
        %1347 = sbr.rel (%p1345) target = $region92
      $region91: #{tpu_custom_call.1} parent=5 // pred_region
        %s1348 = ssub.s32 %s23, 2
        // Predicated region
        $region93: #{tpu_custom_call.1} parent=91 // pred_check
          %p1349 = pneg %p325
        $region94: #{tpu_custom_call.1} parent=91 // pred_check_branch
          %1351 = sbr.rel (%p1349) target = $region96
        $region95: #{tpu_custom_call.1} parent=91 // pred_region
          %s1352 = sand.u32 %s310, 1
          %s1353 = scalar_lea.sflag [#allocation12], %s1352
          %s1354 = sand.u32 %s310, 1
          %s1355 = smul.addr %s1354, 8
          %s1356 = scalar_lea.vmem [#allocation16], %s1355
          %1358 = dma.done %s1353, 128
        $region96: #{tpu_custom_call.1} parent=91 // pred_fallthru
          _
      $region92: #{tpu_custom_call.1} parent=5 // pred_fallthru
        _
    $region6: #{tpu_custom_call.1} parent=1 // loop_footer
      %s27 = sadd.s32 1, %s23
    $region7: #{tpu_custom_call.1} parent=1 // loop_footer_branch
      %22 = sbr.rel target = $region3
    $region8: #{tpu_custom_call.1} parent=1 // loop_exit
      _
    %1359 = vsyncpa [#allocation11], 1
    %s1360 = scalar_lea.sflag [#allocation11], 1
    %1361 = vsyncpa %s1360, 1
    %1362 = vsyncpa [#allocation14], 1
    %1363 = vsyncpa [#allocation12], 1
    %s1364 = scalar_lea.sflag [#allocation12], 1
    %1365 = vsyncpa %s1364, 1

// kernel: tpu_custom_call.1
$region0: #{tpu_custom_call.1}
  #allocation0 [shape = 'u32[]', space=smem, size = 0x4, offset = 0x4, fixed_abs, tag = 'smem constant byte address 0x4 - core index']
  #allocation1 [shape = 'u32[72,128]{1,0:T(1,128)}', space=vmem, size = 0x9000, scoped, tag = 'internal scratch']
  #allocation2 [shape = 'f32[16,64]{1,0:T(8,128)}', space=vmem, size = 0x2000, scoped, tag = 'scratch operand']
  #allocation3 [shape = 'f32[16,64]{1,0:T(8,128)}', space=vmem, size = 0x2000, scoped, tag = 'scratch operand']
  #allocation4 [shape = 'f32[8,64]{1,0:T(8,128)}', space=vmem, size = 0x1000, scoped, tag = 'scratch operand']
  #allocation5 [shape = 'f32[8,64]{1,0:T(8,128)}', space=vmem, size = 0x1000, scoped, tag = 'scratch operand']
  #allocation6 [shape = 'f32[8,16]{1,0:T(8,128)}', space=vmem, size = 0x1000, scoped, tag = 'scratch operand']
  #allocation7 [shape = 'f32[8,16]{1,0:T(8,128)}', space=vmem, size = 0x1000, scoped, tag = 'scratch operand']
  #allocation8 [shape = 'f32[8,64]{1,0:T(8,128)}', space=vmem, size = 0x1000, scoped, tag = 'scratch operand']
  #allocation9 [shape = 'f32[8,16,64]{2,1,0:T(8,128)}', space=vmem, size = 0x10000, scoped, tag = 'scratch operand']
  %s0 = inlined_call_operand.vmem [shape: f32[2,8,32], index: 0, kind: input, shape index: {}]
  %s1 = inlined_call_operand.hbm [shape: f32[1,32], index: 1, kind: input, shape index: {}]
  %s2 = inlined_call_operand.vmem [shape: f32[32,64], index: 2, kind: input, shape index: {}]
  %s3 = inlined_call_operand.vmem [shape: f32[32,64], index: 3, kind: input, shape index: {}]
  %s4 = inlined_call_operand.hbm [shape: f32[4,64], index: 4, kind: input, shape index: {}]
  %s5 = inlined_call_operand.vmem [shape: f32[1,64], index: 5, kind: input, shape index: {}]
  %s6 = inlined_call_operand.hbm [shape: f32[64,384], index: 6, kind: input, shape index: {}]
  %s7 = inlined_call_operand.vmem [shape: f32[2,64], index: 7, kind: input, shape index: {}]
  %s8 = inlined_call_operand.vmem [shape: f32[1,64], index: 8, kind: input, shape index: {}]
  %s9 = inlined_call_operand.vmem [shape: f32[16,64], index: 9, kind: input, shape index: {}]
  %s10 = inlined_call_operand.vmem [shape: f32[1,64], index: 10, kind: input, shape index: {}]
  %s11 = inlined_call_operand.vmem [shape: f32[64,32], index: 11, kind: input, shape index: {}]
  %s12 = inlined_call_operand.hbm [shape: f32[2,8,32], index: 12, kind: output, shape index: {}]
  %s13 = sld [smem:[#allocation0]]
  $region97: #{tpu_custom_call.1} parent=0
    _
  %s15 = ssub.s32 1, %s13
  %s16 = scalar_select 0, %s15, %s13
  $region1: #{tpu_custom_call.1} parent=0
    #allocation10 [shape = 'u8[512]{0}', space=vmem, size = 0x400, scoped, tag = 'input window, operand 1, single buffered']
    #allocation11 [shape = 's32[2]{0}', space=sflag, size = 0x8, scoped, tag = 'scoped memory for tpu_custom_call.1']
    #allocation12 [shape = 's32[2]{0}', space=sflag, size = 0x8, scoped, tag = 'scoped memory for tpu_custom_call.1']
    #allocation13 [shape = 'u8[2048]{0}', space=vmem, size = 0x800, scoped, tag = 'input window, operand 4, single buffered']
    #allocation14 [shape = 's32[1]{0}', space=sflag, size = 0x4, scoped, tag = 'scoped memory for tpu_custom_call.1']
    #allocation15 [shape = 'u8[98304]{0}', space=vmem, size = 0x18000, scoped, tag = 'input window, operand 6, single buffered']
    #allocation16 [shape = 'u8[8192]{0}', space=vmem, size = 0x2000, scoped, tag = 'output window, operand 0']
    %17 = vsyncpa [#allocation11], 0
    %18 = vsyncpa [#allocation14], 0
    %19 = vsyncpa [#allocation12], 0
    %s20 = scalar_lea.sflag [#allocation12], 1
    %21 = vsyncpa %s20, 0
    loop: start=0, step=1, limit=4
    $region2: #{tpu_custom_call.1} parent=1 // loop_pre_header
      _
    $region3: #{tpu_custom_call.1} parent=1 // loop_header
      %s23 = sphi 0, %s27
      %p24 = scmp.ge.s32.totalorder %s23, 4
      %s30 = sphi 0, %s42
      %s31 = sphi 0, %s38
      %s32 = sphi 0, %s30
      %s33 = sphi 0, %s31
      %s34 = sphi 0, %s32
      %s35 = sphi 0, %s33
      %s47 = sphi 0, %s49
      %s50 = sphi 0, %s47
      %s51 = sphi 0, %s50
      %s67 = sphi 0, %s51
      %s71 = sphi 0, %s71
      %s73 = sphi 0, %s71
      %s74 = sphi 0, %s73
      %s88 = sphi 0, %s74
      %s92 = sphi 0, %s92
      %s94 = sphi 0, %s92
      %s95 = sphi 0, %s94
      %s109 = sphi 0, %s95
      %s113 = sphi 0, %s113
      %s115 = sphi 0, %s113
      %s116 = sphi 0, %s115
      %s130 = sphi 0, %s116
      %s134 = sphi 0, %s134
      %s136 = sphi 0, %s134
      %s137 = sphi 0, %s136
      %s151 = sphi 0, %s137
      %s155 = sphi 0, %s155
      %s157 = sphi 0, %s155
      %s158 = sphi 0, %s157
      %s172 = sphi 0, %s158
      %s176 = sphi 0, %s176
      %s178 = sphi 0, %s176
      %s179 = sphi 0, %s178
      %s193 = sphi 0, %s179
      %s197 = sphi 0, %s197
      %s199 = sphi 0, %s197
      %s200 = sphi 0, %s199
      %s214 = sphi 0, %s200
      %s218 = sphi 0, %s218
      %s220 = sphi 0, %s218
      %s221 = sphi 0, %s220
      %s235 = sphi 0, %s221
      %s239 = sphi 0, %s239
      %s241 = sphi 0, %s239
      %s242 = sphi 0, %s241
      %s256 = sphi 0, %s242
      %s260 = sphi 0, %s260
      %s262 = sphi 0, %s260
      %s263 = sphi 0, %s262
      %s277 = sphi 0, %s263
      %s281 = sphi 0, %s281
      %s283 = sphi 0, %s281
      %s284 = sphi 0, %s283
      %s298 = sphi 0, %s284
      %s306 = sphi 0, %s308
      %s309 = sphi 0, %s306
      %s310 = sphi 0, %s309
      %s326 = sphi 0, %s310
    $region4: #{tpu_custom_call.1} parent=1 // loop_header_branch
      %26 = sbr.rel (%p24) target = $region8
    $region5: #{tpu_custom_call.1} parent=1 // loop_body
      %s28 = ssub.s32 %s23, 1
      %s29 = ssub.s32 %s23, 2
      %s36 = sadd.s32 1, %s31
      %p37 = scmp.ge.s32.totalorder %s36, 1
      %s38 = scalar_select %p37, 0, %s36
      %s39 = sadd.s32 1, %s30
      %s40 = scalar_select %p37, %s39, %s30
      %p41 = scmp.ge.s32.totalorder %s40, 2
      %s42 = scalar_select %p41, 0, %s40
      %s43 = ssub.s32 %s30, %s42
      %s44 = ssub.s32 %s31, %s38
      %s45 = sor.u32 %s43, %s44
      %p46 = scmp.eq.s32.totalorder %s45, 0
      %s48 = sadd.s32 %s47, 1
      %s49 = scalar_select %p46, %s47, %s48
      %p52 = pneg %p46
      %p53 = scmp.eq.s32.totalorder %s23, 1
      %p54 = por %p52, %p53
      %p55 = scmp.ne.s32.totalorder %s47, %s50
      %p56 = scmp.eq.s32.totalorder %s23, 0
      %p57 = por %p55, %p56
      %p58 = scmp.ne.s32.totalorder %s47, %s50
      %p59 = scmp.eq.s32.totalorder %s28, 1
      %p60 = por %p58, %p59
      %p61 = scmp.ne.s32.totalorder %s50, %s51
      %p62 = scmp.eq.s32.totalorder %s28, 0
      %p63 = por %p61, %p62
      %p64 = scmp.ne.s32.totalorder %s50, %s51
      %p65 = scmp.eq.s32.totalorder %s29, 1
      %p66 = por %p64, %p65
      %p68 = scmp.ne.s32.totalorder %s51, %s67
      %p69 = scmp.eq.s32.totalorder %s29, 0
      %p70 = por %p68, %p69
      %s72 = sadd.s32 %s71, 1
      %p75 = scmp.eq.s32.totalorder %s23, 1
      %p76 = scmp.ne.s32.totalorder %s71, %s73
      %p77 = scmp.eq.s32.totalorder %s23, 0
      %p78 = por %p76, %p77
      %p79 = scmp.ne.s32.totalorder %s71, %s73
      %p80 = scmp.eq.s32.totalorder %s28, 1
      %p81 = por %p79, %p80
      %p82 = scmp.ne.s32.totalorder %s73, %s74
      %p83 = scmp.eq.s32.totalorder %s28, 0
      %p84 = por %p82, %p83
      %p85 = scmp.ne.s32.totalorder %s73, %s74
      %p86 = scmp.eq.s32.totalorder %s29, 1
      %p87 = por %p85, %p86
      %p89 = scmp.ne.s32.totalorder %s74, %s88
      %p90 = scmp.eq.s32.totalorder %s29, 0
      %p91 = por %p89, %p90
      %s93 = sadd.s32 %s92, 1
      %p96 = scmp.eq.s32.totalorder %s23, 1
      %p97 = scmp.ne.s32.totalorder %s92, %s94
      %p98 = scmp.eq.s32.totalorder %s23, 0
      %p99 = por %p97, %p98
      %p100 = scmp.ne.s32.totalorder %s92, %s94
      %p101 = scmp.eq.s32.totalorder %s28, 1
      %p102 = por %p100, %p101
      %p103 = scmp.ne.s32.totalorder %s94, %s95
      %p104 = scmp.eq.s32.totalorder %s28, 0
      %p105 = por %p103, %p104
      %p106 = scmp.ne.s32.totalorder %s94, %s95
      %p107 = scmp.eq.s32.totalorder %s29, 1
      %p108 = por %p106, %p107
      %p110 = scmp.ne.s32.totalorder %s95, %s109
      %p111 = scmp.eq.s32.totalorder %s29, 0
      %p112 = por %p110, %p111
      %s114 = sadd.s32 %s113, 1
      %p117 = scmp.eq.s32.totalorder %s23, 1
      %p118 = scmp.ne.s32.totalorder %s113, %s115
      %p119 = scmp.eq.s32.totalorder %s23, 0
      %p120 = por %p118, %p119
      %p121 = scmp.ne.s32.totalorder %s113, %s115
      %p122 = scmp.eq.s32.totalorder %s28, 1
      %p123 = por %p121, %p122
      %p124 = scmp.ne.s32.totalorder %s115, %s116
      %p125 = scmp.eq.s32.totalorder %s28, 0
      %p126 = por %p124, %p125
      %p127 = scmp.ne.s32.totalorder %s115, %s116
      %p128 = scmp.eq.s32.totalorder %s29, 1
      %p129 = por %p127, %p128
      %p131 = scmp.ne.s32.totalorder %s116, %s130
      %p132 = scmp.eq.s32.totalorder %s29, 0
      %p133 = por %p131, %p132
      %s135 = sadd.s32 %s134, 1
      %p138 = scmp.eq.s32.totalorder %s23, 1
      %p139 = scmp.ne.s32.totalorder %s134, %s136
      %p140 = scmp.eq.s32.totalorder %s23, 0
      %p141 = por %p139, %p140
      %p142 = scmp.ne.s32.totalorder %s134, %s136
      %p143 = scmp.eq.s32.totalorder %s28, 1
      %p144 = por %p142, %p143
      %p145 = scmp.ne.s32.totalorder %s136, %s137
      %p146 = scmp.eq.s32.totalorder %s28, 0
      %p147 = por %p145, %p146
      %p148 = scmp.ne.s32.totalorder %s136, %s137
      %p149 = scmp.eq.s32.totalorder %s29, 1
      %p150 = por %p148, %p149
      %p152 = scmp.ne.s32.totalorder %s137, %s151
      %p153 = scmp.eq.s32.totalorder %s29, 0
      %p154 = por %p152, %p153
      %s156 = sadd.s32 %s155, 1
      %p159 = scmp.eq.s32.totalorder %s23, 1
      %p160 = scmp.ne.s32.totalorder %s155, %s157
      %p161 = scmp.eq.s32.totalorder %s23, 0
      %p162 = por %p160, %p161
      %p163 = scmp.ne.s32.totalorder %s155, %s157
      %p164 = scmp.eq.s32.totalorder %s28, 1
      %p165 = por %p163, %p164
      %p166 = scmp.ne.s32.totalorder %s157, %s158
      %p167 = scmp.eq.s32.totalorder %s28, 0
      %p168 = por %p166, %p167
      %p169 = scmp.ne.s32.totalorder %s157, %s158
      %p170 = scmp.eq.s32.totalorder %s29, 1
      %p171 = por %p169, %p170
      %p173 = scmp.ne.s32.totalorder %s158, %s172
      %p174 = scmp.eq.s32.totalorder %s29, 0
      %p175 = por %p173, %p174
      %s177 = sadd.s32 %s176, 1
      %p180 = scmp.eq.s32.totalorder %s23, 1
      %p181 = scmp.ne.s32.totalorder %s176, %s178
      %p182 = scmp.eq.s32.totalorder %s23, 0
      %p183 = por %p181, %p182
      %p184 = scmp.ne.s32.totalorder %s176, %s178
      %p185 = scmp.eq.s32.totalorder %s28, 1
      %p186 = por %p184, %p185
      %p187 = scmp.ne.s32.totalorder %s178, %s179
      %p188 = scmp.eq.s32.totalorder %s28, 0
      %p189 = por %p187, %p188
      %p190 = scmp.ne.s32.totalorder %s178, %s179
      %p191 = scmp.eq.s32.totalorder %s29, 1
      %p192 = por %p190, %p191
      %p194 = scmp.ne.s32.totalorder %s179, %s193
      %p195 = scmp.eq.s32.totalorder %s29, 0
      %p196 = por %p194, %p195
      %s198 = sadd.s32 %s197, 1
      %p201 = scmp.eq.s32.totalorder %s23, 1
      %p202 = scmp.ne.s32.totalorder %s197, %s199
      %p203 = scmp.eq.s32.totalorder %s23, 0
      %p204 = por %p202, %p203
      %p205 = scmp.ne.s32.totalorder %s197, %s199
      %p206 = scmp.eq.s32.totalorder %s28, 1
      %p207 = por %p205, %p206
      %p208 = scmp.ne.s32.totalorder %s199, %s200
      %p209 = scmp.eq.s32.totalorder %s28, 0
      %p210 = por %p208, %p209
      %p211 = scmp.ne.s32.totalorder %s199, %s200
      %p212 = scmp.eq.s32.totalorder %s29, 1
      %p213 = por %p211, %p212
      %p215 = scmp.ne.s32.totalorder %s200, %s214
      %p216 = scmp.eq.s32.totalorder %s29, 0
      %p217 = por %p215, %p216
      %s219 = sadd.s32 %s218, 1
      %p222 = scmp.eq.s32.totalorder %s23, 1
      %p223 = scmp.ne.s32.totalorder %s218, %s220
      %p224 = scmp.eq.s32.totalorder %s23, 0
      %p225 = por %p223, %p224
      %p226 = scmp.ne.s32.totalorder %s218, %s220
      %p227 = scmp.eq.s32.totalorder %s28, 1
      %p228 = por %p226, %p227
      %p229 = scmp.ne.s32.totalorder %s220, %s221
      %p230 = scmp.eq.s32.totalorder %s28, 0
      %p231 = por %p229, %p230
      %p232 = scmp.ne.s32.totalorder %s220, %s221
      %p233 = scmp.eq.s32.totalorder %s29, 1
      %p234 = por %p232, %p233
      %p236 = scmp.ne.s32.totalorder %s221, %s235
      %p237 = scmp.eq.s32.totalorder %s29, 0
      %p238 = por %p236, %p237
      %s240 = sadd.s32 %s239, 1
      %p243 = scmp.eq.s32.totalorder %s23, 1
      %p244 = scmp.ne.s32.totalorder %s239, %s241
      %p245 = scmp.eq.s32.totalorder %s23, 0
      %p246 = por %p244, %p245
      %p247 = scmp.ne.s32.totalorder %s239, %s241
      %p248 = scmp.eq.s32.totalorder %s28, 1
      %p249 = por %p247, %p248
      %p250 = scmp.ne.s32.totalorder %s241, %s242
      %p251 = scmp.eq.s32.totalorder %s28, 0
      %p252 = por %p250, %p251
      %p253 = scmp.ne.s32.totalorder %s241, %s242
      %p254 = scmp.eq.s32.totalorder %s29, 1
      %p255 = por %p253, %p254
      %p257 = scmp.ne.s32.totalorder %s242, %s256
      %p258 = scmp.eq.s32.totalorder %s29, 0
      %p259 = por %p257, %p258
      %s261 = sadd.s32 %s260, 1
      %p264 = scmp.eq.s32.totalorder %s23, 1
      %p265 = scmp.ne.s32.totalorder %s260, %s262
      %p266 = scmp.eq.s32.totalorder %s23, 0
      %p267 = por %p265, %p266
      %p268 = scmp.ne.s32.totalorder %s260, %s262
      %p269 = scmp.eq.s32.totalorder %s28, 1
      %p270 = por %p268, %p269
      %p271 = scmp.ne.s32.totalorder %s262, %s263
      %p272 = scmp.eq.s32.totalorder %s28, 0
      %p273 = por %p271, %p272
      %p274 = scmp.ne.s32.totalorder %s262, %s263
      %p275 = scmp.eq.s32.totalorder %s29, 1
      %p276 = por %p274, %p275
      %p278 = scmp.ne.s32.totalorder %s263, %s277
      %p279 = scmp.eq.s32.totalorder %s29, 0
      %p280 = por %p278, %p279
      %s282 = sadd.s32 %s281, 1
      %p285 = scmp.eq.s32.totalorder %s23, 1
      %p286 = scmp.ne.s32.totalorder %s281, %s283
      %p287 = scmp.eq.s32.totalorder %s23, 0
      %p288 = por %p286, %p287
      %p289 = scmp.ne.s32.totalorder %s281, %s283
      %p290 = scmp.eq.s32.totalorder %s28, 1
      %p291 = por %p289, %p290
      %p292 = scmp.ne.s32.totalorder %s283, %s284
      %p293 = scmp.eq.s32.totalorder %s28, 0
      %p294 = por %p292, %p293
      %p295 = scmp.ne.s32.totalorder %s283, %s284
      %p296 = scmp.eq.s32.totalorder %s29, 1
      %p297 = por %p295, %p296
      %p299 = scmp.ne.s32.totalorder %s284, %s298
      %p300 = scmp.eq.s32.totalorder %s29, 0
      %p301 = por %p299, %p300
      %s302 = ssub.s32 %s30, %s42
      %s303 = ssub.s32 %s31, %s38
      %s304 = sor.u32 %s302, %s303
      %p305 = scmp.eq.s32.totalorder %s304, 0
      %s307 = sadd.s32 %s306, 1
      %s308 = scalar_select %p305, %s306, %s307
      %p311 = pneg %p305
      %p312 = scmp.eq.s32.totalorder %s23, 1
      %p313 = por %p311, %p312
      %p314 = scmp.ne.s32.totalorder %s306, %s309
      %p315 = scmp.eq.s32.totalorder %s23, 0
      %p316 = por %p314, %p315
      %p317 = scmp.ne.s32.totalorder %s306, %s309
      %p318 = scmp.eq.s32.totalorder %s28, 1
      %p319 = por %p317, %p318
      %p320 = scmp.ne.s32.totalorder %s309, %s310
      %p321 = scmp.eq.s32.totalorder %s28, 0
      %p322 = por %p320, %p321
      %p323 = scmp.ne.s32.totalorder %s309, %s310
      %p324 = scmp.eq.s32.totalorder %s29, 1
      %p325 = por %p323, %p324
      %p327 = scmp.ne.s32.totalorder %s310, %s326
      %p328 = scmp.eq.s32.totalorder %s29, 0
      %p329 = por %p327, %p328
      %p330 = scmp.le.s32.totalorder 1, %s23
      %p331 = scmp.lt.s32.totalorder %s23, 3
      %p332 = pnand %p330, %p331
      %p333 = pneg %p332
      // Predicated region
      $region9: #{tpu_custom_call.1} parent=5 // pred_check
        _
      $region10: #{tpu_custom_call.1} parent=5 // pred_check_branch
        %335 = sbr.rel (%p332) target = $region12
      $region11: #{tpu_custom_call.1} parent=5 // pred_region
        %s336 = ssub.s32 %s23, 1
        // Predicated region
        $region13: #{tpu_custom_call.1} parent=11 // pred_check
          %p337 = pneg %p84
        $region14: #{tpu_custom_call.1} parent=11 // pred_check_branch
          %339 = sbr.rel (%p337) target = $region16
        $region15: #{tpu_custom_call.1} parent=11 // pred_region
          %341 = vsyncadd [#allocation11], 0
          %s343 = sshll.u32 %s1, 4
          %s344 = int_to_ptr.hbm [resolvable:$true] %s343
          %s345 = sshll.u32 [#allocation10], 4
          %s346 = int_to_ptr.vmem [resolvable:$true] %s345
          %348 = dma.hbm_to_vmem [thread:$0]  %s344, 16, %s346, [#allocation11]
        $region16: #{tpu_custom_call.1} parent=11 // pred_fallthru
          _
        // Predicated region
        $region17: #{tpu_custom_call.1} parent=11 // pred_check
          %p349 = pneg %p105
        $region18: #{tpu_custom_call.1} parent=11 // pred_check_branch
          %351 = sbr.rel (%p349) target = $region20
        $region19: #{tpu_custom_call.1} parent=11 // pred_region
          _
        $region20: #{tpu_custom_call.1} parent=11 // pred_fallthru
          _
        // Predicated region
        $region21: #{tpu_custom_call.1} parent=11 // pred_check
          %p352 = pneg %p126
        $region22: #{tpu_custom_call.1} parent=11 // pred_check_branch
          %354 = sbr.rel (%p352) target = $region24
        $region23: #{tpu_custom_call.1} parent=11 // pred_region
          _
        $region24: #{tpu_custom_call.1} parent=11 // pred_fallthru
          _
        // Predicated region
        $region25: #{tpu_custom_call.1} parent=11 // pred_check
          %p355 = pneg %p147
        $region26: #{tpu_custom_call.1} parent=11 // pred_check_branch
          %357 = sbr.rel (%p355) target = $region28
        $region27: #{tpu_custom_call.1} parent=11 // pred_region
          %359 = vsyncadd [#allocation14], 0
          %s361 = sshll.u32 %s4, 4
          %s362 = int_to_ptr.hbm [resolvable:$true] %s361
          %s363 = sshll.u32 [#allocation13], 4
          %s364 = int_to_ptr.vmem [resolvable:$true] %s363
          %366 = dma.hbm_to_vmem [thread:$0]  %s362, 64, %s364, [#allocation14]
        $region28: #{tpu_custom_call.1} parent=11 // pred_fallthru
          _
        // Predicated region
        $region29: #{tpu_custom_call.1} parent=11 // pred_check
          %p367 = pneg %p168
        $region30: #{tpu_custom_call.1} parent=11 // pred_check_branch
          %369 = sbr.rel (%p367) target = $region32
        $region31: #{tpu_custom_call.1} parent=11 // pred_region
          _
        $region32: #{tpu_custom_call.1} parent=11 // pred_fallthru
          _
        // Predicated region
        $region33: #{tpu_custom_call.1} parent=11 // pred_check
          %p370 = pneg %p189
        $region34: #{tpu_custom_call.1} parent=11 // pred_check_branch
          %372 = sbr.rel (%p370) target = $region36
        $region35: #{tpu_custom_call.1} parent=11 // pred_region
          %374 = vsyncadd [#allocation14], 0
          %s375 = sshll.u32 %s6, 4
          %s376 = int_to_ptr.hbm [resolvable:$true] %s375
          %s377 = sshll.u32 [#allocation15], 4
          %s378 = int_to_ptr.vmem [resolvable:$true] %s377
          %383 = dma.hbm_to_vmem [thread:$0]  %s376, 3072, %s378, [#allocation14], 384, 384, 24
        $region36: #{tpu_custom_call.1} parent=11 // pred_fallthru
          _
        // Predicated region
        $region37: #{tpu_custom_call.1} parent=11 // pred_check
          %p384 = pneg %p210
        $region38: #{tpu_custom_call.1} parent=11 // pred_check_branch
          %386 = sbr.rel (%p384) target = $region40
        $region39: #{tpu_custom_call.1} parent=11 // pred_region
          _
        $region40: #{tpu_custom_call.1} parent=11 // pred_fallthru
          _
        // Predicated region
        $region41: #{tpu_custom_call.1} parent=11 // pred_check
          %p387 = pneg %p231
        $region42: #{tpu_custom_call.1} parent=11 // pred_check_branch
          %389 = sbr.rel (%p387) target = $region44
        $region43: #{tpu_custom_call.1} parent=11 // pred_region
          _
        $region44: #{tpu_custom_call.1} parent=11 // pred_fallthru
          _
        // Predicated region
        $region45: #{tpu_custom_call.1} parent=11 // pred_check
          %p390 = pneg %p252
        $region46: #{tpu_custom_call.1} parent=11 // pred_check_branch
          %392 = sbr.rel (%p390) target = $region48
        $region47: #{tpu_custom_call.1} parent=11 // pred_region
          _
        $region48: #{tpu_custom_call.1} parent=11 // pred_fallthru
          _
        // Predicated region
        $region49: #{tpu_custom_call.1} parent=11 // pred_check
          %p393 = pneg %p273
        $region50: #{tpu_custom_call.1} parent=11 // pred_check_branch
          %395 = sbr.rel (%p393) target = $region52
        $region51: #{tpu_custom_call.1} parent=11 // pred_region
          _
        $region52: #{tpu_custom_call.1} parent=11 // pred_fallthru
          _
        // Predicated region
        $region53: #{tpu_custom_call.1} parent=11 // pred_check
          %p396 = pneg %p294
        $region54: #{tpu_custom_call.1} parent=11 // pred_check_branch
          %398 = sbr.rel (%p396) target = $region56
        $region55: #{tpu_custom_call.1} parent=11 // pred_region
          _
        $region56: #{tpu_custom_call.1} parent=11 // pred_fallthru
          _
      $region12: #{tpu_custom_call.1} parent=5 // pred_fallthru
        _
      %p399 = scmp.lt.s32.totalorder %s23, 2
      // Predicated region
      $region57: #{tpu_custom_call.1} parent=5 // pred_check
        %p400 = pneg %p399
      $region58: #{tpu_custom_call.1} parent=5 // pred_check_branch
        %402 = sbr.rel (%p400) target = $region60
      $region59: #{tpu_custom_call.1} parent=5 // pred_region
        // Predicated region
        $region61: #{tpu_custom_call.1} parent=59 // pred_check
          %p403 = pneg %p57
        $region62: #{tpu_custom_call.1} parent=59 // pred_check_branch
          %405 = sbr.rel (%p403) target = $region64
        $region63: #{tpu_custom_call.1} parent=59 // pred_region
          %p406 = scmp.lt.s32.totalorder %s30, 1
          %s407 = scalar_select %p406, %s30, 1
          %p408 = scmp.lt.s32.totalorder %s31, 0
          %s409 = scalar_select %p408, %s31, 0
          %s410 = sadd.s32 %s409, %s407
          %s411 = smul.addr %s410, 8
          %s412 = scalar_lea.vmem %s0, %s411
        $region64: #{tpu_custom_call.1} parent=59 // pred_fallthru
          _
      $region60: #{tpu_custom_call.1} parent=5 // pred_fallthru
        _
      %p413 = scmp.le.s32.totalorder 1, %s23
      %p414 = scmp.lt.s32.totalorder %s23, 3
      %p415 = pnand %p413, %p414
      %p416 = pneg %p415
      // Predicated region
      $region65: #{tpu_custom_call.1} parent=5 // pred_check
        _
      $region66: #{tpu_custom_call.1} parent=5 // pred_check_branch
        %418 = sbr.rel (%p415) target = $region68
      $region67: #{tpu_custom_call.1} parent=5 // pred_region
        %s419 = ssub.s32 %s23, 1
        // Predicated region
        $region69: #{tpu_custom_call.1} parent=67 // pred_check
          %p420 = pneg %p84
        $region70: #{tpu_custom_call.1} parent=67 // pred_check_branch
          %422 = sbr.rel (%p420) target = $region72
        $region71: #{tpu_custom_call.1} parent=67 // pred_region
          %424 = dma.done [#allocation11], 16
        $region72: #{tpu_custom_call.1} parent=67 // pred_fallthru
          _
        // Predicated region
        $region73: #{tpu_custom_call.1} parent=67 // pred_check
          %p425 = pneg %p147
        $region74: #{tpu_custom_call.1} parent=67 // pred_check_branch
          %427 = sbr.rel (%p425) target = $region76
        $region75: #{tpu_custom_call.1} parent=67 // pred_region
          %429 = dma.done [#allocation14], 64
        $region76: #{tpu_custom_call.1} parent=67 // pred_fallthru
          _
        // Predicated region
        $region77: #{tpu_custom_call.1} parent=67 // pred_check
          %p430 = pneg %p189
        $region78: #{tpu_custom_call.1} parent=67 // pred_check_branch
          %432 = sbr.rel (%p430) target = $region80
        $region79: #{tpu_custom_call.1} parent=67 // pred_region
          %434 = dma.done [#allocation14], 3072
        $region80: #{tpu_custom_call.1} parent=67 // pred_fallthru
          _
        %p435 = scmp.lt.s32.totalorder %s32, 1
        %s436 = scalar_select %p435, %s32, 1
        %p437 = scmp.lt.s32.totalorder %s33, 0
        %s438 = scalar_select %p437, %s33, 0
        %s439 = sadd.s32 %s438, %s436
        %s440 = smul.addr %s439, 8
        %s441 = scalar_lea.vmem %s0, %s440
        %p442 = pneg %p63
        %p443 = pneg %p60
        %p444 = pneg %p84
        %p445 = pneg %p81
        %p446 = pneg %p105
        %p447 = pneg %p102
        %p448 = pneg %p126
        %p449 = pneg %p123
        %p450 = pneg %p147
        %p451 = pneg %p144
        %p452 = pneg %p168
        %p453 = pneg %p165
        %p454 = pneg %p189
        %p455 = pneg %p186
        %p456 = pneg %p210
        %p457 = pneg %p207
        %p458 = pneg %p231
        %p459 = pneg %p228
        %p460 = pneg %p252
        %p461 = pneg %p249
        %p462 = pneg %p273
        %p463 = pneg %p270
        %p464 = pneg %p294
        %p465 = pneg %p291
        %p466 = pneg %p322
        %p467 = pneg %p319
        %s468 = sand.u32 %s309, 1
        %s469 = scalar_lea.sflag [#allocation12], %s468
        %s470 = sand.u32 %s309, 1
        %s471 = smul.addr %s470, 8
        %s472 = scalar_lea.vmem [#allocation16], %s471
        %p473 = scmp.lt.s32.totalorder %s32, 1
        %s474 = scalar_select %p473, %s32, 1
        %p475 = scmp.lt.s32.totalorder %s33, 0
        %s476 = scalar_select %p475, %s33, 0
        %s477 = sadd.s32 %s476, %s474
        %s478 = smul.addr %s477, 8
        %s479 = scalar_lea.vmem %s0, %s478
        %p480 = scmp.eq.s32.totalorder %s33, 0
        // Predicated region
        $region81: #{tpu_custom_call.1} parent=67 // pred_check
          %p481 = pneg %p480
        $region82: #{tpu_custom_call.1} parent=67 // pred_check_branch
          %483 = sbr.rel (%p481) target = $region84
        $region83: #{tpu_custom_call.1} parent=67 // pred_region
          %vm484 = vcmask 523264
          %485 = vst.msk [vmem:[#allocation2] sm:$0xff] %vm484, 0.0
          %486 = vst.msk [vmem:[#allocation2 + $0x8] sm:$0xff] %vm484, 0.0
          %487 = vst.msk [vmem:[#allocation3] sm:$0xff] %vm484, 0.0
        $region84: #{tpu_custom_call.1} parent=67 // pred_fallthru
          _
        %v488 = vld [vmem:[%s479] sm:$0xff]
        %v489 = vmul.f32 %v488, %v488
        %vm490 = vcmask 261120
        %v491 = vsel %vm490, %v489, 0.0
        %492 = vadd.xlane.f32.xlu0 %v491
        %v493 = vpop.xlane.xlu0 %492
        %v494 = vrcp.pop 32.0
        %v495 = vmul.f32 32.0, %v494
        %v496 = vsub.f32 1.0, %v495
        %v497 = vmul.f32 %v494, %v496
        %v498 = vadd.f32 %v494, %v497
        %vm499 = vweird.f32 %v494
        %v500 = vsel %vm499, %v494, %v498
        %v501 = vmul.f32 %v493, %v500
        %v502 = vadd.f32 %v501, 1e-05
        %v503 = vrsqrt.pop %v502
        %v504 = vmul.f32 %v503, %v502
        %v505 = vmul.f32 %v504, %v503
        %v506 = vmul.f32 0.5, %v505
        %v507 = vsub.f32 1.5, %v506
        %v508 = vmul.f32 %v503, %v507
        %vm509 = vweird.f32 %v502
        %vm510 = vweird.f32 %v503
        %vm511 = vmor %vm509, %vm510
        %v512 = vsel %vm511, %v503, %v508
        %v513 = vmul.f32 %v488, %v512
        %v514 = vld [vmem:[#allocation10] sm:$0x1]
        %v516 = vperm.slane %v514, 0
        %v518 = vmul.f32 %v513, %v516
        %v519 = vld [vmem:[%s2] sm:$0xff]
        %v520 = vld [vmem:[%s2 + $0x8] sm:$0xff]
        %v521 = vld [vmem:[%s2 + $0x10] sm:$0xff]
        %v522 = vld [vmem:[%s2 + $0x18] sm:$0xff]
        %v524 = vsel %vm490, %v518, 0
        %526 = vmatpush.msra.mxu0 0.0
        %527 = vmatpush.msra.mxu0 0.0
        %528 = vmatpush.msra.mxu0 0.0
        %529 = vmatpush.msra.mxu0 0.0
        %530 = vmatpush.msra.mxu0 0.0
        %531 = vmatpush.msra.mxu0 0.0
        %532 = vmatpush.msra.mxu0 0.0
        %533 = vmatpush.msra.mxu0 0.0
        %534 = vmatpush.msra.mxu0 0.0
        %535 = vmatpush.msra.mxu0 0.0
        %536 = vmatpush.msra.mxu0 0.0
        %537 = vmatpush.msra.mxu0 0.0
        %538 = vmatpush.msra.mxu0 %v522
        %539 = vmatpush.msra.mxu0 %v521
        %540 = vmatpush.msra.mxu0 %v520
        %541 = vmatpush.msra.mxu0 %v519
        %542 = vmatmul.f32.gmra.mxu0 %v524
        %v543 = vpop.f32.mrf.mxu0
        %v544 = vadd.f32 0.0, %v543
        %545 = vdwg.mxu0
        %v546 = vld [vmem:[%s3] sm:$0xff]
        %v547 = vld [vmem:[%s3 + $0x8] sm:$0xff]
        %v548 = vld [vmem:[%s3 + $0x10] sm:$0xff]
        %v549 = vld [vmem:[%s3 + $0x18] sm:$0xff]
        %550 = vmatpush.msra.mxu0 0.0
        %551 = vmatpush.msra.mxu0 0.0
        %552 = vmatpush.msra.mxu0 0.0
        %553 = vmatpush.msra.mxu0 0.0
        %554 = vmatpush.msra.mxu0 0.0
        %555 = vmatpush.msra.mxu0 0.0
        %556 = vmatpush.msra.mxu0 0.0
        %557 = vmatpush.msra.mxu0 0.0
        %558 = vmatpush.msra.mxu0 0.0
        %559 = vmatpush.msra.mxu0 0.0
        %560 = vmatpush.msra.mxu0 0.0
        %561 = vmatpush.msra.mxu0 0.0
        %562 = vmatpush.msra.mxu0 %v549
        %563 = vmatpush.msra.mxu0 %v548
        %564 = vmatpush.msra.mxu0 %v547
        %565 = vmatpush.msra.mxu0 %v546
        %566 = vmatmul.f32.gmra.mxu0 %v524
        %v567 = vpop.f32.mrf.mxu0
        %v568 = vadd.f32 0.0, %v567
        %569 = vdwg.mxu0
        %vm570 = vcmask 523264
        %571 = vst.msk [vmem:[#allocation3 + $0x8] sm:$0xff] %vm570, %v544
        %v572 = vld [vmem:[%s5] sm:$0x1]
        %v574 = vperm.slane %v572, 0
        %v576 = vld [vmem:[#allocation13] sm:$0x1]
        %v577 = vld [vmem:[#allocation3 + $0x5] sm:$0xff]
        %v578 = vperm.slane %v576, 0
        %v579 = vmul.f32 %v578, %v577
        %v580 = vadd.f32 %v574, %v579
        %v581 = vld [vmem:[#allocation13 + $0x1] sm:$0x1]
        %v582 = vld [vmem:[#allocation3 + $0x6] sm:$0xff]
        %v583 = vperm.slane %v581, 0
        %v584 = vmul.f32 %v583, %v582
        %v585 = vadd.f32 %v580, %v584
        %v586 = vld [vmem:[#allocation13 + $0x2] sm:$0x1]
        %v587 = vld [vmem:[#allocation3 + $0x7] sm:$0xff]
        %v588 = vperm.slane %v586, 0
        %v589 = vmul.f32 %v588, %v587
        %v590 = vadd.f32 %v585, %v589
        %v591 = vld [vmem:[#allocation13 + $0x3] sm:$0x1]
        %v592 = vld [vmem:[#allocation3 + $0x8] sm:$0xff]
        %v593 = vperm.slane %v591, 0
        %v594 = vmul.f32 %v593, %v592
        %v595 = vadd.f32 %v590, %v594
        %v596 = vld [vmem:[#allocation3 + $0xd] sm:$0x7]
        %vm597 = vcmask 518144
        %598 = vst.msk [vmem:[#allocation3 + $0x5] sm:$0x7] %vm597, %v596
        %v599 = vxor.u32 %v595, 2147483648
        %v600 = vmul.f32 %v599, 1.442695
        %v601 = vpow.pop %v600
        %v602 = vadd.f32 %v601, 1.0
        %v603 = vrcp.pop %v602
        %v604 = vmul.f32 %v602, %v603
        %v605 = vsub.f32 1.0, %v604
        %v606 = vmul.f32 %v603, %v605
        %v607 = vadd.f32 %v603, %v606
        %vm608 = vweird.f32 %v602
        %vm609 = vweird.f32 %v603
        %vm610 = vmor %vm608, %vm609
        %v611 = vsel %vm610, %v603, %v607
        %v612 = vand.u32 2147483647, %v602
        %vm613 = vcmp.eq.f32.partialorder %v612, 8.507059e+37
        %v614 = vand.u32 %v602, 2147483648
        %v615 = vor.u32 1.1754944e-38, %v614
        %v616 = vsel %vm613, %v615, %v611
        %v617 = vmul.f32 1.0, %v616
        %v618 = vmul.f32 %v595, %v617
        %v619 = vld [vmem:[#allocation15] sm:$0xff]
        %v620 = vld [vmem:[#allocation15 + $0x8] sm:$0xff]
        %v621 = vld [vmem:[#allocation15 + $0x10] sm:$0xff]
        %v622 = vld [vmem:[#allocation15 + $0x18] sm:$0xff]
        %v623 = vld [vmem:[#allocation15 + $0x20] sm:$0xff]
        %v624 = vld [vmem:[#allocation15 + $0x28] sm:$0xff]
        %v625 = vld [vmem:[#allocation15 + $0x30] sm:$0xff]
        %v626 = vld [vmem:[#allocation15 + $0x38] sm:$0xff]
        %v627 = vld [vmem:[#allocation15 + $0x40] sm:$0xff]
        %v628 = vld [vmem:[#allocation15 + $0x48] sm:$0xff]
        %v629 = vld [vmem:[#allocation15 + $0x50] sm:$0xff]
        %v630 = vld [vmem:[#allocation15 + $0x58] sm:$0xff]
        %v631 = vld [vmem:[#allocation15 + $0x60] sm:$0xff]
        %v632 = vld [vmem:[#allocation15 + $0x68] sm:$0xff]
        %v633 = vld [vmem:[#allocation15 + $0x70] sm:$0xff]
        %v634 = vld [vmem:[#allocation15 + $0x78] sm:$0xff]
        %v635 = vld [vmem:[#allocation15 + $0x80] sm:$0xff]
        %v636 = vld [vmem:[#allocation15 + $0x88] sm:$0xff]
        %v637 = vld [vmem:[#allocation15 + $0x90] sm:$0xff]
        %v638 = vld [vmem:[#allocation15 + $0x98] sm:$0xff]
        %v639 = vld [vmem:[#allocation15 + $0xa0] sm:$0xff]
        %v640 = vld [vmem:[#allocation15 + $0xa8] sm:$0xff]
        %v641 = vld [vmem:[#allocation15 + $0xb0] sm:$0xff]
        %v642 = vld [vmem:[#allocation15 + $0xb8] sm:$0xff]
        %v644 = vsel %vm570, %v618, 0
        %646 = vmatpush.msra.mxu0 0.0
        %647 = vmatpush.msra.mxu0 0.0
        %648 = vmatpush.msra.mxu0 0.0
        %649 = vmatpush.msra.mxu0 0.0
        %650 = vmatpush.msra.mxu0 0.0
        %651 = vmatpush.msra.mxu0 0.0
        %652 = vmatpush.msra.mxu0 0.0
        %653 = vmatpush.msra.mxu0 0.0
        %654 = vmatpush.msra.mxu0 %v640
        %655 = vmatpush.msra.mxu0 %v637
        %656 = vmatpush.msra.mxu0 %v634
        %657 = vmatpush.msra.mxu0 %v631
        %658 = vmatpush.msra.mxu0 %v628
        %659 = vmatpush.msra.mxu0 %v625
        %660 = vmatpush.msra.mxu0 %v622
        %661 = vmatpush.msra.mxu0 %v619
        %662 = vmatmul.f32.gmra.mxu0 %v644
        %v663 = vpop.f32.mrf.mxu0
        %v664 = vadd.f32 0.0, %v663
        %665 = vdwg.mxu0
        %666 = vmatpush.msra.mxu0 0.0
        %667 = vmatpush.msra.mxu0 0.0
        %668 = vmatpush.msra.mxu0 0.0
        %669 = vmatpush.msra.mxu0 0.0
        %670 = vmatpush.msra.mxu0 0.0
        %671 = vmatpush.msra.mxu0 0.0
        %672 = vmatpush.msra.mxu0 0.0
        %673 = vmatpush.msra.mxu0 0.0
        %674 = vmatpush.msra.mxu0 %v641
        %675 = vmatpush.msra.mxu0 %v638
        %676 = vmatpush.msra.mxu0 %v635
        %677 = vmatpush.msra.mxu0 %v632
        %678 = vmatpush.msra.mxu0 %v629
        %679 = vmatpush.msra.mxu0 %v626
        %680 = vmatpush.msra.mxu0 %v623
        %681 = vmatpush.msra.mxu0 %v620
        %682 = vmatmul.f32.gmra.mxu0 %v644
        %v683 = vpop.f32.mrf.mxu0
        %v684 = vadd.f32 0.0, %v683
        %685 = vdwg.mxu0
        %686 = vmatpush.msra.mxu0 0.0
        %687 = vmatpush.msra.mxu0 0.0
        %688 = vmatpush.msra.mxu0 0.0
        %689 = vmatpush.msra.mxu0 0.0
        %690 = vmatpush.msra.mxu0 0.0
        %691 = vmatpush.msra.mxu0 0.0
        %692 = vmatpush.msra.mxu0 0.0
        %693 = vmatpush.msra.mxu0 0.0
        %694 = vmatpush.msra.mxu0 %v642
        %695 = vmatpush.msra.mxu0 %v639
        %696 = vmatpush.msra.mxu0 %v636
        %697 = vmatpush.msra.mxu0 %v633
        %698 = vmatpush.msra.mxu0 %v630
        %699 = vmatpush.msra.mxu0 %v627
        %700 = vmatpush.msra.mxu0 %v624
        %701 = vmatpush.msra.mxu0 %v621
        %702 = vmatmul.f32.gmra.mxu0 %v644
        %v703 = vpop.f32.mrf.mxu0
        %v704 = vadd.f32 0.0, %v703
        %705 = vdwg.mxu0
        %v706 = vld [vmem:[%s8] sm:$0x1]
        %v708 = vperm.slane %v706, 0
        %v710 = vld [vmem:[%s7] sm:$0x1]
        %712 = vset.pattern.permute.xlu0 0
        %713 = vperm.xlu0 %712, %v664
        %v714 = vpop.permute.xlu0 %713
        %v716 = vperm.slane %v710, 0
        %v717 = vmul.f32 %v714, %v716
        %v718 = vadd.f32 %v708, %v717
        %v719 = vld [vmem:[%s7 + $0x1] sm:$0x1]
        %720 = vset.pattern.permute.xlu0 1
        %721 = vperm.xlu0 %720, %v664
        %v722 = vpop.permute.xlu0 %721
        %v724 = vperm.slane %v719, 0
        %v725 = vmul.f32 %v722, %v724
        %v726 = vadd.f32 %v718, %v725
        %v727 = vmax.f32 %v726, 0.0
        %vm728 = vcmp.ne.f32.partialorder %v726, %v726
        %v729 = vadd.f32 %v726, 0.0
        %v730 = vand.u32 2147483647, %v726
        %v731 = vsub.f32 0.0, %v730
        %v732 = vmul.f32 %v731, 1.442695
        %v733 = vpow.pop %v732
        %v734 = vadd.f32 %v733, 1.0
        %v735 = vlog2.pop %v734
        %v736 = vmul.f32 %v735, 0.6931472
        %v737 = vmul.f32 -0.5, %v733
        %v738 = vadd.f32 %v737, 1.0
        %v739 = vmul.f32 %v738, %v733
        %v740 = vand.u32 2147483647, %v733
        %vm741 = vcmp.lt.f32.partialorder %v740, 0.0004427343
        %v742 = vsel %vm741, %v739, %v736
        %v743 = vadd.f32 %v727, %v742
        %v744 = vsel %vm728, %v729, %v743
        %745 = vst.msk [vmem:[#allocation4] sm:$0xff] %vm570, %v744
        %v746 = vmul.f32 %v744, %v618
        %747 = vst.msk [vmem:[#allocation5] sm:$0xff] %vm570, %v746
        %vm748 = vcmask 130048
        %749 = vst.msk [vmem:[#allocation6] sm:$0xff] %vm748, %v684
        %750 = vst.msk [vmem:[#allocation7] sm:$0xff] %vm748, %v704
        %v751 = vld [vmem:[%s9] sm:$0xff]
        %v752 = vld [vmem:[%s9 + $0x8] sm:$0xff]
        %v753 = vld [vmem:[#allocation2] sm:$0xff]
        %v754 = vld [vmem:[#allocation2 + $0x8] sm:$0xff]
        %v755 = vld [vmem:[#allocation4] sm:$0xff]
        %v756 = vld [vmem:[#allocation5] sm:$0xff]
        %v757 = vld [vmem:[#allocation6] sm:$0xff]
        %v758 = vld [vmem:[#allocation7] sm:$0xff]
        %v760 = vrot.slane %v755, 1
        %v761 = vrot.slane %v755, 2
        %v762 = vrot.slane %v755, 3
        %v763 = vrot.slane %v755, 4
        %v764 = vrot.slane %v755, 5
        %v765 = vrot.slane %v755, 6
        %v766 = vrot.slane %v755, 7
        %v767 = vperm.slane %v755, 0
        %v768 = vperm.slane %v760, 0
        %v769 = vperm.slane %v761, 0
        %v770 = vperm.slane %v762, 0
        %v771 = vperm.slane %v763, 0
        %v772 = vperm.slane %v764, 0
        %v773 = vperm.slane %v765, 0
        %v774 = vperm.slane %v766, 0
        %v783 = vmul.f32 %v767, %v751
        %v784 = vmul.f32 %v767, %v752
        %v785 = vmul.f32 %v768, %v751
        %v786 = vmul.f32 %v768, %v752
        %v787 = vmul.f32 %v769, %v751
        %v788 = vmul.f32 %v769, %v752
        %v789 = vmul.f32 %v770, %v751
        %v790 = vmul.f32 %v770, %v752
        %v791 = vmul.f32 %v771, %v751
        %v792 = vmul.f32 %v771, %v752
        %v793 = vmul.f32 %v772, %v751
        %v794 = vmul.f32 %v772, %v752
        %v795 = vmul.f32 %v773, %v751
        %v796 = vmul.f32 %v773, %v752
        %v797 = vmul.f32 %v774, %v751
        %v798 = vmul.f32 %v774, %v752
        %v799 = vmul.f32 %v783, 1.442695
        %v800 = vpow.pop %v799
        %v801 = vmul.f32 %v784, 1.442695
        %v802 = vpow.pop %v801
        %v803 = vmul.f32 %v785, 1.442695
        %v804 = vpow.pop %v803
        %v805 = vmul.f32 %v786, 1.442695
        %v806 = vpow.pop %v805
        %v807 = vmul.f32 %v787, 1.442695
        %v808 = vpow.pop %v807
        %v809 = vmul.f32 %v788, 1.442695
        %v810 = vpow.pop %v809
        %v811 = vmul.f32 %v789, 1.442695
        %v812 = vpow.pop %v811
        %v813 = vmul.f32 %v790, 1.442695
        %v814 = vpow.pop %v813
        %v815 = vmul.f32 %v791, 1.442695
        %v816 = vpow.pop %v815
        %v817 = vmul.f32 %v792, 1.442695
        %v818 = vpow.pop %v817
        %v819 = vmul.f32 %v793, 1.442695
        %v820 = vpow.pop %v819
        %v821 = vmul.f32 %v794, 1.442695
        %v822 = vpow.pop %v821
        %v823 = vmul.f32 %v795, 1.442695
        %v824 = vpow.pop %v823
        %v825 = vmul.f32 %v796, 1.442695
        %v826 = vpow.pop %v825
        %v827 = vmul.f32 %v797, 1.442695
        %v828 = vpow.pop %v827
        %v829 = vmul.f32 %v798, 1.442695
        %v830 = vpow.pop %v829
        %v832 = vrot.slane %v756, 1
        %v833 = vrot.slane %v756, 2
        %v834 = vrot.slane %v756, 3
        %v835 = vrot.slane %v756, 4
        %v836 = vrot.slane %v756, 5
        %v837 = vrot.slane %v756, 6
        %v838 = vrot.slane %v756, 7
        %v839 = vperm.slane %v757, 0
        %v840 = vlaneseq
        %v841 = vshrl.u32 %v840, 7
        %843 = vset.pattern.permute.xlu0 %v841
        %844 = vperm.xlu0 %843, %v839
        %v845 = vpop.permute.xlu0 %844
        %v846 = vlaneseq
        %v847 = vshrl.u32 %v846, 7
        %v848 = vadd.s32 %v847, 8
        %849 = vset.pattern.permute.xlu0 %v848
        %850 = vperm.xlu0 %849, %v839
        %v851 = vpop.permute.xlu0 %850
        %v852 = vperm.slane %v757, 1
        %v853 = vlaneseq
        %v854 = vshrl.u32 %v853, 7
        %856 = vset.pattern.permute.xlu0 %v854
        %857 = vperm.xlu0 %856, %v852
        %v858 = vpop.permute.xlu0 %857
        %v859 = vlaneseq
        %v860 = vshrl.u32 %v859, 7
        %v861 = vadd.s32 %v860, 8
        %862 = vset.pattern.permute.xlu0 %v861
        %863 = vperm.xlu0 %862, %v852
        %v864 = vpop.permute.xlu0 %863
        %v865 = vperm.slane %v757, 2
        %v866 = vlaneseq
        %v867 = vshrl.u32 %v866, 7
        %869 = vset.pattern.permute.xlu0 %v867
        %870 = vperm.xlu0 %869, %v865
        %v871 = vpop.permute.xlu0 %870
        %v872 = vlaneseq
        %v873 = vshrl.u32 %v872, 7
        %v874 = vadd.s32 %v873, 8
        %875 = vset.pattern.permute.xlu0 %v874
        %876 = vperm.xlu0 %875, %v865
        %v877 = vpop.permute.xlu0 %876
        %v878 = vperm.slane %v757, 3
        %v879 = vlaneseq
        %v880 = vshrl.u32 %v879, 7
        %882 = vset.pattern.permute.xlu0 %v880
        %883 = vperm.xlu0 %882, %v878
        %v884 = vpop.permute.xlu0 %883
        %v885 = vlaneseq
        %v886 = vshrl.u32 %v885, 7
        %v887 = vadd.s32 %v886, 8
        %888 = vset.pattern.permute.xlu0 %v887
        %889 = vperm.xlu0 %888, %v878
        %v890 = vpop.permute.xlu0 %889
        %v891 = vperm.slane %v757, 4
        %v892 = vlaneseq
        %v893 = vshrl.u32 %v892, 7
        %895 = vset.pattern.permute.xlu0 %v893
        %896 = vperm.xlu0 %895, %v891
        %v897 = vpop.permute.xlu0 %896
        %v898 = vlaneseq
        %v899 = vshrl.u32 %v898, 7
        %v900 = vadd.s32 %v899, 8
        %901 = vset.pattern.permute.xlu0 %v900
        %902 = vperm.xlu0 %901, %v891
        %v903 = vpop.permute.xlu0 %902
        %v904 = vperm.slane %v757, 5
        %v905 = vlaneseq
        %v906 = vshrl.u32 %v905, 7
        %908 = vset.pattern.permute.xlu0 %v906
        %909 = vperm.xlu0 %908, %v904
        %v910 = vpop.permute.xlu0 %909
        %v911 = vlaneseq
        %v912 = vshrl.u32 %v911, 7
        %v913 = vadd.s32 %v912, 8
        %914 = vset.pattern.permute.xlu0 %v913
        %915 = vperm.xlu0 %914, %v904
        %v916 = vpop.permute.xlu0 %915
        %v917 = vperm.slane %v757, 6
        %v918 = vlaneseq
        %v919 = vshrl.u32 %v918, 7
        %921 = vset.pattern.permute.xlu0 %v919
        %922 = vperm.xlu0 %921, %v917
        %v923 = vpop.permute.xlu0 %922
        %v924 = vlaneseq
        %v925 = vshrl.u32 %v924, 7
        %v926 = vadd.s32 %v925, 8
        %927 = vset.pattern.permute.xlu0 %v926
        %928 = vperm.xlu0 %927, %v917
        %v929 = vpop.permute.xlu0 %928
        %v930 = vperm.slane %v757, 7
        %v931 = vlaneseq
        %v932 = vshrl.u32 %v931, 7
        %934 = vset.pattern.permute.xlu0 %v932
        %935 = vperm.xlu0 %934, %v930
        %v936 = vpop.permute.xlu0 %935
        %v937 = vlaneseq
        %v938 = vshrl.u32 %v937, 7
        %v939 = vadd.s32 %v938, 8
        %940 = vset.pattern.permute.xlu0 %v939
        %941 = vperm.xlu0 %940, %v930
        %v942 = vpop.permute.xlu0 %941
        %v943 = vperm.slane %v756, 0
        %v944 = vperm.slane %v832, 0
        %v945 = vperm.slane %v833, 0
        %v946 = vperm.slane %v834, 0
        %v947 = vperm.slane %v835, 0
        %v948 = vperm.slane %v836, 0
        %v949 = vperm.slane %v837, 0
        %v950 = vperm.slane %v838, 0
        %v959 = vmul.f32 %v943, %v845
        %v960 = vmul.f32 %v943, %v851
        %v961 = vmul.f32 %v944, %v858
        %v962 = vmul.f32 %v944, %v864
        %v963 = vmul.f32 %v945, %v871
        %v964 = vmul.f32 %v945, %v877
        %v965 = vmul.f32 %v946, %v884
        %v966 = vmul.f32 %v946, %v890
        %v967 = vmul.f32 %v947, %v897
        %v968 = vmul.f32 %v947, %v903
        %v969 = vmul.f32 %v948, %v910
        %v970 = vmul.f32 %v948, %v916
        %v971 = vmul.f32 %v949, %v923
        %v972 = vmul.f32 %v949, %v929
        %v973 = vmul.f32 %v950, %v936
        %v974 = vmul.f32 %v950, %v942
        %v975 = vmul.f32 %v800, %v753
        %v976 = vmul.f32 %v802, %v754
        %v977 = vadd.f32 %v975, %v959
        %v978 = vadd.f32 %v976, %v960
        %979 = vst.msk [vmem:[#allocation9] sm:$0xff] %vm570, %v977
        %980 = vst.msk [vmem:[#allocation9 + $0x8] sm:$0xff] %vm570, %v978
        %v981 = vmul.f32 %v804, %v977
        %v982 = vmul.f32 %v806, %v978
        %v983 = vadd.f32 %v981, %v961
        %v984 = vadd.f32 %v982, %v962
        %s985 = scalar_lea.vmem [#allocation9], 16
        %986 = vst.msk [vmem:[%s985] sm:$0xff] %vm570, %v983
        %987 = vst.msk [vmem:[%s985 + $0x8] sm:$0xff] %vm570, %v984
        %v988 = vmul.f32 %v808, %v983
        %v989 = vmul.f32 %v810, %v984
        %v990 = vadd.f32 %v988, %v963
        %v991 = vadd.f32 %v989, %v964
        %s992 = scalar_lea.vmem [#allocation9], 32
        %993 = vst.msk [vmem:[%s992] sm:$0xff] %vm570, %v990
        %994 = vst.msk [vmem:[%s992 + $0x8] sm:$0xff] %vm570, %v991
        %v995 = vmul.f32 %v812, %v990
        %v996 = vmul.f32 %v814, %v991
        %v997 = vadd.f32 %v995, %v965
        %v998 = vadd.f32 %v996, %v966
        %s999 = scalar_lea.vmem [#allocation9], 48
        %1000 = vst.msk [vmem:[%s999] sm:$0xff] %vm570, %v997
        %1001 = vst.msk [vmem:[%s999 + $0x8] sm:$0xff] %vm570, %v998
        %v1002 = vmul.f32 %v816, %v997
        %v1003 = vmul.f32 %v818, %v998
        %v1004 = vadd.f32 %v1002, %v967
        %v1005 = vadd.f32 %v1003, %v968
        %s1006 = scalar_lea.vmem [#allocation9], 64
        %1007 = vst.msk [vmem:[%s1006] sm:$0xff] %vm570, %v1004
        %1008 = vst.msk [vmem:[%s1006 + $0x8] sm:$0xff] %vm570, %v1005
        %v1009 = vmul.f32 %v820, %v1004
        %v1010 = vmul.f32 %v822, %v1005
        %v1011 = vadd.f32 %v1009, %v969
        %v1012 = vadd.f32 %v1010, %v970
        %s1013 = scalar_lea.vmem [#allocation9], 80
        %1014 = vst.msk [vmem:[%s1013] sm:$0xff] %vm570, %v1011
        %1015 = vst.msk [vmem:[%s1013 + $0x8] sm:$0xff] %vm570, %v1012
        %v1016 = vmul.f32 %v824, %v1011
        %v1017 = vmul.f32 %v826, %v1012
        %v1018 = vadd.f32 %v1016, %v971
        %v1019 = vadd.f32 %v1017, %v972
        %s1020 = scalar_lea.vmem [#allocation9], 96
        %1021 = vst.msk [vmem:[%s1020] sm:$0xff] %vm570, %v1018
        %1022 = vst.msk [vmem:[%s1020 + $0x8] sm:$0xff] %vm570, %v1019
        %v1023 = vmul.f32 %v828, %v1018
        %v1024 = vmul.f32 %v830, %v1019
        %v1025 = vadd.f32 %v1023, %v973
        %v1026 = vadd.f32 %v1024, %v974
        %s1027 = scalar_lea.vmem [#allocation9], 112
        %1028 = vst.msk [vmem:[%s1027] sm:$0xff] %vm570, %v1025
        %1029 = vst.msk [vmem:[%s1027 + $0x8] sm:$0xff] %vm570, %v1026
        %v1030 = vld [vmem:[#allocation9] sm:$0xff]
        %v1031 = vld [vmem:[#allocation9 + $0x8] sm:$0xff]
        %v1032 = vld [vmem:[#allocation9 + $0x10] sm:$0xff]
        %v1033 = vld [vmem:[#allocation9 + $0x18] sm:$0xff]
        %v1034 = vld [vmem:[#allocation9 + $0x20] sm:$0xff]
        %v1035 = vld [vmem:[#allocation9 + $0x28] sm:$0xff]
        %v1036 = vld [vmem:[#allocation9 + $0x30] sm:$0xff]
        %v1037 = vld [vmem:[#allocation9 + $0x38] sm:$0xff]
        %v1038 = vld [vmem:[#allocation9 + $0x40] sm:$0xff]
        %v1039 = vld [vmem:[#allocation9 + $0x48] sm:$0xff]
        %v1040 = vld [vmem:[#allocation9 + $0x50] sm:$0xff]
        %v1041 = vld [vmem:[#allocation9 + $0x58] sm:$0xff]
        %v1042 = vld [vmem:[#allocation9 + $0x60] sm:$0xff]
        %v1043 = vld [vmem:[#allocation9 + $0x68] sm:$0xff]
        %v1044 = vld [vmem:[#allocation9 + $0x70] sm:$0xff]
        %v1045 = vld [vmem:[#allocation9 + $0x78] sm:$0xff]
        %v1046 = vperm.slane %v758, 0
        %v1047 = vlaneseq
        %v1048 = vshrl.u32 %v1047, 7
        %1050 = vset.pattern.permute.xlu0 %v1048
        %1051 = vperm.xlu0 %1050, %v1046
        %v1052 = vpop.permute.xlu0 %1051
        %v1053 = vlaneseq
        %v1054 = vshrl.u32 %v1053, 7
        %v1055 = vadd.s32 %v1054, 8
        %1056 = vset.pattern.permute.xlu0 %v1055
        %1057 = vperm.xlu0 %1056, %v1046
        %v1058 = vpop.permute.xlu0 %1057
        %v1059 = vperm.slane %v758, 1
        %v1060 = vlaneseq
        %v1061 = vshrl.u32 %v1060, 7
        %1063 = vset.pattern.permute.xlu0 %v1061
        %1064 = vperm.xlu0 %1063, %v1059
        %v1065 = vpop.permute.xlu0 %1064
        %v1066 = vlaneseq
        %v1067 = vshrl.u32 %v1066, 7
        %v1068 = vadd.s32 %v1067, 8
        %1069 = vset.pattern.permute.xlu0 %v1068
        %1070 = vperm.xlu0 %1069, %v1059
        %v1071 = vpop.permute.xlu0 %1070
        %v1072 = vperm.slane %v758, 2
        %v1073 = vlaneseq
        %v1074 = vshrl.u32 %v1073, 7
        %1076 = vset.pattern.permute.xlu0 %v1074
        %1077 = vperm.xlu0 %1076, %v1072
        %v1078 = vpop.permute.xlu0 %1077
        %v1079 = vlaneseq
        %v1080 = vshrl.u32 %v1079, 7
        %v1081 = vadd.s32 %v1080, 8
        %1082 = vset.pattern.permute.xlu0 %v1081
        %1083 = vperm.xlu0 %1082, %v1072
        %v1084 = vpop.permute.xlu0 %1083
        %v1085 = vperm.slane %v758, 3
        %v1086 = vlaneseq
        %v1087 = vshrl.u32 %v1086, 7
        %1089 = vset.pattern.permute.xlu0 %v1087
        %1090 = vperm.xlu0 %1089, %v1085
        %v1091 = vpop.permute.xlu0 %1090
        %v1092 = vlaneseq
        %v1093 = vshrl.u32 %v1092, 7
        %v1094 = vadd.s32 %v1093, 8
        %1095 = vset.pattern.permute.xlu0 %v1094
        %1096 = vperm.xlu0 %1095, %v1085
        %v1097 = vpop.permute.xlu0 %1096
        %v1098 = vperm.slane %v758, 4
        %v1099 = vlaneseq
        %v1100 = vshrl.u32 %v1099, 7
        %1102 = vset.pattern.permute.xlu0 %v1100
        %1103 = vperm.xlu0 %1102, %v1098
        %v1104 = vpop.permute.xlu0 %1103
        %v1105 = vlaneseq
        %v1106 = vshrl.u32 %v1105, 7
        %v1107 = vadd.s32 %v1106, 8
        %1108 = vset.pattern.permute.xlu0 %v1107
        %1109 = vperm.xlu0 %1108, %v1098
        %v1110 = vpop.permute.xlu0 %1109
        %v1111 = vperm.slane %v758, 5
        %v1112 = vlaneseq
        %v1113 = vshrl.u32 %v1112, 7
        %1115 = vset.pattern.permute.xlu0 %v1113
        %1116 = vperm.xlu0 %1115, %v1111
        %v1117 = vpop.permute.xlu0 %1116
        %v1118 = vlaneseq
        %v1119 = vshrl.u32 %v1118, 7
        %v1120 = vadd.s32 %v1119, 8
        %1121 = vset.pattern.permute.xlu0 %v1120
        %1122 = vperm.xlu0 %1121, %v1111
        %v1123 = vpop.permute.xlu0 %1122
        %v1124 = vperm.slane %v758, 6
        %v1125 = vlaneseq
        %v1126 = vshrl.u32 %v1125, 7
        %1128 = vset.pattern.permute.xlu0 %v1126
        %1129 = vperm.xlu0 %1128, %v1124
        %v1130 = vpop.permute.xlu0 %1129
        %v1131 = vlaneseq
        %v1132 = vshrl.u32 %v1131, 7
        %v1133 = vadd.s32 %v1132, 8
        %1134 = vset.pattern.permute.xlu0 %v1133
        %1135 = vperm.xlu0 %1134, %v1124
        %v1136 = vpop.permute.xlu0 %1135
        %v1137 = vperm.slane %v758, 7
        %v1138 = vlaneseq
        %v1139 = vshrl.u32 %v1138, 7
        %1141 = vset.pattern.permute.xlu0 %v1139
        %1142 = vperm.xlu0 %1141, %v1137
        %v1143 = vpop.permute.xlu0 %1142
        %v1144 = vlaneseq
        %v1145 = vshrl.u32 %v1144, 7
        %v1146 = vadd.s32 %v1145, 8
        %1147 = vset.pattern.permute.xlu0 %v1146
        %1148 = vperm.xlu0 %1147, %v1137
        %v1149 = vpop.permute.xlu0 %1148
        %v1150 = vmul.f32 %v1030, %v1052
        %v1151 = vmul.f32 %v1031, %v1058
        %v1152 = vmul.f32 %v1032, %v1065
        %v1153 = vmul.f32 %v1033, %v1071
        %v1154 = vmul.f32 %v1034, %v1078
        %v1155 = vmul.f32 %v1035, %v1084
        %v1156 = vmul.f32 %v1036, %v1091
        %v1157 = vmul.f32 %v1037, %v1097
        %v1158 = vmul.f32 %v1038, %v1104
        %v1159 = vmul.f32 %v1039, %v1110
        %v1160 = vmul.f32 %v1040, %v1117
        %v1161 = vmul.f32 %v1041, %v1123
        %v1162 = vmul.f32 %v1042, %v1130
        %v1163 = vmul.f32 %v1043, %v1136
        %v1164 = vmul.f32 %v1044, %v1143
        %v1165 = vmul.f32 %v1045, %v1149
        %v1166 = vsel %vm570, %v1150, 0.0
        %v1167 = vsel %vm570, %v1151, 0.0
        %v1168 = vadd.f32 %v1166, %v1167
        %v1169 = vrot.slane %v1168, 4
        %v1170 = vadd.f32 %v1168, %v1169
        %v1171 = vrot.slane %v1170, 2
        %v1172 = vadd.f32 %v1170, %v1171
        %v1173 = vrot.slane %v1172, 1
        %v1174 = vadd.f32 %v1172, %v1173
        %v1175 = vsel %vm570, %v1152, 0.0
        %v1176 = vsel %vm570, %v1153, 0.0
        %v1177 = vadd.f32 %v1175, %v1176
        %v1178 = vrot.slane %v1177, 4
        %v1179 = vadd.f32 %v1177, %v1178
        %v1180 = vrot.slane %v1179, 2
        %v1181 = vadd.f32 %v1179, %v1180
        %v1182 = vrot.slane %v1181, 1
        %v1183 = vadd.f32 %v1181, %v1182
        %v1184 = vsel %vm570, %v1154, 0.0
        %v1185 = vsel %vm570, %v1155, 0.0
        %v1186 = vadd.f32 %v1184, %v1185
        %v1187 = vrot.slane %v1186, 4
        %v1188 = vadd.f32 %v1186, %v1187
        %v1189 = vrot.slane %v1188, 2
        %v1190 = vadd.f32 %v1188, %v1189
        %v1191 = vrot.slane %v1190, 1
        %v1192 = vadd.f32 %v1190, %v1191
        %v1193 = vsel %vm570, %v1156, 0.0
        %v1194 = vsel %vm570, %v1157, 0.0
        %v1195 = vadd.f32 %v1193, %v1194
        %v1196 = vrot.slane %v1195, 4
        %v1197 = vadd.f32 %v1195, %v1196
        %v1198 = vrot.slane %v1197, 2
        %v1199 = vadd.f32 %v1197, %v1198
        %v1200 = vrot.slane %v1199, 1
        %v1201 = vadd.f32 %v1199, %v1200
        %v1202 = vsel %vm570, %v1158, 0.0
        %v1203 = vsel %vm570, %v1159, 0.0
        %v1204 = vadd.f32 %v1202, %v1203
        %v1205 = vrot.slane %v1204, 4
        %v1206 = vadd.f32 %v1204, %v1205
        %v1207 = vrot.slane %v1206, 2
        %v1208 = vadd.f32 %v1206, %v1207
        %v1209 = vrot.slane %v1208, 1
        %v1210 = vadd.f32 %v1208, %v1209
        %v1211 = vsel %vm570, %v1160, 0.0
        %v1212 = vsel %vm570, %v1161, 0.0
        %v1213 = vadd.f32 %v1211, %v1212
        %v1214 = vrot.slane %v1213, 4
        %v1215 = vadd.f32 %v1213, %v1214
        %v1216 = vrot.slane %v1215, 2
        %v1217 = vadd.f32 %v1215, %v1216
        %v1218 = vrot.slane %v1217, 1
        %v1219 = vadd.f32 %v1217, %v1218
        %v1220 = vsel %vm570, %v1162, 0.0
        %v1221 = vsel %vm570, %v1163, 0.0
        %v1222 = vadd.f32 %v1220, %v1221
        %v1223 = vrot.slane %v1222, 4
        %v1224 = vadd.f32 %v1222, %v1223
        %v1225 = vrot.slane %v1224, 2
        %v1226 = vadd.f32 %v1224, %v1225
        %v1227 = vrot.slane %v1226, 1
        %v1228 = vadd.f32 %v1226, %v1227
        %v1229 = vsel %vm570, %v1164, 0.0
        %v1230 = vsel %vm570, %v1165, 0.0
        %v1231 = vadd.f32 %v1229, %v1230
        %v1232 = vrot.slane %v1231, 4
        %v1233 = vadd.f32 %v1231, %v1232
        %v1234 = vrot.slane %v1233, 2
        %v1235 = vadd.f32 %v1233, %v1234
        %v1236 = vrot.slane %v1235, 1
        %v1237 = vadd.f32 %v1235, %v1236
        %vm1246 = vcmask 1041409
        %v1247 = vsel %vm1246, %v1183, %v1174
        %vm1248 = vcmask 1042434
        %v1249 = vsel %vm1248, %v1192, %v1247
        %vm1250 = vcmask 1043459
        %v1251 = vsel %vm1250, %v1201, %v1249
        %vm1252 = vcmask 1044484
        %v1253 = vsel %vm1252, %v1210, %v1251
        %vm1254 = vcmask 1045509
        %v1255 = vsel %vm1254, %v1219, %v1253
        %vm1256 = vcmask 1046534
        %v1257 = vsel %vm1256, %v1228, %v1255
        %vm1258 = vcmask 1047559
        %v1259 = vsel %vm1258, %v1237, %v1257
        %1261 = vst.msk [vmem:[#allocation8] sm:$0xff] %vm570, %v1259
        %1262 = vst.msk [vmem:[#allocation2] sm:$0xff] %vm570, %v1025
        %1263 = vst.msk [vmem:[#allocation2 + $0x8] sm:$0xff] %vm570, %v1026
        %v1264 = vld [vmem:[#allocation8] sm:$0xff]
        %v1265 = vld [vmem:[%s10] sm:$0x1]
        %v1267 = vperm.slane %v1265, 0
        %v1269 = vmul.f32 %v1267, %v618
        %v1270 = vadd.f32 %v1264, %v1269
        %v1271 = vxor.u32 %v568, 2147483648
        %v1272 = vmul.f32 %v1271, 1.442695
        %v1273 = vpow.pop %v1272
        %v1274 = vadd.f32 %v1273, 1.0
        %v1275 = vrcp.pop %v1274
        %v1276 = vmul.f32 %v1274, %v1275
        %v1277 = vsub.f32 1.0, %v1276
        %v1278 = vmul.f32 %v1275, %v1277
        %v1279 = vadd.f32 %v1275, %v1278
        %vm1280 = vweird.f32 %v1274
        %vm1281 = vweird.f32 %v1275
        %vm1282 = vmor %vm1280, %vm1281
        %v1283 = vsel %vm1282, %v1275, %v1279
        %v1284 = vand.u32 2147483647, %v1274
        %vm1285 = vcmp.eq.f32.partialorder %v1284, 8.507059e+37
        %v1286 = vand.u32 %v1274, 2147483648
        %v1287 = vor.u32 1.1754944e-38, %v1286
        %v1288 = vsel %vm1285, %v1287, %v1283
        %v1289 = vmul.f32 1.0, %v1288
        %v1290 = vmul.f32 %v568, %v1289
        %v1291 = vmul.f32 %v1270, %v1290
        %v1292 = vld [vmem:[%s11] sm:$0xff]
        %v1293 = vld [vmem:[%s11 + $0x8] sm:$0xff]
        %v1294 = vld [vmem:[%s11 + $0x10] sm:$0xff]
        %v1295 = vld [vmem:[%s11 + $0x18] sm:$0xff]
        %v1296 = vld [vmem:[%s11 + $0x20] sm:$0xff]
        %v1297 = vld [vmem:[%s11 + $0x28] sm:$0xff]
        %v1298 = vld [vmem:[%s11 + $0x30] sm:$0xff]
        %v1299 = vld [vmem:[%s11 + $0x38] sm:$0xff]
        %v1301 = vsel %vm570, %v1291, 0
        %1303 = vmatpush.msra.mxu0 0.0
        %1304 = vmatpush.msra.mxu0 0.0
        %1305 = vmatpush.msra.mxu0 0.0
        %1306 = vmatpush.msra.mxu0 0.0
        %1307 = vmatpush.msra.mxu0 0.0
        %1308 = vmatpush.msra.mxu0 0.0
        %1309 = vmatpush.msra.mxu0 0.0
        %1310 = vmatpush.msra.mxu0 0.0
        %1311 = vmatpush.msra.mxu0 %v1299
        %1312 = vmatpush.msra.mxu0 %v1298
        %1313 = vmatpush.msra.mxu0 %v1297
        %1314 = vmatpush.msra.mxu0 %v1296
        %1315 = vmatpush.msra.mxu0 %v1295
        %1316 = vmatpush.msra.mxu0 %v1294
        %1317 = vmatpush.msra.mxu0 %v1293
        %1318 = vmatpush.msra.mxu0 %v1292
        %1319 = vmatmul.f32.gmra.mxu0 %v1301
        %v1320 = vpop.f32.mrf.mxu0
        %v1321 = vadd.f32 %v488, %v1320
        %1322 = vdwg.mxu0
        %1323 = vst.msk [vmem:[%s472] sm:$0xff] %vm490, %v1321
        %s1324 = sand.u32 %s309, 1
        %s1325 = scalar_lea.sflag [#allocation12], %s1324
        %s1326 = sand.u32 %s309, 1
        %s1327 = smul.addr %s1326, 8
        %s1328 = scalar_lea.vmem [#allocation16], %s1327
        // Predicated region
        $region85: #{tpu_custom_call.1} parent=67 // pred_check
          %p1329 = pneg %p319
        $region86: #{tpu_custom_call.1} parent=67 // pred_check_branch
          %1331 = sbr.rel (%p1329) target = $region88
        $region87: #{tpu_custom_call.1} parent=67 // pred_region
          %1333 = vsyncadd %s1325, 0
          %s1334 = sadd.s32 %s33, %s32
          %s1335 = smul.addr %s1334, 8
          %s1336 = scalar_lea.hbm %s12, %s1335
          %s1338 = sshll.u32 %s1328, 4
          %s1339 = int_to_ptr.vmem [resolvable:$true] %s1338
          %s1340 = sshll.u32 %s1336, 4
          %s1341 = int_to_ptr.hbm [resolvable:$true] %s1340
          %1343 = dma.vmem_to_hbm [thread:$0]  %s1339, 128, %s1341, %s1325
        $region88: #{tpu_custom_call.1} parent=67 // pred_fallthru
          _
      $region68: #{tpu_custom_call.1} parent=5 // pred_fallthru
        _
      %p1344 = scmp.le.s32.totalorder 2, %s23
      // Predicated region
      $region89: #{tpu_custom_call.1} parent=5 // pred_check
        %p1345 = pneg %p1344
      $region90: #{tpu_custom_call.1} parent=5 // pred_check_branch
        %1347 = sbr.rel (%p1345) target = $region92
      $region91: #{tpu_custom_call.1} parent=5 // pred_region
        %s1348 = ssub.s32 %s23, 2
        // Predicated region
        $region93: #{tpu_custom_call.1} parent=91 // pred_check
          %p1349 = pneg %p325
        $region94: #{tpu_custom_call.1} parent=91 // pred_check_branch
          %1351 = sbr.rel (%p1349) target = $region96
        $region95: #{tpu_custom_call.1} parent=91 // pred_region
          %s1352 = sand.u32 %s310, 1
          %s1353 = scalar_lea.sflag [#allocation12], %s1352
          %s1354 = sand.u32 %s310, 1
          %s1355 = smul.addr %s1354, 8
          %s1356 = scalar_lea.vmem [#allocation16], %s1355
          %1358 = dma.done %s1353, 128
        $region96: #{tpu_custom_call.1} parent=91 // pred_fallthru
          _
      $region92: #{tpu_custom_call.1} parent=5 // pred_fallthru
        _
    $region6: #{tpu_custom_call.1} parent=1 // loop_footer
      %s27 = sadd.s32 1, %s23
    $region7: #{tpu_custom_call.1} parent=1 // loop_footer_branch
      %22 = sbr.rel target = $region3
    $region8: #{tpu_custom_call.1} parent=1 // loop_exit
      _
    %1359 = vsyncpa [#allocation11], 1
    %s1360 = scalar_lea.sflag [#allocation11], 1
    %1361 = vsyncpa %s1360, 1
    %1362 = vsyncpa [#allocation14], 1
    %1363 = vsyncpa [#allocation12], 1
    %s1364 = scalar_lea.sflag [#allocation12], 1
    %1365 = vsyncpa %s1364, 1

</llo_original>
